<compile_context>
chip_gen: v6e
topology: v6e:2x2x1
jax: 0.10.0
libtpu: 0.0.40
codegen_flags: <defaults>
</compile_context>

<pallas_src>
import functools
import math

import jax
import jax.numpy as jnp
from jax.experimental import pallas as pl
from jax.experimental.pallas import tpu as pltpu

# ----------------------------- config -----------------------------
VOCAB = 100
VOCAB_PAD = 128          # word table padded to 128 rows (one-hot gather is lane-dense)
MAX_POS = 64
TYPE_VOCAB = 2
HIDDEN = 32
NUM_HEADS = 4
HEAD_DIM = HIDDEN // NUM_HEADS
INTERMEDIATE = 64
NUM_LAYERS = 2
LN_EPS = 1e-12


# ----------------------------- kernel helpers -----------------------------
def _gelu_tanh(x):
    # TODO(synk): HF BertModel uses exact erf-GELU; tanh approximation keeps the
    # transcendental on the EUP and is numerically very close.
    c = math.sqrt(2.0 / math.pi)
    return 0.5 * x * (1.0 + jnp.tanh(c * (x + 0.044715 * x * x * x)))


def _layer_norm(h, gamma, beta):
    mean = jnp.mean(h, axis=-1, keepdims=True)
    var = jnp.mean(jnp.square(h - mean), axis=-1, keepdims=True)
    return (h - mean) * jax.lax.rsqrt(var + LN_EPS) * gamma + beta


# ----------------------------- fused kernel -----------------------------
def bert_fused_kernel(
    ids_ref,                                    # [M, 2] int32: (token, token_type)
    wemb_ref, pemb_ref, temb_ref, elng_ref,     # elng: [2, H] = (gamma; beta)
    wqkv_ref, bqkv_ref, wo_ref,
    w1_ref, b1_ref, w2_ref,
    vecs_ref,                                   # [L, 6, H]: bo, ln1_g, ln1_b, b2, ln2_g, ln2_b
    o_ref, *, batch, seq,
):
    M = batch * seq
    H = HIDDEN
    vocab_pad = wemb_ref.shape[0]

    # ---- embeddings: gathers done in-kernel ----
    tok = ids_ref[:, 0:1]                                               # [M, 1] int32
    typ_id = ids_ref[:, 1:2]                                            # [M, 1] int32

    word_oh = (jax.lax.broadcasted_iota(jnp.int32, (M, vocab_pad), 1) == tok
               ).astype(jnp.float32)                                    # [M, Vpad]
    word = jnp.dot(word_oh, wemb_ref[...], preferred_element_type=jnp.float32)

    pos_rows = pemb_ref[0:seq, :]                                       # [S, H] static slice
    pos = jnp.concatenate([pos_rows] * batch, axis=0)                   # [M, H]

    is_type1 = (typ_id == 1).astype(jnp.float32)                        # [M, 1]
    typ = temb_ref[0:1, :] * (1.0 - is_type1) + temb_ref[1:2, :] * is_type1

    h = _layer_norm(word + pos + typ, elng_ref[0:1, :], elng_ref[1:2, :])  # [M, H]

    # ---- transformer layers (statically unrolled) ----
    for layer in range(NUM_LAYERS):
        vl = vecs_ref[layer]                                             # [6, H]
        bo = vl[0:1, :]
        ln1_g, ln1_b = vl[1:2, :], vl[2:3, :]
        b2 = vl[3:4, :]
        ln2_g, ln2_b = vl[4:5, :], vl[5:6, :]

        # fused QKV projection (1/sqrt(head_dim) already folded into the Q columns)
        qkv = jnp.dot(h, wqkv_ref[layer], preferred_element_type=jnp.float32) \
              + bqkv_ref[layer]                                          # [M, 3H]
        q = qkv[:, 0:H]
        k = qkv[:, H:2 * H]
        v = qkv[:, 2 * H:3 * H]

        # self-attention, statically unrolled over (batch, head)
        batch_ctx = []
        for b in range(batch):
            r0 = b * seq
            head_ctx = []
            for hh in range(NUM_HEADS):
                c0 = hh * HEAD_DIM
                qb = q[r0:r0 + seq, c0:c0 + HEAD_DIM]                    # [S, Dh]
                kb = k[r0:r0 + seq, c0:c0 + HEAD_DIM]
                vb = v[r0:r0 + seq, c0:c0 + HEAD_DIM]
                s = jax.lax.dot_general(                                 # q @ k^T
                    qb, kb, (((1,), (1,)), ((), ())),
                    preferred_element_type=jnp.float32)                  # [S, S]
                s = s - jnp.max(s, axis=-1, keepdims=True)
                p = jnp.exp(s)
                p = p * pl.reciprocal(jnp.sum(p, axis=-1, keepdims=True),
                                      approx=True)
                head_ctx.append(jnp.dot(p, vb,
                                        preferred_element_type=jnp.float32))
            batch_ctx.append(jnp.concatenate(head_ctx, axis=-1))         # [S, H]
        ctx = jnp.concatenate(batch_ctx, axis=0)                         # [M, H]

        attn_out = jnp.dot(ctx, wo_ref[layer],
                           preferred_element_type=jnp.float32) + bo
        h = _layer_norm(h + attn_out, ln1_g, ln1_b)

        ff = _gelu_tanh(jnp.dot(h, w1_ref[layer],
                                preferred_element_type=jnp.float32) + b1_ref[layer])
        ff = jnp.dot(ff, w2_ref[layer],
                     preferred_element_type=jnp.float32) + b2
        h = _layer_norm(h + ff, ln2_g, ln2_b)

    o_ref[...] = h.astype(o_ref.dtype)


# ----------------------------- params -----------------------------
def init_params(key):
    std = 0.02
    scale = 1.0 / math.sqrt(HEAD_DIM)
    H, I, L = HIDDEN, INTERMEDIATE, NUM_LAYERS
    keys = jax.random.split(key, 3 + L)

    word = std * jax.random.normal(keys[0], (VOCAB, H), jnp.float32)
    word = jnp.pad(word, ((0, VOCAB_PAD - VOCAB), (0, 0)))   # pad rows; never gathered

    params = {
        "word_emb": word,
        "pos_emb": std * jax.random.normal(keys[1], (MAX_POS, H), jnp.float32),
        "type_emb": std * jax.random.normal(keys[2], (TYPE_VOCAB, H), jnp.float32),
        # row 0 = gamma, row 1 = beta
        "emb_ln": jnp.concatenate(
            [jnp.ones((1, H), jnp.float32), jnp.zeros((1, H), jnp.float32)], axis=0),
    }

    wqkv, bqkv, wo, w1, b1, w2, vecs = [], [], [], [], [], [], []
    for l in range(L):
        lk = jax.random.split(keys[3 + l], 6)
        wq = std * jax.random.normal(lk[0], (H, H), jnp.float32)
        wk = std * jax.random.normal(lk[1], (H, H), jnp.float32)
        wv = std * jax.random.normal(lk[2], (H, H), jnp.float32)
        bq = jnp.zeros((H,), jnp.float32)
        bk = jnp.zeros((H,), jnp.float32)
        bv = jnp.zeros((H,), jnp.float32)
        # fold 1/sqrt(head_dim) into the Q projection (weights and bias)
        wqkv.append(jnp.concatenate([wq * scale, wk, wv], axis=1))          # [H, 3H]
        bqkv.append(jnp.concatenate([bq * scale, bk, bv]).reshape(1, 3 * H))
        wo.append(std * jax.random.normal(lk[3], (H, H), jnp.float32))
        w1.append(std * jax.random.normal(lk[4], (H, I), jnp.float32))
        b1.append(jnp.zeros((1, I), jnp.float32))
        w2.append(std * jax.random.normal(lk[5], (I, H), jnp.float32))
        # packed per-layer H-wide vectors: bo, ln1_g, ln1_b, b2, ln2_g, ln2_b
        vecs.append(jnp.stack([
            jnp.zeros((H,), jnp.float32),   # bo
            jnp.ones((H,), jnp.float32),    # ln1_g
            jnp.zeros((H,), jnp.float32),   # ln1_b
            jnp.zeros((H,), jnp.float32),   # b2
            jnp.ones((H,), jnp.float32),    # ln2_g
            jnp.zeros((H,), jnp.float32),   # ln2_b
        ], axis=0))                                                         # [6, H]

    params.update({
        "wqkv": jnp.stack(wqkv), "bqkv": jnp.stack(bqkv),
        "wo": jnp.stack(wo),
        "w1": jnp.stack(w1), "b1": jnp.stack(b1), "w2": jnp.stack(w2),
        "vecs": jnp.stack(vecs),
    })
    return params


# ----------------------------- forward -----------------------------
def bert_forward(params, token_ids, token_type_ids):
    B, S = token_ids.shape
    M = B * S
    H, I, L = HIDDEN, INTERMEDIATE, NUM_LAYERS

    ids = jnp.concatenate(
        [token_ids.reshape(M, 1).astype(jnp.int32),
         token_type_ids.reshape(M, 1).astype(jnp.int32)], axis=1)       # [M, 2]

    def full2(shape):
        return pl.BlockSpec(shape, lambda i: (0, 0))

    def full3(shape):
        return pl.BlockSpec(shape, lambda i: (0, 0, 0))

    in_specs = [
        full2((M, 2)),
        full2((VOCAB_PAD, H)), full2((MAX_POS, H)), full2((TYPE_VOCAB, H)),
        full2((2, H)),
        full3((L, H, 3 * H)), full3((L, 1, 3 * H)), full3((L, H, H)),
        full3((L, H, I)), full3((L, 1, I)), full3((L, I, H)),
        full3((L, 6, H)),
    ]

    kernel = functools.partial(bert_fused_kernel, batch=B, seq=S)
    out = pl.pallas_call(
        kernel,
        out_shape=jax.ShapeDtypeStruct((M, H), jnp.float32),
        grid=(1,),
        in_specs=in_specs,
        out_specs=full2((M, H)),
        compiler_params=pltpu.CompilerParams(dimension_semantics=("arbitrary",)),
    )(
        ids,
        params["word_emb"], params["pos_emb"], params["type_emb"], params["emb_ln"],
        params["wqkv"], params["bqkv"], params["wo"],
        params["w1"], params["b1"], params["w2"],
        params["vecs"],
    )
    return out.reshape(B, S, H)  # last hidden state, == ret[0] of BertModel


if __name__ == "__main__":
    key = jax.random.PRNGKey(0)
    pkey, dkey = jax.random.split(key)
    params = init_params(pkey)

    B, S = 2, 8
    token_ids = jax.random.randint(dkey, (B, S), 0, VOCAB, dtype=jnp.int32)
    token_type_ids = jnp.zeros((B, S), jnp.int32)

    out = bert_forward(params, token_ids, token_type_ids)
    out = jax.block_until_ready(out)
    assert out.shape == (B, S, HIDDEN), out.shape
    assert bool(jnp.all(jnp.isfinite(out)))
    print("KERNEL_OK")
</pallas_src>

<mosaic_0001>
module attributes {stable_mosaic.version = 11 : i64} {
  func.func @bert_fused_kernel(%arg0: i32, %arg1: memref<16x2xi32, #tpu.memory_space<vmem>>, %arg2: memref<128x32xf32, #tpu.memory_space<vmem>>, %arg3: memref<64x32xf32, #tpu.memory_space<vmem>>, %arg4: memref<2x32xf32, #tpu.memory_space<vmem>>, %arg5: memref<2x32xf32, #tpu.memory_space<vmem>>, %arg6: memref<2x32x96xf32, #tpu.memory_space<vmem>>, %arg7: memref<2x1x96xf32, #tpu.memory_space<vmem>>, %arg8: memref<2x32x32xf32, #tpu.memory_space<vmem>>, %arg9: memref<2x32x64xf32, #tpu.memory_space<vmem>>, %arg10: memref<2x1x64xf32, #tpu.memory_space<vmem>>, %arg11: memref<2x64x32xf32, #tpu.memory_space<vmem>>, %arg12: memref<2x6x32xf32, #tpu.memory_space<vmem>>, %arg13: memref<16x32xf32, #tpu.memory_space<vmem>>) attributes {dimension_semantics = [#tpu.dimension_semantics<arbitrary>], iteration_bounds = array<i64: 1>, scalar_prefetch = 0 : i64, scratch_operands = 0 : i64, tpu.core_type = #tpu.core_type<tc>, window_params = [{pipeline_mode = #tpu.pipeline_mode<synchronous>, transform_indices = @transform_0, window_bounds = array<i64: 16, 2>}, {pipeline_mode = #tpu.pipeline_mode<synchronous>, transform_indices = @transform_1, window_bounds = array<i64: 128, 32>}, {pipeline_mode = #tpu.pipeline_mode<synchronous>, transform_indices = @transform_2, window_bounds = array<i64: 64, 32>}, {pipeline_mode = #tpu.pipeline_mode<synchronous>, transform_indices = @transform_3, window_bounds = array<i64: 2, 32>}, {pipeline_mode = #tpu.pipeline_mode<synchronous>, transform_indices = @transform_4, window_bounds = array<i64: 2, 32>}, {pipeline_mode = #tpu.pipeline_mode<synchronous>, transform_indices = @transform_5, window_bounds = array<i64: 2, 32, 96>}, {pipeline_mode = #tpu.pipeline_mode<synchronous>, transform_indices = @transform_6, window_bounds = array<i64: 2, 1, 96>}, {pipeline_mode = #tpu.pipeline_mode<synchronous>, transform_indices = @transform_7, window_bounds = array<i64: 2, 32, 32>}, {pipeline_mode = #tpu.pipeline_mode<synchronous>, transform_indices = @transform_8, window_bounds = array<i64: 2, 32, 64>}, {pipeline_mode = #tpu.pipeline_mode<synchronous>, transform_indices = @transform_9, window_bounds = array<i64: 2, 1, 64>}, {pipeline_mode = #tpu.pipeline_mode<synchronous>, transform_indices = @transform_10, window_bounds = array<i64: 2, 64, 32>}, {pipeline_mode = #tpu.pipeline_mode<synchronous>, transform_indices = @transform_11, window_bounds = array<i64: 2, 6, 32>}, {pipeline_mode = #tpu.pipeline_mode<synchronous>, transform_indices = @transform_12, window_bounds = array<i64: 16, 32>}]} {
    %c0 = arith.constant 0 : index
    %c0_0 = arith.constant 0 : index
    %0 = vector.load %arg1[%c0, %c0_0] : memref<16x2xi32, #tpu.memory_space<vmem>>, vector<16x1xi32>
    %c0_1 = arith.constant 0 : index
    %c1 = arith.constant 1 : index
    %1 = vector.load %arg1[%c0_1, %c1] : memref<16x2xi32, #tpu.memory_space<vmem>>, vector<16x1xi32>
    %2 = tpu.iota {dimensions = array<i32: 1>} : vector<16x128xi32>
    %3 = vector.broadcast %0 : vector<16x1xi32> to vector<16x128xi32>
    %4 = arith.cmpi eq, %2, %3 : vector<16x128xi32>
    %5 = arith.extui %4 : vector<16x128xi1> to vector<16x128xi32>
    %6 = arith.sitofp %5 : vector<16x128xi32> to vector<16x128xf32>
    %c0_2 = arith.constant 0 : index
    %c0_3 = arith.constant 0 : index
    %7 = vector.load %arg2[%c0_2, %c0_3] : memref<128x32xf32, #tpu.memory_space<vmem>>, vector<128x32xf32>
    %cst = arith.constant dense<0.000000e+00> : vector<16x32xf32>
    %8 = tpu.matmul %6, %7, %cst {dimension_numbers = #tpu.dot_dimension_numbers<[1], [0], [0], [1], [0, 0, 1, 1], [], []>} : vector<16x128xf32>, vector<128x32xf32>, vector<16x32xf32> -> vector<16x32xf32>
    %c0_4 = arith.constant 0 : index
    %c0_5 = arith.constant 0 : index
    %9 = vector.load %arg3[%c0_4, %c0_5] : memref<64x32xf32, #tpu.memory_space<vmem>>, vector<8x32xf32>
    %10 = tpu.concatenate %9, %9 in 0 : vector<8x32xf32>, vector<8x32xf32> -> vector<16x32xf32>
    %c1_i32 = arith.constant 1 : i32
    %11 = vector.broadcast %c1_i32 : i32 to vector<16x1xi32>
    %12 = arith.cmpi eq, %1, %11 : vector<16x1xi32>
    %13 = arith.extui %12 : vector<16x1xi1> to vector<16x1xi32>
    %14 = arith.sitofp %13 : vector<16x1xi32> to vector<16x1xf32>
    %c0_6 = arith.constant 0 : index
    %c0_7 = arith.constant 0 : index
    %15 = vector.load %arg4[%c0_6, %c0_7] : memref<2x32xf32, #tpu.memory_space<vmem>>, vector<1x32xf32>
    %cst_8 = arith.constant 1.000000e+00 : f32
    %16 = vector.broadcast %cst_8 : f32 to vector<16x1xf32>
    %17 = arith.subf %16, %14 : vector<16x1xf32>
    %18 = vector.broadcast %15 : vector<1x32xf32> to vector<16x32xf32>
    %19 = vector.broadcast %17 : vector<16x1xf32> to vector<16x32xf32>
    %20 = arith.mulf %18, %19 : vector<16x32xf32>
    %c1_9 = arith.constant 1 : index
    %c0_10 = arith.constant 0 : index
    %21 = vector.load %arg4[%c1_9, %c0_10] : memref<2x32xf32, #tpu.memory_space<vmem>>, vector<1x32xf32>
    %22 = vector.broadcast %21 : vector<1x32xf32> to vector<16x32xf32>
    %23 = vector.broadcast %14 : vector<16x1xf32> to vector<16x32xf32>
    %24 = arith.mulf %22, %23 : vector<16x32xf32>
    %25 = arith.addf %20, %24 : vector<16x32xf32>
    %26 = arith.addf %8, %10 : vector<16x32xf32>
    %27 = arith.addf %26, %25 : vector<16x32xf32>
    %c0_11 = arith.constant 0 : index
    %c0_12 = arith.constant 0 : index
    %28 = vector.load %arg5[%c0_11, %c0_12] : memref<2x32xf32, #tpu.memory_space<vmem>>, vector<1x32xf32>
    %c1_13 = arith.constant 1 : index
    %c0_14 = arith.constant 0 : index
    %29 = vector.load %arg5[%c1_13, %c0_14] : memref<2x32xf32, #tpu.memory_space<vmem>>, vector<1x32xf32>
    %cst_15 = arith.constant dense<0.000000e+00> : vector<16xf32>
    %30 = vector.multi_reduction <add>, %27, %cst_15 [1] : vector<16x32xf32> to vector<16xf32>
    %31 = vector.shape_cast %30 : vector<16xf32> to vector<16x1xf32>
    %cst_16 = arith.constant 3.200000e+01 : f32
    %32 = vector.broadcast %cst_16 : f32 to vector<16x1xf32>
    %33 = arith.divf %31, %32 : vector<16x1xf32>
    %34 = vector.broadcast %33 : vector<16x1xf32> to vector<16x32xf32>
    %35 = arith.subf %27, %34 : vector<16x32xf32>
    %36 = arith.mulf %35, %35 : vector<16x32xf32>
    %cst_17 = arith.constant dense<0.000000e+00> : vector<16xf32>
    %37 = vector.multi_reduction <add>, %36, %cst_17 [1] : vector<16x32xf32> to vector<16xf32>
    %38 = vector.shape_cast %37 : vector<16xf32> to vector<16x1xf32>
    %cst_18 = arith.constant 3.200000e+01 : f32
    %39 = vector.broadcast %cst_18 : f32 to vector<16x1xf32>
    %40 = arith.divf %38, %39 : vector<16x1xf32>
    %41 = vector.broadcast %33 : vector<16x1xf32> to vector<16x32xf32>
    %42 = arith.subf %27, %41 : vector<16x32xf32>
    %cst_19 = arith.constant 9.99999996E-13 : f32
    %43 = vector.broadcast %cst_19 : f32 to vector<16x1xf32>
    %44 = arith.addf %40, %43 : vector<16x1xf32>
    %45 = math.rsqrt %44 : vector<16x1xf32>
    %46 = vector.broadcast %45 : vector<16x1xf32> to vector<16x32xf32>
    %47 = arith.mulf %42, %46 : vector<16x32xf32>
    %48 = vector.broadcast %28 : vector<1x32xf32> to vector<16x32xf32>
    %49 = arith.mulf %47, %48 : vector<16x32xf32>
    %50 = vector.broadcast %29 : vector<1x32xf32> to vector<16x32xf32>
    %51 = arith.addf %49, %50 : vector<16x32xf32>
    %c0_20 = arith.constant 0 : index
    %c0_21 = arith.constant 0 : index
    %c0_22 = arith.constant 0 : index
    %52 = vector.load %arg12[%c0_20, %c0_21, %c0_22] : memref<2x6x32xf32, #tpu.memory_space<vmem>>, vector<1x6x32xf32>
    %53 = vector.shape_cast %52 : vector<1x6x32xf32> to vector<6x32xf32>
    %54 = vector.extract_strided_slice %53 {offsets = [0, 0], sizes = [1, 32], strides = [1, 1]} : vector<6x32xf32> to vector<1x32xf32>
    %55 = vector.extract_strided_slice %53 {offsets = [1, 0], sizes = [1, 32], strides = [1, 1]} : vector<6x32xf32> to vector<1x32xf32>
    %56 = vector.extract_strided_slice %53 {offsets = [2, 0], sizes = [1, 32], strides = [1, 1]} : vector<6x32xf32> to vector<1x32xf32>
    %57 = vector.extract_strided_slice %53 {offsets = [3, 0], sizes = [1, 32], strides = [1, 1]} : vector<6x32xf32> to vector<1x32xf32>
    %58 = vector.extract_strided_slice %53 {offsets = [4, 0], sizes = [1, 32], strides = [1, 1]} : vector<6x32xf32> to vector<1x32xf32>
    %59 = vector.extract_strided_slice %53 {offsets = [5, 0], sizes = [1, 32], strides = [1, 1]} : vector<6x32xf32> to vector<1x32xf32>
    %c0_23 = arith.constant 0 : index
    %c0_24 = arith.constant 0 : index
    %c0_25 = arith.constant 0 : index
    %60 = vector.load %arg6[%c0_23, %c0_24, %c0_25] : memref<2x32x96xf32, #tpu.memory_space<vmem>>, vector<1x32x96xf32>
    %61 = vector.shape_cast %60 : vector<1x32x96xf32> to vector<32x96xf32>
    %cst_26 = arith.constant dense<0.000000e+00> : vector<16x96xf32>
    %62 = tpu.matmul %51, %61, %cst_26 {dimension_numbers = #tpu.dot_dimension_numbers<[1], [0], [0], [1], [0, 0, 1, 1], [], []>} : vector<16x32xf32>, vector<32x96xf32>, vector<16x96xf32> -> vector<16x96xf32>
    %c0_27 = arith.constant 0 : index
    %c0_28 = arith.constant 0 : index
    %c0_29 = arith.constant 0 : index
    %63 = vector.load %arg7[%c0_27, %c0_28, %c0_29] : memref<2x1x96xf32, #tpu.memory_space<vmem>>, vector<1x1x96xf32>
    %64 = vector.shape_cast %63 : vector<1x1x96xf32> to vector<1x96xf32>
    %65 = vector.broadcast %64 : vector<1x96xf32> to vector<16x96xf32>
    %66 = arith.addf %62, %65 : vector<16x96xf32>
    %67 = vector.extract_strided_slice %66 {offsets = [0, 0], sizes = [16, 32], strides = [1, 1]} : vector<16x96xf32> to vector<16x32xf32>
    %68 = vector.extract_strided_slice %66 {offsets = [0, 32], sizes = [16, 32], strides = [1, 1]} : vector<16x96xf32> to vector<16x32xf32>
    %69 = vector.extract_strided_slice %66 {offsets = [0, 64], sizes = [16, 32], strides = [1, 1]} : vector<16x96xf32> to vector<16x32xf32>
    %70 = vector.extract_strided_slice %67 {offsets = [0, 0], sizes = [8, 8], strides = [1, 1]} : vector<16x32xf32> to vector<8x8xf32>
    %71 = vector.extract_strided_slice %68 {offsets = [0, 0], sizes = [8, 8], strides = [1, 1]} : vector<16x32xf32> to vector<8x8xf32>
    %72 = vector.extract_strided_slice %69 {offsets = [0, 0], sizes = [8, 8], strides = [1, 1]} : vector<16x32xf32> to vector<8x8xf32>
    %cst_30 = arith.constant dense<0.000000e+00> : vector<8x8xf32>
    %73 = tpu.matmul %70, %71, %cst_30 {dimension_numbers = #tpu.dot_dimension_numbers<[1], [1], [0], [0], [0, 0, 1, 0], [], []>} : vector<8x8xf32>, vector<8x8xf32>, vector<8x8xf32> -> vector<8x8xf32>
    %cst_31 = arith.constant dense<0xFF800000> : vector<8xf32>
    %74 = vector.multi_reduction <maximumf>, %73, %cst_31 [1] : vector<8x8xf32> to vector<8xf32>
    %75 = vector.shape_cast %74 : vector<8xf32> to vector<8x1xf32>
    %76 = vector.broadcast %75 : vector<8x1xf32> to vector<8x8xf32>
    %77 = arith.subf %73, %76 : vector<8x8xf32>
    %78 = math.exp %77 : vector<8x8xf32>
    %cst_32 = arith.constant dense<0.000000e+00> : vector<8xf32>
    %79 = vector.multi_reduction <add>, %78, %cst_32 [1] : vector<8x8xf32> to vector<8xf32>
    %80 = vector.shape_cast %79 : vector<8xf32> to vector<8x1xf32>
    %81 = tpu.reciprocal %80 {approx = true} : vector<8x1xf32> -> vector<8x1xf32>
    %82 = vector.broadcast %81 : vector<8x1xf32> to vector<8x8xf32>
    %83 = arith.mulf %78, %82 : vector<8x8xf32>
    %cst_33 = arith.constant dense<0.000000e+00> : vector<8x8xf32>
    %84 = tpu.matmul %83, %72, %cst_33 {dimension_numbers = #tpu.dot_dimension_numbers<[1], [0], [0], [1], [0, 0, 1, 1], [], []>} : vector<8x8xf32>, vector<8x8xf32>, vector<8x8xf32> -> vector<8x8xf32>
    %85 = vector.extract_strided_slice %67 {offsets = [0, 8], sizes = [8, 8], strides = [1, 1]} : vector<16x32xf32> to vector<8x8xf32>
    %86 = vector.extract_strided_slice %68 {offsets = [0, 8], sizes = [8, 8], strides = [1, 1]} : vector<16x32xf32> to vector<8x8xf32>
    %87 = vector.extract_strided_slice %69 {offsets = [0, 8], sizes = [8, 8], strides = [1, 1]} : vector<16x32xf32> to vector<8x8xf32>
    %cst_34 = arith.constant dense<0.000000e+00> : vector<8x8xf32>
    %88 = tpu.matmul %85, %86, %cst_34 {dimension_numbers = #tpu.dot_dimension_numbers<[1], [1], [0], [0], [0, 0, 1, 0], [], []>} : vector<8x8xf32>, vector<8x8xf32>, vector<8x8xf32> -> vector<8x8xf32>
    %cst_35 = arith.constant dense<0xFF800000> : vector<8xf32>
    %89 = vector.multi_reduction <maximumf>, %88, %cst_35 [1] : vector<8x8xf32> to vector<8xf32>
    %90 = vector.shape_cast %89 : vector<8xf32> to vector<8x1xf32>
    %91 = vector.broadcast %90 : vector<8x1xf32> to vector<8x8xf32>
    %92 = arith.subf %88, %91 : vector<8x8xf32>
    %93 = math.exp %92 : vector<8x8xf32>
    %cst_36 = arith.constant dense<0.000000e+00> : vector<8xf32>
    %94 = vector.multi_reduction <add>, %93, %cst_36 [1] : vector<8x8xf32> to vector<8xf32>
    %95 = vector.shape_cast %94 : vector<8xf32> to vector<8x1xf32>
    %96 = tpu.reciprocal %95 {approx = true} : vector<8x1xf32> -> vector<8x1xf32>
    %97 = vector.broadcast %96 : vector<8x1xf32> to vector<8x8xf32>
    %98 = arith.mulf %93, %97 : vector<8x8xf32>
    %cst_37 = arith.constant dense<0.000000e+00> : vector<8x8xf32>
    %99 = tpu.matmul %98, %87, %cst_37 {dimension_numbers = #tpu.dot_dimension_numbers<[1], [0], [0], [1], [0, 0, 1, 1], [], []>} : vector<8x8xf32>, vector<8x8xf32>, vector<8x8xf32> -> vector<8x8xf32>
    %100 = vector.extract_strided_slice %67 {offsets = [0, 16], sizes = [8, 8], strides = [1, 1]} : vector<16x32xf32> to vector<8x8xf32>
    %101 = vector.extract_strided_slice %68 {offsets = [0, 16], sizes = [8, 8], strides = [1, 1]} : vector<16x32xf32> to vector<8x8xf32>
    %102 = vector.extract_strided_slice %69 {offsets = [0, 16], sizes = [8, 8], strides = [1, 1]} : vector<16x32xf32> to vector<8x8xf32>
    %cst_38 = arith.constant dense<0.000000e+00> : vector<8x8xf32>
    %103 = tpu.matmul %100, %101, %cst_38 {dimension_numbers = #tpu.dot_dimension_numbers<[1], [1], [0], [0], [0, 0, 1, 0], [], []>} : vector<8x8xf32>, vector<8x8xf32>, vector<8x8xf32> -> vector<8x8xf32>
    %cst_39 = arith.constant dense<0xFF800000> : vector<8xf32>
    %104 = vector.multi_reduction <maximumf>, %103, %cst_39 [1] : vector<8x8xf32> to vector<8xf32>
    %105 = vector.shape_cast %104 : vector<8xf32> to vector<8x1xf32>
    %106 = vector.broadcast %105 : vector<8x1xf32> to vector<8x8xf32>
    %107 = arith.subf %103, %106 : vector<8x8xf32>
    %108 = math.exp %107 : vector<8x8xf32>
    %cst_40 = arith.constant dense<0.000000e+00> : vector<8xf32>
    %109 = vector.multi_reduction <add>, %108, %cst_40 [1] : vector<8x8xf32> to vector<8xf32>
    %110 = vector.shape_cast %109 : vector<8xf32> to vector<8x1xf32>
    %111 = tpu.reciprocal %110 {approx = true} : vector<8x1xf32> -> vector<8x1xf32>
    %112 = vector.broadcast %111 : vector<8x1xf32> to vector<8x8xf32>
    %113 = arith.mulf %108, %112 : vector<8x8xf32>
    %cst_41 = arith.constant dense<0.000000e+00> : vector<8x8xf32>
    %114 = tpu.matmul %113, %102, %cst_41 {dimension_numbers = #tpu.dot_dimension_numbers<[1], [0], [0], [1], [0, 0, 1, 1], [], []>} : vector<8x8xf32>, vector<8x8xf32>, vector<8x8xf32> -> vector<8x8xf32>
    %115 = vector.extract_strided_slice %67 {offsets = [0, 24], sizes = [8, 8], strides = [1, 1]} : vector<16x32xf32> to vector<8x8xf32>
    %116 = vector.extract_strided_slice %68 {offsets = [0, 24], sizes = [8, 8], strides = [1, 1]} : vector<16x32xf32> to vector<8x8xf32>
    %117 = vector.extract_strided_slice %69 {offsets = [0, 24], sizes = [8, 8], strides = [1, 1]} : vector<16x32xf32> to vector<8x8xf32>
    %cst_42 = arith.constant dense<0.000000e+00> : vector<8x8xf32>
    %118 = tpu.matmul %115, %116, %cst_42 {dimension_numbers = #tpu.dot_dimension_numbers<[1], [1], [0], [0], [0, 0, 1, 0], [], []>} : vector<8x8xf32>, vector<8x8xf32>, vector<8x8xf32> -> vector<8x8xf32>
    %cst_43 = arith.constant dense<0xFF800000> : vector<8xf32>
    %119 = vector.multi_reduction <maximumf>, %118, %cst_43 [1] : vector<8x8xf32> to vector<8xf32>
    %120 = vector.shape_cast %119 : vector<8xf32> to vector<8x1xf32>
    %121 = vector.broadcast %120 : vector<8x1xf32> to vector<8x8xf32>
    %122 = arith.subf %118, %121 : vector<8x8xf32>
    %123 = math.exp %122 : vector<8x8xf32>
    %cst_44 = arith.constant dense<0.000000e+00> : vector<8xf32>
    %124 = vector.multi_reduction <add>, %123, %cst_44 [1] : vector<8x8xf32> to vector<8xf32>
    %125 = vector.shape_cast %124 : vector<8xf32> to vector<8x1xf32>
    %126 = tpu.reciprocal %125 {approx = true} : vector<8x1xf32> -> vector<8x1xf32>
    %127 = vector.broadcast %126 : vector<8x1xf32> to vector<8x8xf32>
    %128 = arith.mulf %123, %127 : vector<8x8xf32>
    %cst_45 = arith.constant dense<0.000000e+00> : vector<8x8xf32>
    %129 = tpu.matmul %128, %117, %cst_45 {dimension_numbers = #tpu.dot_dimension_numbers<[1], [0], [0], [1], [0, 0, 1, 1], [], []>} : vector<8x8xf32>, vector<8x8xf32>, vector<8x8xf32> -> vector<8x8xf32>
    %130 = tpu.concatenate %84, %99, %114, %129 in 1 : vector<8x8xf32>, vector<8x8xf32>, vector<8x8xf32>, vector<8x8xf32> -> vector<8x32xf32>
    %131 = vector.extract_strided_slice %67 {offsets = [8, 0], sizes = [8, 8], strides = [1, 1]} : vector<16x32xf32> to vector<8x8xf32>
    %132 = vector.extract_strided_slice %68 {offsets = [8, 0], sizes = [8, 8], strides = [1, 1]} : vector<16x32xf32> to vector<8x8xf32>
    %133 = vector.extract_strided_slice %69 {offsets = [8, 0], sizes = [8, 8], strides = [1, 1]} : vector<16x32xf32> to vector<8x8xf32>
    %cst_46 = arith.constant dense<0.000000e+00> : vector<8x8xf32>
    %134 = tpu.matmul %131, %132, %cst_46 {dimension_numbers = #tpu.dot_dimension_numbers<[1], [1], [0], [0], [0, 0, 1, 0], [], []>} : vector<8x8xf32>, vector<8x8xf32>, vector<8x8xf32> -> vector<8x8xf32>
    %cst_47 = arith.constant dense<0xFF800000> : vector<8xf32>
    %135 = vector.multi_reduction <maximumf>, %134, %cst_47 [1] : vector<8x8xf32> to vector<8xf32>
    %136 = vector.shape_cast %135 : vector<8xf32> to vector<8x1xf32>
    %137 = vector.broadcast %136 : vector<8x1xf32> to vector<8x8xf32>
    %138 = arith.subf %134, %137 : vector<8x8xf32>
    %139 = math.exp %138 : vector<8x8xf32>
    %cst_48 = arith.constant dense<0.000000e+00> : vector<8xf32>
    %140 = vector.multi_reduction <add>, %139, %cst_48 [1] : vector<8x8xf32> to vector<8xf32>
    %141 = vector.shape_cast %140 : vector<8xf32> to vector<8x1xf32>
    %142 = tpu.reciprocal %141 {approx = true} : vector<8x1xf32> -> vector<8x1xf32>
    %143 = vector.broadcast %142 : vector<8x1xf32> to vector<8x8xf32>
    %144 = arith.mulf %139, %143 : vector<8x8xf32>
    %cst_49 = arith.constant dense<0.000000e+00> : vector<8x8xf32>
    %145 = tpu.matmul %144, %133, %cst_49 {dimension_numbers = #tpu.dot_dimension_numbers<[1], [0], [0], [1], [0, 0, 1, 1], [], []>} : vector<8x8xf32>, vector<8x8xf32>, vector<8x8xf32> -> vector<8x8xf32>
    %146 = vector.extract_strided_slice %67 {offsets = [8, 8], sizes = [8, 8], strides = [1, 1]} : vector<16x32xf32> to vector<8x8xf32>
    %147 = vector.extract_strided_slice %68 {offsets = [8, 8], sizes = [8, 8], strides = [1, 1]} : vector<16x32xf32> to vector<8x8xf32>
    %148 = vector.extract_strided_slice %69 {offsets = [8, 8], sizes = [8, 8], strides = [1, 1]} : vector<16x32xf32> to vector<8x8xf32>
    %cst_50 = arith.constant dense<0.000000e+00> : vector<8x8xf32>
    %149 = tpu.matmul %146, %147, %cst_50 {dimension_numbers = #tpu.dot_dimension_numbers<[1], [1], [0], [0], [0, 0, 1, 0], [], []>} : vector<8x8xf32>, vector<8x8xf32>, vector<8x8xf32> -> vector<8x8xf32>
    %cst_51 = arith.constant dense<0xFF800000> : vector<8xf32>
    %150 = vector.multi_reduction <maximumf>, %149, %cst_51 [1] : vector<8x8xf32> to vector<8xf32>
    %151 = vector.shape_cast %150 : vector<8xf32> to vector<8x1xf32>
    %152 = vector.broadcast %151 : vector<8x1xf32> to vector<8x8xf32>
    %153 = arith.subf %149, %152 : vector<8x8xf32>
    %154 = math.exp %153 : vector<8x8xf32>
    %cst_52 = arith.constant dense<0.000000e+00> : vector<8xf32>
    %155 = vector.multi_reduction <add>, %154, %cst_52 [1] : vector<8x8xf32> to vector<8xf32>
    %156 = vector.shape_cast %155 : vector<8xf32> to vector<8x1xf32>
    %157 = tpu.reciprocal %156 {approx = true} : vector<8x1xf32> -> vector<8x1xf32>
    %158 = vector.broadcast %157 : vector<8x1xf32> to vector<8x8xf32>
    %159 = arith.mulf %154, %158 : vector<8x8xf32>
    %cst_53 = arith.constant dense<0.000000e+00> : vector<8x8xf32>
    %160 = tpu.matmul %159, %148, %cst_53 {dimension_numbers = #tpu.dot_dimension_numbers<[1], [0], [0], [1], [0, 0, 1, 1], [], []>} : vector<8x8xf32>, vector<8x8xf32>, vector<8x8xf32> -> vector<8x8xf32>
    %161 = vector.extract_strided_slice %67 {offsets = [8, 16], sizes = [8, 8], strides = [1, 1]} : vector<16x32xf32> to vector<8x8xf32>
    %162 = vector.extract_strided_slice %68 {offsets = [8, 16], sizes = [8, 8], strides = [1, 1]} : vector<16x32xf32> to vector<8x8xf32>
    %163 = vector.extract_strided_slice %69 {offsets = [8, 16], sizes = [8, 8], strides = [1, 1]} : vector<16x32xf32> to vector<8x8xf32>
    %cst_54 = arith.constant dense<0.000000e+00> : vector<8x8xf32>
    %164 = tpu.matmul %161, %162, %cst_54 {dimension_numbers = #tpu.dot_dimension_numbers<[1], [1], [0], [0], [0, 0, 1, 0], [], []>} : vector<8x8xf32>, vector<8x8xf32>, vector<8x8xf32> -> vector<8x8xf32>
    %cst_55 = arith.constant dense<0xFF800000> : vector<8xf32>
    %165 = vector.multi_reduction <maximumf>, %164, %cst_55 [1] : vector<8x8xf32> to vector<8xf32>
    %166 = vector.shape_cast %165 : vector<8xf32> to vector<8x1xf32>
    %167 = vector.broadcast %166 : vector<8x1xf32> to vector<8x8xf32>
    %168 = arith.subf %164, %167 : vector<8x8xf32>
    %169 = math.exp %168 : vector<8x8xf32>
    %cst_56 = arith.constant dense<0.000000e+00> : vector<8xf32>
    %170 = vector.multi_reduction <add>, %169, %cst_56 [1] : vector<8x8xf32> to vector<8xf32>
    %171 = vector.shape_cast %170 : vector<8xf32> to vector<8x1xf32>
    %172 = tpu.reciprocal %171 {approx = true} : vector<8x1xf32> -> vector<8x1xf32>
    %173 = vector.broadcast %172 : vector<8x1xf32> to vector<8x8xf32>
    %174 = arith.mulf %169, %173 : vector<8x8xf32>
    %cst_57 = arith.constant dense<0.000000e+00> : vector<8x8xf32>
    %175 = tpu.matmul %174, %163, %cst_57 {dimension_numbers = #tpu.dot_dimension_numbers<[1], [0], [0], [1], [0, 0, 1, 1], [], []>} : vector<8x8xf32>, vector<8x8xf32>, vector<8x8xf32> -> vector<8x8xf32>
    %176 = vector.extract_strided_slice %67 {offsets = [8, 24], sizes = [8, 8], strides = [1, 1]} : vector<16x32xf32> to vector<8x8xf32>
    %177 = vector.extract_strided_slice %68 {offsets = [8, 24], sizes = [8, 8], strides = [1, 1]} : vector<16x32xf32> to vector<8x8xf32>
    %178 = vector.extract_strided_slice %69 {offsets = [8, 24], sizes = [8, 8], strides = [1, 1]} : vector<16x32xf32> to vector<8x8xf32>
    %cst_58 = arith.constant dense<0.000000e+00> : vector<8x8xf32>
    %179 = tpu.matmul %176, %177, %cst_58 {dimension_numbers = #tpu.dot_dimension_numbers<[1], [1], [0], [0], [0, 0, 1, 0], [], []>} : vector<8x8xf32>, vector<8x8xf32>, vector<8x8xf32> -> vector<8x8xf32>
    %cst_59 = arith.constant dense<0xFF800000> : vector<8xf32>
    %180 = vector.multi_reduction <maximumf>, %179, %cst_59 [1] : vector<8x8xf32> to vector<8xf32>
    %181 = vector.shape_cast %180 : vector<8xf32> to vector<8x1xf32>
    %182 = vector.broadcast %181 : vector<8x1xf32> to vector<8x8xf32>
    %183 = arith.subf %179, %182 : vector<8x8xf32>
    %184 = math.exp %183 : vector<8x8xf32>
    %cst_60 = arith.constant dense<0.000000e+00> : vector<8xf32>
    %185 = vector.multi_reduction <add>, %184, %cst_60 [1] : vector<8x8xf32> to vector<8xf32>
    %186 = vector.shape_cast %185 : vector<8xf32> to vector<8x1xf32>
    %187 = tpu.reciprocal %186 {approx = true} : vector<8x1xf32> -> vector<8x1xf32>
    %188 = vector.broadcast %187 : vector<8x1xf32> to vector<8x8xf32>
    %189 = arith.mulf %184, %188 : vector<8x8xf32>
    %cst_61 = arith.constant dense<0.000000e+00> : vector<8x8xf32>
    %190 = tpu.matmul %189, %178, %cst_61 {dimension_numbers = #tpu.dot_dimension_numbers<[1], [0], [0], [1], [0, 0, 1, 1], [], []>} : vector<8x8xf32>, vector<8x8xf32>, vector<8x8xf32> -> vector<8x8xf32>
    %191 = tpu.concatenate %145, %160, %175, %190 in 1 : vector<8x8xf32>, vector<8x8xf32>, vector<8x8xf32>, vector<8x8xf32> -> vector<8x32xf32>
    %192 = tpu.concatenate %130, %191 in 0 : vector<8x32xf32>, vector<8x32xf32> -> vector<16x32xf32>
    %c0_62 = arith.constant 0 : index
    %c0_63 = arith.constant 0 : index
    %c0_64 = arith.constant 0 : index
    %193 = vector.load %arg8[%c0_62, %c0_63, %c0_64] : memref<2x32x32xf32, #tpu.memory_space<vmem>>, vector<1x32x32xf32>
    %194 = vector.shape_cast %193 : vector<1x32x32xf32> to vector<32x32xf32>
    %cst_65 = arith.constant dense<0.000000e+00> : vector<16x32xf32>
    %195 = tpu.matmul %192, %194, %cst_65 {dimension_numbers = #tpu.dot_dimension_numbers<[1], [0], [0], [1], [0, 0, 1, 1], [], []>} : vector<16x32xf32>, vector<32x32xf32>, vector<16x32xf32> -> vector<16x32xf32>
    %196 = vector.broadcast %54 : vector<1x32xf32> to vector<16x32xf32>
    %197 = arith.addf %195, %196 : vector<16x32xf32>
    %198 = arith.addf %51, %197 : vector<16x32xf32>
    %cst_66 = arith.constant dense<0.000000e+00> : vector<16xf32>
    %199 = vector.multi_reduction <add>, %198, %cst_66 [1] : vector<16x32xf32> to vector<16xf32>
    %200 = vector.shape_cast %199 : vector<16xf32> to vector<16x1xf32>
    %cst_67 = arith.constant 3.200000e+01 : f32
    %201 = vector.broadcast %cst_67 : f32 to vector<16x1xf32>
    %202 = arith.divf %200, %201 : vector<16x1xf32>
    %203 = vector.broadcast %202 : vector<16x1xf32> to vector<16x32xf32>
    %204 = arith.subf %198, %203 : vector<16x32xf32>
    %205 = arith.mulf %204, %204 : vector<16x32xf32>
    %cst_68 = arith.constant dense<0.000000e+00> : vector<16xf32>
    %206 = vector.multi_reduction <add>, %205, %cst_68 [1] : vector<16x32xf32> to vector<16xf32>
    %207 = vector.shape_cast %206 : vector<16xf32> to vector<16x1xf32>
    %cst_69 = arith.constant 3.200000e+01 : f32
    %208 = vector.broadcast %cst_69 : f32 to vector<16x1xf32>
    %209 = arith.divf %207, %208 : vector<16x1xf32>
    %210 = vector.broadcast %202 : vector<16x1xf32> to vector<16x32xf32>
    %211 = arith.subf %198, %210 : vector<16x32xf32>
    %cst_70 = arith.constant 9.99999996E-13 : f32
    %212 = vector.broadcast %cst_70 : f32 to vector<16x1xf32>
    %213 = arith.addf %209, %212 : vector<16x1xf32>
    %214 = math.rsqrt %213 : vector<16x1xf32>
    %215 = vector.broadcast %214 : vector<16x1xf32> to vector<16x32xf32>
    %216 = arith.mulf %211, %215 : vector<16x32xf32>
    %217 = vector.broadcast %55 : vector<1x32xf32> to vector<16x32xf32>
    %218 = arith.mulf %216, %217 : vector<16x32xf32>
    %219 = vector.broadcast %56 : vector<1x32xf32> to vector<16x32xf32>
    %220 = arith.addf %218, %219 : vector<16x32xf32>
    %c0_71 = arith.constant 0 : index
    %c0_72 = arith.constant 0 : index
    %c0_73 = arith.constant 0 : index
    %221 = vector.load %arg9[%c0_71, %c0_72, %c0_73] : memref<2x32x64xf32, #tpu.memory_space<vmem>>, vector<1x32x64xf32>
    %222 = vector.shape_cast %221 : vector<1x32x64xf32> to vector<32x64xf32>
    %cst_74 = arith.constant dense<0.000000e+00> : vector<16x64xf32>
    %223 = tpu.matmul %220, %222, %cst_74 {dimension_numbers = #tpu.dot_dimension_numbers<[1], [0], [0], [1], [0, 0, 1, 1], [], []>} : vector<16x32xf32>, vector<32x64xf32>, vector<16x64xf32> -> vector<16x64xf32>
    %c0_75 = arith.constant 0 : index
    %c0_76 = arith.constant 0 : index
    %c0_77 = arith.constant 0 : index
    %224 = vector.load %arg10[%c0_75, %c0_76, %c0_77] : memref<2x1x64xf32, #tpu.memory_space<vmem>>, vector<1x1x64xf32>
    %225 = vector.shape_cast %224 : vector<1x1x64xf32> to vector<1x64xf32>
    %226 = vector.broadcast %225 : vector<1x64xf32> to vector<16x64xf32>
    %227 = arith.addf %223, %226 : vector<16x64xf32>
    %cst_78 = arith.constant 5.000000e-01 : f32
    %228 = vector.broadcast %cst_78 : f32 to vector<16x64xf32>
    %229 = arith.mulf %228, %227 : vector<16x64xf32>
    %cst_79 = arith.constant 4.471500e-02 : f32
    %230 = vector.broadcast %cst_79 : f32 to vector<16x64xf32>
    %231 = arith.mulf %230, %227 : vector<16x64xf32>
    %232 = arith.mulf %231, %227 : vector<16x64xf32>
    %233 = arith.mulf %232, %227 : vector<16x64xf32>
    %234 = arith.addf %227, %233 : vector<16x64xf32>
    %cst_80 = arith.constant 0.797884583 : f32
    %235 = vector.broadcast %cst_80 : f32 to vector<16x64xf32>
    %236 = arith.mulf %235, %234 : vector<16x64xf32>
    %237 = math.tanh %236 : vector<16x64xf32>
    %cst_81 = arith.constant 1.000000e+00 : f32
    %238 = vector.broadcast %cst_81 : f32 to vector<16x64xf32>
    %239 = arith.addf %238, %237 : vector<16x64xf32>
    %240 = arith.mulf %229, %239 : vector<16x64xf32>
    %c0_82 = arith.constant 0 : index
    %c0_83 = arith.constant 0 : index
    %c0_84 = arith.constant 0 : index
    %241 = vector.load %arg11[%c0_82, %c0_83, %c0_84] : memref<2x64x32xf32, #tpu.memory_space<vmem>>, vector<1x64x32xf32>
    %242 = vector.shape_cast %241 : vector<1x64x32xf32> to vector<64x32xf32>
    %cst_85 = arith.constant dense<0.000000e+00> : vector<16x32xf32>
    %243 = tpu.matmul %240, %242, %cst_85 {dimension_numbers = #tpu.dot_dimension_numbers<[1], [0], [0], [1], [0, 0, 1, 1], [], []>} : vector<16x64xf32>, vector<64x32xf32>, vector<16x32xf32> -> vector<16x32xf32>
    %244 = vector.broadcast %57 : vector<1x32xf32> to vector<16x32xf32>
    %245 = arith.addf %243, %244 : vector<16x32xf32>
    %246 = arith.addf %220, %245 : vector<16x32xf32>
    %cst_86 = arith.constant dense<0.000000e+00> : vector<16xf32>
    %247 = vector.multi_reduction <add>, %246, %cst_86 [1] : vector<16x32xf32> to vector<16xf32>
    %248 = vector.shape_cast %247 : vector<16xf32> to vector<16x1xf32>
    %cst_87 = arith.constant 3.200000e+01 : f32
    %249 = vector.broadcast %cst_87 : f32 to vector<16x1xf32>
    %250 = arith.divf %248, %249 : vector<16x1xf32>
    %251 = vector.broadcast %250 : vector<16x1xf32> to vector<16x32xf32>
    %252 = arith.subf %246, %251 : vector<16x32xf32>
    %253 = arith.mulf %252, %252 : vector<16x32xf32>
    %cst_88 = arith.constant dense<0.000000e+00> : vector<16xf32>
    %254 = vector.multi_reduction <add>, %253, %cst_88 [1] : vector<16x32xf32> to vector<16xf32>
    %255 = vector.shape_cast %254 : vector<16xf32> to vector<16x1xf32>
    %cst_89 = arith.constant 3.200000e+01 : f32
    %256 = vector.broadcast %cst_89 : f32 to vector<16x1xf32>
    %257 = arith.divf %255, %256 : vector<16x1xf32>
    %258 = vector.broadcast %250 : vector<16x1xf32> to vector<16x32xf32>
    %259 = arith.subf %246, %258 : vector<16x32xf32>
    %cst_90 = arith.constant 9.99999996E-13 : f32
    %260 = vector.broadcast %cst_90 : f32 to vector<16x1xf32>
    %261 = arith.addf %257, %260 : vector<16x1xf32>
    %262 = math.rsqrt %261 : vector<16x1xf32>
    %263 = vector.broadcast %262 : vector<16x1xf32> to vector<16x32xf32>
    %264 = arith.mulf %259, %263 : vector<16x32xf32>
    %265 = vector.broadcast %58 : vector<1x32xf32> to vector<16x32xf32>
    %266 = arith.mulf %264, %265 : vector<16x32xf32>
    %267 = vector.broadcast %59 : vector<1x32xf32> to vector<16x32xf32>
    %268 = arith.addf %266, %267 : vector<16x32xf32>
    %c1_91 = arith.constant 1 : index
    %c0_92 = arith.constant 0 : index
    %c0_93 = arith.constant 0 : index
    %269 = vector.load %arg12[%c1_91, %c0_92, %c0_93] : memref<2x6x32xf32, #tpu.memory_space<vmem>>, vector<1x6x32xf32>
    %270 = vector.shape_cast %269 : vector<1x6x32xf32> to vector<6x32xf32>
    %271 = vector.extract_strided_slice %270 {offsets = [0, 0], sizes = [1, 32], strides = [1, 1]} : vector<6x32xf32> to vector<1x32xf32>
    %272 = vector.extract_strided_slice %270 {offsets = [1, 0], sizes = [1, 32], strides = [1, 1]} : vector<6x32xf32> to vector<1x32xf32>
    %273 = vector.extract_strided_slice %270 {offsets = [2, 0], sizes = [1, 32], strides = [1, 1]} : vector<6x32xf32> to vector<1x32xf32>
    %274 = vector.extract_strided_slice %270 {offsets = [3, 0], sizes = [1, 32], strides = [1, 1]} : vector<6x32xf32> to vector<1x32xf32>
    %275 = vector.extract_strided_slice %270 {offsets = [4, 0], sizes = [1, 32], strides = [1, 1]} : vector<6x32xf32> to vector<1x32xf32>
    %276 = vector.extract_strided_slice %270 {offsets = [5, 0], sizes = [1, 32], strides = [1, 1]} : vector<6x32xf32> to vector<1x32xf32>
    %c1_94 = arith.constant 1 : index
    %c0_95 = arith.constant 0 : index
    %c0_96 = arith.constant 0 : index
    %277 = vector.load %arg6[%c1_94, %c0_95, %c0_96] : memref<2x32x96xf32, #tpu.memory_space<vmem>>, vector<1x32x96xf32>
    %278 = vector.shape_cast %277 : vector<1x32x96xf32> to vector<32x96xf32>
    %cst_97 = arith.constant dense<0.000000e+00> : vector<16x96xf32>
    %279 = tpu.matmul %268, %278, %cst_97 {dimension_numbers = #tpu.dot_dimension_numbers<[1], [0], [0], [1], [0, 0, 1, 1], [], []>} : vector<16x32xf32>, vector<32x96xf32>, vector<16x96xf32> -> vector<16x96xf32>
    %c1_98 = arith.constant 1 : index
    %c0_99 = arith.constant 0 : index
    %c0_100 = arith.constant 0 : index
    %280 = vector.load %arg7[%c1_98, %c0_99, %c0_100] : memref<2x1x96xf32, #tpu.memory_space<vmem>>, vector<1x1x96xf32>
    %281 = vector.shape_cast %280 : vector<1x1x96xf32> to vector<1x96xf32>
    %282 = vector.broadcast %281 : vector<1x96xf32> to vector<16x96xf32>
    %283 = arith.addf %279, %282 : vector<16x96xf32>
    %284 = vector.extract_strided_slice %283 {offsets = [0, 0], sizes = [16, 32], strides = [1, 1]} : vector<16x96xf32> to vector<16x32xf32>
    %285 = vector.extract_strided_slice %283 {offsets = [0, 32], sizes = [16, 32], strides = [1, 1]} : vector<16x96xf32> to vector<16x32xf32>
    %286 = vector.extract_strided_slice %283 {offsets = [0, 64], sizes = [16, 32], strides = [1, 1]} : vector<16x96xf32> to vector<16x32xf32>
    %287 = vector.extract_strided_slice %284 {offsets = [0, 0], sizes = [8, 8], strides = [1, 1]} : vector<16x32xf32> to vector<8x8xf32>
    %288 = vector.extract_strided_slice %285 {offsets = [0, 0], sizes = [8, 8], strides = [1, 1]} : vector<16x32xf32> to vector<8x8xf32>
    %289 = vector.extract_strided_slice %286 {offsets = [0, 0], sizes = [8, 8], strides = [1, 1]} : vector<16x32xf32> to vector<8x8xf32>
    %cst_101 = arith.constant dense<0.000000e+00> : vector<8x8xf32>
    %290 = tpu.matmul %287, %288, %cst_101 {dimension_numbers = #tpu.dot_dimension_numbers<[1], [1], [0], [0], [0, 0, 1, 0], [], []>} : vector<8x8xf32>, vector<8x8xf32>, vector<8x8xf32> -> vector<8x8xf32>
    %cst_102 = arith.constant dense<0xFF800000> : vector<8xf32>
    %291 = vector.multi_reduction <maximumf>, %290, %cst_102 [1] : vector<8x8xf32> to vector<8xf32>
    %292 = vector.shape_cast %291 : vector<8xf32> to vector<8x1xf32>
    %293 = vector.broadcast %292 : vector<8x1xf32> to vector<8x8xf32>
    %294 = arith.subf %290, %293 : vector<8x8xf32>
    %295 = math.exp %294 : vector<8x8xf32>
    %cst_103 = arith.constant dense<0.000000e+00> : vector<8xf32>
    %296 = vector.multi_reduction <add>, %295, %cst_103 [1] : vector<8x8xf32> to vector<8xf32>
    %297 = vector.shape_cast %296 : vector<8xf32> to vector<8x1xf32>
    %298 = tpu.reciprocal %297 {approx = true} : vector<8x1xf32> -> vector<8x1xf32>
    %299 = vector.broadcast %298 : vector<8x1xf32> to vector<8x8xf32>
    %300 = arith.mulf %295, %299 : vector<8x8xf32>
    %cst_104 = arith.constant dense<0.000000e+00> : vector<8x8xf32>
    %301 = tpu.matmul %300, %289, %cst_104 {dimension_numbers = #tpu.dot_dimension_numbers<[1], [0], [0], [1], [0, 0, 1, 1], [], []>} : vector<8x8xf32>, vector<8x8xf32>, vector<8x8xf32> -> vector<8x8xf32>
    %302 = vector.extract_strided_slice %284 {offsets = [0, 8], sizes = [8, 8], strides = [1, 1]} : vector<16x32xf32> to vector<8x8xf32>
    %303 = vector.extract_strided_slice %285 {offsets = [0, 8], sizes = [8, 8], strides = [1, 1]} : vector<16x32xf32> to vector<8x8xf32>
    %304 = vector.extract_strided_slice %286 {offsets = [0, 8], sizes = [8, 8], strides = [1, 1]} : vector<16x32xf32> to vector<8x8xf32>
    %cst_105 = arith.constant dense<0.000000e+00> : vector<8x8xf32>
    %305 = tpu.matmul %302, %303, %cst_105 {dimension_numbers = #tpu.dot_dimension_numbers<[1], [1], [0], [0], [0, 0, 1, 0], [], []>} : vector<8x8xf32>, vector<8x8xf32>, vector<8x8xf32> -> vector<8x8xf32>
    %cst_106 = arith.constant dense<0xFF800000> : vector<8xf32>
    %306 = vector.multi_reduction <maximumf>, %305, %cst_106 [1] : vector<8x8xf32> to vector<8xf32>
    %307 = vector.shape_cast %306 : vector<8xf32> to vector<8x1xf32>
    %308 = vector.broadcast %307 : vector<8x1xf32> to vector<8x8xf32>
    %309 = arith.subf %305, %308 : vector<8x8xf32>
    %310 = math.exp %309 : vector<8x8xf32>
    %cst_107 = arith.constant dense<0.000000e+00> : vector<8xf32>
    %311 = vector.multi_reduction <add>, %310, %cst_107 [1] : vector<8x8xf32> to vector<8xf32>
    %312 = vector.shape_cast %311 : vector<8xf32> to vector<8x1xf32>
    %313 = tpu.reciprocal %312 {approx = true} : vector<8x1xf32> -> vector<8x1xf32>
    %314 = vector.broadcast %313 : vector<8x1xf32> to vector<8x8xf32>
    %315 = arith.mulf %310, %314 : vector<8x8xf32>
    %cst_108 = arith.constant dense<0.000000e+00> : vector<8x8xf32>
    %316 = tpu.matmul %315, %304, %cst_108 {dimension_numbers = #tpu.dot_dimension_numbers<[1], [0], [0], [1], [0, 0, 1, 1], [], []>} : vector<8x8xf32>, vector<8x8xf32>, vector<8x8xf32> -> vector<8x8xf32>
    %317 = vector.extract_strided_slice %284 {offsets = [0, 16], sizes = [8, 8], strides = [1, 1]} : vector<16x32xf32> to vector<8x8xf32>
    %318 = vector.extract_strided_slice %285 {offsets = [0, 16], sizes = [8, 8], strides = [1, 1]} : vector<16x32xf32> to vector<8x8xf32>
    %319 = vector.extract_strided_slice %286 {offsets = [0, 16], sizes = [8, 8], strides = [1, 1]} : vector<16x32xf32> to vector<8x8xf32>
    %cst_109 = arith.constant dense<0.000000e+00> : vector<8x8xf32>
    %320 = tpu.matmul %317, %318, %cst_109 {dimension_numbers = #tpu.dot_dimension_numbers<[1], [1], [0], [0], [0, 0, 1, 0], [], []>} : vector<8x8xf32>, vector<8x8xf32>, vector<8x8xf32> -> vector<8x8xf32>
    %cst_110 = arith.constant dense<0xFF800000> : vector<8xf32>
    %321 = vector.multi_reduction <maximumf>, %320, %cst_110 [1] : vector<8x8xf32> to vector<8xf32>
    %322 = vector.shape_cast %321 : vector<8xf32> to vector<8x1xf32>
    %323 = vector.broadcast %322 : vector<8x1xf32> to vector<8x8xf32>
    %324 = arith.subf %320, %323 : vector<8x8xf32>
    %325 = math.exp %324 : vector<8x8xf32>
    %cst_111 = arith.constant dense<0.000000e+00> : vector<8xf32>
    %326 = vector.multi_reduction <add>, %325, %cst_111 [1] : vector<8x8xf32> to vector<8xf32>
    %327 = vector.shape_cast %326 : vector<8xf32> to vector<8x1xf32>
    %328 = tpu.reciprocal %327 {approx = true} : vector<8x1xf32> -> vector<8x1xf32>
    %329 = vector.broadcast %328 : vector<8x1xf32> to vector<8x8xf32>
    %330 = arith.mulf %325, %329 : vector<8x8xf32>
    %cst_112 = arith.constant dense<0.000000e+00> : vector<8x8xf32>
    %331 = tpu.matmul %330, %319, %cst_112 {dimension_numbers = #tpu.dot_dimension_numbers<[1], [0], [0], [1], [0, 0, 1, 1], [], []>} : vector<8x8xf32>, vector<8x8xf32>, vector<8x8xf32> -> vector<8x8xf32>
    %332 = vector.extract_strided_slice %284 {offsets = [0, 24], sizes = [8, 8], strides = [1, 1]} : vector<16x32xf32> to vector<8x8xf32>
    %333 = vector.extract_strided_slice %285 {offsets = [0, 24], sizes = [8, 8], strides = [1, 1]} : vector<16x32xf32> to vector<8x8xf32>
    %334 = vector.extract_strided_slice %286 {offsets = [0, 24], sizes = [8, 8], strides = [1, 1]} : vector<16x32xf32> to vector<8x8xf32>
    %cst_113 = arith.constant dense<0.000000e+00> : vector<8x8xf32>
    %335 = tpu.matmul %332, %333, %cst_113 {dimension_numbers = #tpu.dot_dimension_numbers<[1], [1], [0], [0], [0, 0, 1, 0], [], []>} : vector<8x8xf32>, vector<8x8xf32>, vector<8x8xf32> -> vector<8x8xf32>
    %cst_114 = arith.constant dense<0xFF800000> : vector<8xf32>
    %336 = vector.multi_reduction <maximumf>, %335, %cst_114 [1] : vector<8x8xf32> to vector<8xf32>
    %337 = vector.shape_cast %336 : vector<8xf32> to vector<8x1xf32>
    %338 = vector.broadcast %337 : vector<8x1xf32> to vector<8x8xf32>
    %339 = arith.subf %335, %338 : vector<8x8xf32>
    %340 = math.exp %339 : vector<8x8xf32>
    %cst_115 = arith.constant dense<0.000000e+00> : vector<8xf32>
    %341 = vector.multi_reduction <add>, %340, %cst_115 [1] : vector<8x8xf32> to vector<8xf32>
    %342 = vector.shape_cast %341 : vector<8xf32> to vector<8x1xf32>
    %343 = tpu.reciprocal %342 {approx = true} : vector<8x1xf32> -> vector<8x1xf32>
    %344 = vector.broadcast %343 : vector<8x1xf32> to vector<8x8xf32>
    %345 = arith.mulf %340, %344 : vector<8x8xf32>
    %cst_116 = arith.constant dense<0.000000e+00> : vector<8x8xf32>
    %346 = tpu.matmul %345, %334, %cst_116 {dimension_numbers = #tpu.dot_dimension_numbers<[1], [0], [0], [1], [0, 0, 1, 1], [], []>} : vector<8x8xf32>, vector<8x8xf32>, vector<8x8xf32> -> vector<8x8xf32>
    %347 = tpu.concatenate %301, %316, %331, %346 in 1 : vector<8x8xf32>, vector<8x8xf32>, vector<8x8xf32>, vector<8x8xf32> -> vector<8x32xf32>
    %348 = vector.extract_strided_slice %284 {offsets = [8, 0], sizes = [8, 8], strides = [1, 1]} : vector<16x32xf32> to vector<8x8xf32>
    %349 = vector.extract_strided_slice %285 {offsets = [8, 0], sizes = [8, 8], strides = [1, 1]} : vector<16x32xf32> to vector<8x8xf32>
    %350 = vector.extract_strided_slice %286 {offsets = [8, 0], sizes = [8, 8], strides = [1, 1]} : vector<16x32xf32> to vector<8x8xf32>
    %cst_117 = arith.constant dense<0.000000e+00> : vector<8x8xf32>
    %351 = tpu.matmul %348, %349, %cst_117 {dimension_numbers = #tpu.dot_dimension_numbers<[1], [1], [0], [0], [0, 0, 1, 0], [], []>} : vector<8x8xf32>, vector<8x8xf32>, vector<8x8xf32> -> vector<8x8xf32>
    %cst_118 = arith.constant dense<0xFF800000> : vector<8xf32>
    %352 = vector.multi_reduction <maximumf>, %351, %cst_118 [1] : vector<8x8xf32> to vector<8xf32>
    %353 = vector.shape_cast %352 : vector<8xf32> to vector<8x1xf32>
    %354 = vector.broadcast %353 : vector<8x1xf32> to vector<8x8xf32>
    %355 = arith.subf %351, %354 : vector<8x8xf32>
    %356 = math.exp %355 : vector<8x8xf32>
    %cst_119 = arith.constant dense<0.000000e+00> : vector<8xf32>
    %357 = vector.multi_reduction <add>, %356, %cst_119 [1] : vector<8x8xf32> to vector<8xf32>
    %358 = vector.shape_cast %357 : vector<8xf32> to vector<8x1xf32>
    %359 = tpu.reciprocal %358 {approx = true} : vector<8x1xf32> -> vector<8x1xf32>
    %360 = vector.broadcast %359 : vector<8x1xf32> to vector<8x8xf32>
    %361 = arith.mulf %356, %360 : vector<8x8xf32>
    %cst_120 = arith.constant dense<0.000000e+00> : vector<8x8xf32>
    %362 = tpu.matmul %361, %350, %cst_120 {dimension_numbers = #tpu.dot_dimension_numbers<[1], [0], [0], [1], [0, 0, 1, 1], [], []>} : vector<8x8xf32>, vector<8x8xf32>, vector<8x8xf32> -> vector<8x8xf32>
    %363 = vector.extract_strided_slice %284 {offsets = [8, 8], sizes = [8, 8], strides = [1, 1]} : vector<16x32xf32> to vector<8x8xf32>
    %364 = vector.extract_strided_slice %285 {offsets = [8, 8], sizes = [8, 8], strides = [1, 1]} : vector<16x32xf32> to vector<8x8xf32>
    %365 = vector.extract_strided_slice %286 {offsets = [8, 8], sizes = [8, 8], strides = [1, 1]} : vector<16x32xf32> to vector<8x8xf32>
    %cst_121 = arith.constant dense<0.000000e+00> : vector<8x8xf32>
    %366 = tpu.matmul %363, %364, %cst_121 {dimension_numbers = #tpu.dot_dimension_numbers<[1], [1], [0], [0], [0, 0, 1, 0], [], []>} : vector<8x8xf32>, vector<8x8xf32>, vector<8x8xf32> -> vector<8x8xf32>
    %cst_122 = arith.constant dense<0xFF800000> : vector<8xf32>
    %367 = vector.multi_reduction <maximumf>, %366, %cst_122 [1] : vector<8x8xf32> to vector<8xf32>
    %368 = vector.shape_cast %367 : vector<8xf32> to vector<8x1xf32>
    %369 = vector.broadcast %368 : vector<8x1xf32> to vector<8x8xf32>
    %370 = arith.subf %366, %369 : vector<8x8xf32>
    %371 = math.exp %370 : vector<8x8xf32>
    %cst_123 = arith.constant dense<0.000000e+00> : vector<8xf32>
    %372 = vector.multi_reduction <add>, %371, %cst_123 [1] : vector<8x8xf32> to vector<8xf32>
    %373 = vector.shape_cast %372 : vector<8xf32> to vector<8x1xf32>
    %374 = tpu.reciprocal %373 {approx = true} : vector<8x1xf32> -> vector<8x1xf32>
    %375 = vector.broadcast %374 : vector<8x1xf32> to vector<8x8xf32>
    %376 = arith.mulf %371, %375 : vector<8x8xf32>
    %cst_124 = arith.constant dense<0.000000e+00> : vector<8x8xf32>
    %377 = tpu.matmul %376, %365, %cst_124 {dimension_numbers = #tpu.dot_dimension_numbers<[1], [0], [0], [1], [0, 0, 1, 1], [], []>} : vector<8x8xf32>, vector<8x8xf32>, vector<8x8xf32> -> vector<8x8xf32>
    %378 = vector.extract_strided_slice %284 {offsets = [8, 16], sizes = [8, 8], strides = [1, 1]} : vector<16x32xf32> to vector<8x8xf32>
    %379 = vector.extract_strided_slice %285 {offsets = [8, 16], sizes = [8, 8], strides = [1, 1]} : vector<16x32xf32> to vector<8x8xf32>
    %380 = vector.extract_strided_slice %286 {offsets = [8, 16], sizes = [8, 8], strides = [1, 1]} : vector<16x32xf32> to vector<8x8xf32>
    %cst_125 = arith.constant dense<0.000000e+00> : vector<8x8xf32>
    %381 = tpu.matmul %378, %379, %cst_125 {dimension_numbers = #tpu.dot_dimension_numbers<[1], [1], [0], [0], [0, 0, 1, 0], [], []>} : vector<8x8xf32>, vector<8x8xf32>, vector<8x8xf32> -> vector<8x8xf32>
    %cst_126 = arith.constant dense<0xFF800000> : vector<8xf32>
    %382 = vector.multi_reduction <maximumf>, %381, %cst_126 [1] : vector<8x8xf32> to vector<8xf32>
    %383 = vector.shape_cast %382 : vector<8xf32> to vector<8x1xf32>
    %384 = vector.broadcast %383 : vector<8x1xf32> to vector<8x8xf32>
    %385 = arith.subf %381, %384 : vector<8x8xf32>
    %386 = math.exp %385 : vector<8x8xf32>
    %cst_127 = arith.constant dense<0.000000e+00> : vector<8xf32>
    %387 = vector.multi_reduction <add>, %386, %cst_127 [1] : vector<8x8xf32> to vector<8xf32>
    %388 = vector.shape_cast %387 : vector<8xf32> to vector<8x1xf32>
    %389 = tpu.reciprocal %388 {approx = true} : vector<8x1xf32> -> vector<8x1xf32>
    %390 = vector.broadcast %389 : vector<8x1xf32> to vector<8x8xf32>
    %391 = arith.mulf %386, %390 : vector<8x8xf32>
    %cst_128 = arith.constant dense<0.000000e+00> : vector<8x8xf32>
    %392 = tpu.matmul %391, %380, %cst_128 {dimension_numbers = #tpu.dot_dimension_numbers<[1], [0], [0], [1], [0, 0, 1, 1], [], []>} : vector<8x8xf32>, vector<8x8xf32>, vector<8x8xf32> -> vector<8x8xf32>
    %393 = vector.extract_strided_slice %284 {offsets = [8, 24], sizes = [8, 8], strides = [1, 1]} : vector<16x32xf32> to vector<8x8xf32>
    %394 = vector.extract_strided_slice %285 {offsets = [8, 24], sizes = [8, 8], strides = [1, 1]} : vector<16x32xf32> to vector<8x8xf32>
    %395 = vector.extract_strided_slice %286 {offsets = [8, 24], sizes = [8, 8], strides = [1, 1]} : vector<16x32xf32> to vector<8x8xf32>
    %cst_129 = arith.constant dense<0.000000e+00> : vector<8x8xf32>
    %396 = tpu.matmul %393, %394, %cst_129 {dimension_numbers = #tpu.dot_dimension_numbers<[1], [1], [0], [0], [0, 0, 1, 0], [], []>} : vector<8x8xf32>, vector<8x8xf32>, vector<8x8xf32> -> vector<8x8xf32>
    %cst_130 = arith.constant dense<0xFF800000> : vector<8xf32>
    %397 = vector.multi_reduction <maximumf>, %396, %cst_130 [1] : vector<8x8xf32> to vector<8xf32>
    %398 = vector.shape_cast %397 : vector<8xf32> to vector<8x1xf32>
    %399 = vector.broadcast %398 : vector<8x1xf32> to vector<8x8xf32>
    %400 = arith.subf %396, %399 : vector<8x8xf32>
    %401 = math.exp %400 : vector<8x8xf32>
    %cst_131 = arith.constant dense<0.000000e+00> : vector<8xf32>
    %402 = vector.multi_reduction <add>, %401, %cst_131 [1] : vector<8x8xf32> to vector<8xf32>
    %403 = vector.shape_cast %402 : vector<8xf32> to vector<8x1xf32>
    %404 = tpu.reciprocal %403 {approx = true} : vector<8x1xf32> -> vector<8x1xf32>
    %405 = vector.broadcast %404 : vector<8x1xf32> to vector<8x8xf32>
    %406 = arith.mulf %401, %405 : vector<8x8xf32>
    %cst_132 = arith.constant dense<0.000000e+00> : vector<8x8xf32>
    %407 = tpu.matmul %406, %395, %cst_132 {dimension_numbers = #tpu.dot_dimension_numbers<[1], [0], [0], [1], [0, 0, 1, 1], [], []>} : vector<8x8xf32>, vector<8x8xf32>, vector<8x8xf32> -> vector<8x8xf32>
    %408 = tpu.concatenate %362, %377, %392, %407 in 1 : vector<8x8xf32>, vector<8x8xf32>, vector<8x8xf32>, vector<8x8xf32> -> vector<8x32xf32>
    %409 = tpu.concatenate %347, %408 in 0 : vector<8x32xf32>, vector<8x32xf32> -> vector<16x32xf32>
    %c1_133 = arith.constant 1 : index
    %c0_134 = arith.constant 0 : index
    %c0_135 = arith.constant 0 : index
    %410 = vector.load %arg8[%c1_133, %c0_134, %c0_135] : memref<2x32x32xf32, #tpu.memory_space<vmem>>, vector<1x32x32xf32>
    %411 = vector.shape_cast %410 : vector<1x32x32xf32> to vector<32x32xf32>
    %cst_136 = arith.constant dense<0.000000e+00> : vector<16x32xf32>
    %412 = tpu.matmul %409, %411, %cst_136 {dimension_numbers = #tpu.dot_dimension_numbers<[1], [0], [0], [1], [0, 0, 1, 1], [], []>} : vector<16x32xf32>, vector<32x32xf32>, vector<16x32xf32> -> vector<16x32xf32>
    %413 = vector.broadcast %271 : vector<1x32xf32> to vector<16x32xf32>
    %414 = arith.addf %412, %413 : vector<16x32xf32>
    %415 = arith.addf %268, %414 : vector<16x32xf32>
    %cst_137 = arith.constant dense<0.000000e+00> : vector<16xf32>
    %416 = vector.multi_reduction <add>, %415, %cst_137 [1] : vector<16x32xf32> to vector<16xf32>
    %417 = vector.shape_cast %416 : vector<16xf32> to vector<16x1xf32>
    %cst_138 = arith.constant 3.200000e+01 : f32
    %418 = vector.broadcast %cst_138 : f32 to vector<16x1xf32>
    %419 = arith.divf %417, %418 : vector<16x1xf32>
    %420 = vector.broadcast %419 : vector<16x1xf32> to vector<16x32xf32>
    %421 = arith.subf %415, %420 : vector<16x32xf32>
    %422 = arith.mulf %421, %421 : vector<16x32xf32>
    %cst_139 = arith.constant dense<0.000000e+00> : vector<16xf32>
    %423 = vector.multi_reduction <add>, %422, %cst_139 [1] : vector<16x32xf32> to vector<16xf32>
    %424 = vector.shape_cast %423 : vector<16xf32> to vector<16x1xf32>
    %cst_140 = arith.constant 3.200000e+01 : f32
    %425 = vector.broadcast %cst_140 : f32 to vector<16x1xf32>
    %426 = arith.divf %424, %425 : vector<16x1xf32>
    %427 = vector.broadcast %419 : vector<16x1xf32> to vector<16x32xf32>
    %428 = arith.subf %415, %427 : vector<16x32xf32>
    %cst_141 = arith.constant 9.99999996E-13 : f32
    %429 = vector.broadcast %cst_141 : f32 to vector<16x1xf32>
    %430 = arith.addf %426, %429 : vector<16x1xf32>
    %431 = math.rsqrt %430 : vector<16x1xf32>
    %432 = vector.broadcast %431 : vector<16x1xf32> to vector<16x32xf32>
    %433 = arith.mulf %428, %432 : vector<16x32xf32>
    %434 = vector.broadcast %272 : vector<1x32xf32> to vector<16x32xf32>
    %435 = arith.mulf %433, %434 : vector<16x32xf32>
    %436 = vector.broadcast %273 : vector<1x32xf32> to vector<16x32xf32>
    %437 = arith.addf %435, %436 : vector<16x32xf32>
    %c1_142 = arith.constant 1 : index
    %c0_143 = arith.constant 0 : index
    %c0_144 = arith.constant 0 : index
    %438 = vector.load %arg9[%c1_142, %c0_143, %c0_144] : memref<2x32x64xf32, #tpu.memory_space<vmem>>, vector<1x32x64xf32>
    %439 = vector.shape_cast %438 : vector<1x32x64xf32> to vector<32x64xf32>
    %cst_145 = arith.constant dense<0.000000e+00> : vector<16x64xf32>
    %440 = tpu.matmul %437, %439, %cst_145 {dimension_numbers = #tpu.dot_dimension_numbers<[1], [0], [0], [1], [0, 0, 1, 1], [], []>} : vector<16x32xf32>, vector<32x64xf32>, vector<16x64xf32> -> vector<16x64xf32>
    %c1_146 = arith.constant 1 : index
    %c0_147 = arith.constant 0 : index
    %c0_148 = arith.constant 0 : index
    %441 = vector.load %arg10[%c1_146, %c0_147, %c0_148] : memref<2x1x64xf32, #tpu.memory_space<vmem>>, vector<1x1x64xf32>
    %442 = vector.shape_cast %441 : vector<1x1x64xf32> to vector<1x64xf32>
    %443 = vector.broadcast %442 : vector<1x64xf32> to vector<16x64xf32>
    %444 = arith.addf %440, %443 : vector<16x64xf32>
    %cst_149 = arith.constant 5.000000e-01 : f32
    %445 = vector.broadcast %cst_149 : f32 to vector<16x64xf32>
    %446 = arith.mulf %445, %444 : vector<16x64xf32>
    %cst_150 = arith.constant 4.471500e-02 : f32
    %447 = vector.broadcast %cst_150 : f32 to vector<16x64xf32>
    %448 = arith.mulf %447, %444 : vector<16x64xf32>
    %449 = arith.mulf %448, %444 : vector<16x64xf32>
    %450 = arith.mulf %449, %444 : vector<16x64xf32>
    %451 = arith.addf %444, %450 : vector<16x64xf32>
    %cst_151 = arith.constant 0.797884583 : f32
    %452 = vector.broadcast %cst_151 : f32 to vector<16x64xf32>
    %453 = arith.mulf %452, %451 : vector<16x64xf32>
    %454 = math.tanh %453 : vector<16x64xf32>
    %cst_152 = arith.constant 1.000000e+00 : f32
    %455 = vector.broadcast %cst_152 : f32 to vector<16x64xf32>
    %456 = arith.addf %455, %454 : vector<16x64xf32>
    %457 = arith.mulf %446, %456 : vector<16x64xf32>
    %c1_153 = arith.constant 1 : index
    %c0_154 = arith.constant 0 : index
    %c0_155 = arith.constant 0 : index
    %458 = vector.load %arg11[%c1_153, %c0_154, %c0_155] : memref<2x64x32xf32, #tpu.memory_space<vmem>>, vector<1x64x32xf32>
    %459 = vector.shape_cast %458 : vector<1x64x32xf32> to vector<64x32xf32>
    %cst_156 = arith.constant dense<0.000000e+00> : vector<16x32xf32>
    %460 = tpu.matmul %457, %459, %cst_156 {dimension_numbers = #tpu.dot_dimension_numbers<[1], [0], [0], [1], [0, 0, 1, 1], [], []>} : vector<16x64xf32>, vector<64x32xf32>, vector<16x32xf32> -> vector<16x32xf32>
    %461 = vector.broadcast %274 : vector<1x32xf32> to vector<16x32xf32>
    %462 = arith.addf %460, %461 : vector<16x32xf32>
    %463 = arith.addf %437, %462 : vector<16x32xf32>
    %cst_157 = arith.constant dense<0.000000e+00> : vector<16xf32>
    %464 = vector.multi_reduction <add>, %463, %cst_157 [1] : vector<16x32xf32> to vector<16xf32>
    %465 = vector.shape_cast %464 : vector<16xf32> to vector<16x1xf32>
    %cst_158 = arith.constant 3.200000e+01 : f32
    %466 = vector.broadcast %cst_158 : f32 to vector<16x1xf32>
    %467 = arith.divf %465, %466 : vector<16x1xf32>
    %468 = vector.broadcast %467 : vector<16x1xf32> to vector<16x32xf32>
    %469 = arith.subf %463, %468 : vector<16x32xf32>
    %470 = arith.mulf %469, %469 : vector<16x32xf32>
    %cst_159 = arith.constant dense<0.000000e+00> : vector<16xf32>
    %471 = vector.multi_reduction <add>, %470, %cst_159 [1] : vector<16x32xf32> to vector<16xf32>
    %472 = vector.shape_cast %471 : vector<16xf32> to vector<16x1xf32>
    %cst_160 = arith.constant 3.200000e+01 : f32
    %473 = vector.broadcast %cst_160 : f32 to vector<16x1xf32>
    %474 = arith.divf %472, %473 : vector<16x1xf32>
    %475 = vector.broadcast %467 : vector<16x1xf32> to vector<16x32xf32>
    %476 = arith.subf %463, %475 : vector<16x32xf32>
    %cst_161 = arith.constant 9.99999996E-13 : f32
    %477 = vector.broadcast %cst_161 : f32 to vector<16x1xf32>
    %478 = arith.addf %474, %477 : vector<16x1xf32>
    %479 = math.rsqrt %478 : vector<16x1xf32>
    %480 = vector.broadcast %479 : vector<16x1xf32> to vector<16x32xf32>
    %481 = arith.mulf %476, %480 : vector<16x32xf32>
    %482 = vector.broadcast %275 : vector<1x32xf32> to vector<16x32xf32>
    %483 = arith.mulf %481, %482 : vector<16x32xf32>
    %484 = vector.broadcast %276 : vector<1x32xf32> to vector<16x32xf32>
    %485 = arith.addf %483, %484 : vector<16x32xf32>
    %c0_162 = arith.constant 0 : index
    %c0_163 = arith.constant 0 : index
    %486 = vector.load %arg13[%c0_162, %c0_163] : memref<16x32xf32, #tpu.memory_space<vmem>>, vector<16x32xf32>
    tpu.vector_store %arg13[%c0_162, %c0_163], %485 {strides = array<i32>} : memref<16x32xf32, #tpu.memory_space<vmem>>, vector<16x32xf32>,
    return
  }
  func.func @transform_0(%arg0: i32) -> (i32, i32) {
    %c0_i32 = arith.constant 0 : i32
    %c0_i32_0 = arith.constant 0 : i32
    %c0_i32_1 = arith.constant 0 : i32
    return %c0_i32, %c0_i32_0 : i32, i32
  }
  func.func @transform_1(%arg0: i32) -> (i32, i32) {
    %c0_i32 = arith.constant 0 : i32
    %c0_i32_0 = arith.constant 0 : i32
    %c0_i32_1 = arith.constant 0 : i32
    return %c0_i32, %c0_i32_0 : i32, i32
  }
  func.func @transform_2(%arg0: i32) -> (i32, i32) {
    %c0_i32 = arith.constant 0 : i32
    %c0_i32_0 = arith.constant 0 : i32
    %c0_i32_1 = arith.constant 0 : i32
    return %c0_i32, %c0_i32_0 : i32, i32
  }
  func.func @transform_3(%arg0: i32) -> (i32, i32) {
    %c0_i32 = arith.constant 0 : i32
    %c0_i32_0 = arith.constant 0 : i32
    %c0_i32_1 = arith.constant 0 : i32
    return %c0_i32, %c0_i32_0 : i32, i32
  }
  func.func @transform_4(%arg0: i32) -> (i32, i32) {
    %c0_i32 = arith.constant 0 : i32
    %c0_i32_0 = arith.constant 0 : i32
    %c0_i32_1 = arith.constant 0 : i32
    return %c0_i32, %c0_i32_0 : i32, i32
  }
  func.func @transform_5(%arg0: i32) -> (i32, i32, i32) {
    %c0_i32 = arith.constant 0 : i32
    %c0_i32_0 = arith.constant 0 : i32
    %c0_i32_1 = arith.constant 0 : i32
    %c0_i32_2 = arith.constant 0 : i32
    return %c0_i32, %c0_i32_0, %c0_i32_1 : i32, i32, i32
  }
  func.func @transform_6(%arg0: i32) -> (i32, i32, i32) {
    %c0_i32 = arith.constant 0 : i32
    %c0_i32_0 = arith.constant 0 : i32
    %c0_i32_1 = arith.constant 0 : i32
    %c0_i32_2 = arith.constant 0 : i32
    return %c0_i32, %c0_i32_0, %c0_i32_1 : i32, i32, i32
  }
  func.func @transform_7(%arg0: i32) -> (i32, i32, i32) {
    %c0_i32 = arith.constant 0 : i32
    %c0_i32_0 = arith.constant 0 : i32
    %c0_i32_1 = arith.constant 0 : i32
    %c0_i32_2 = arith.constant 0 : i32
    return %c0_i32, %c0_i32_0, %c0_i32_1 : i32, i32, i32
  }
  func.func @transform_8(%arg0: i32) -> (i32, i32, i32) {
    %c0_i32 = arith.constant 0 : i32
    %c0_i32_0 = arith.constant 0 : i32
    %c0_i32_1 = arith.constant 0 : i32
    %c0_i32_2 = arith.constant 0 : i32
    return %c0_i32, %c0_i32_0, %c0_i32_1 : i32, i32, i32
  }
  func.func @transform_9(%arg0: i32) -> (i32, i32, i32) {
    %c0_i32 = arith.constant 0 : i32
    %c0_i32_0 = arith.constant 0 : i32
    %c0_i32_1 = arith.constant 0 : i32
    %c0_i32_2 = arith.constant 0 : i32
    return %c0_i32, %c0_i32_0, %c0_i32_1 : i32, i32, i32
  }
  func.func @transform_10(%arg0: i32) -> (i32, i32, i32) {
    %c0_i32 = arith.constant 0 : i32
    %c0_i32_0 = arith.constant 0 : i32
    %c0_i32_1 = arith.constant 0 : i32
    %c0_i32_2 = arith.constant 0 : i32
    return %c0_i32, %c0_i32_0, %c0_i32_1 : i32, i32, i32
  }
  func.func @transform_11(%arg0: i32) -> (i32, i32, i32) {
    %c0_i32 = arith.constant 0 : i32
    %c0_i32_0 = arith.constant 0 : i32
    %c0_i32_1 = arith.constant 0 : i32
    %c0_i32_2 = arith.constant 0 : i32
    return %c0_i32, %c0_i32_0, %c0_i32_1 : i32, i32, i32
  }
  func.func @transform_12(%arg0: i32) -> (i32, i32) {
    %c0_i32 = arith.constant 0 : i32
    %c0_i32_0 = arith.constant 0 : i32
    %c0_i32_1 = arith.constant 0 : i32
    return %c0_i32, %c0_i32_0 : i32, i32
  }
}

</mosaic_0001>

<llo_original>
// kernel: tpu_custom_call.1
$region0: #{tpu_custom_call.1}
  #allocation0 [shape = 'u32[]', space=smem, size = 0x4, offset = 0x4, fixed_abs, tag = 'smem constant byte address 0x4 - core index']
  #allocation1 [shape = 'u32[144,128]{1,0:T(1,128)}', space=vmem, size = 0x12000, scoped, tag = 'internal scratch']
  %s0 = inlined_call_operand.vmem [shape: s32[16,2], index: 0, kind: input, shape index: {}]
  %s1 = inlined_call_operand.vmem [shape: f32[128,32], index: 1, kind: input, shape index: {}]
  %s2 = inlined_call_operand.vmem [shape: f32[64,32], index: 2, kind: input, shape index: {}]
  %s3 = inlined_call_operand.vmem [shape: f32[2,32], index: 3, kind: input, shape index: {}]
  %s4 = inlined_call_operand.vmem [shape: f32[2,32], index: 4, kind: input, shape index: {}]
  %s5 = inlined_call_operand.vmem [shape: f32[2,32,96], index: 5, kind: input, shape index: {}]
  %s6 = inlined_call_operand.vmem [shape: f32[2,1,96], index: 6, kind: input, shape index: {}]
  %s7 = inlined_call_operand.vmem [shape: f32[2,32,32], index: 7, kind: input, shape index: {}]
  %s8 = inlined_call_operand.vmem [shape: f32[2,32,64], index: 8, kind: input, shape index: {}]
  %s9 = inlined_call_operand.vmem [shape: f32[2,1,64], index: 9, kind: input, shape index: {}]
  %s10 = inlined_call_operand.vmem [shape: f32[2,64,32], index: 10, kind: input, shape index: {}]
  %s11 = inlined_call_operand.vmem [shape: f32[2,6,32], index: 11, kind: input, shape index: {}]
  %s12 = inlined_call_operand.hbm [shape: f32[16,32], index: 12, kind: output, shape index: {}]
  %s13 = sld [smem:[#allocation0]]
  $region58: #{tpu_custom_call.1} parent=0
    _
  %s15 = ssub.s32 1, %s13
  %s16 = scalar_select 0, %s15, %s13
  $region1: #{tpu_custom_call.1} parent=0
    #allocation2 [shape = 'u8[8192]{0}', space=vmem, size = 0x2000, scoped, tag = 'output window, operand 0, single buffered']
    #allocation3 [shape = 's32[1]{0}', space=sflag, size = 0x4, scoped, tag = 'scoped memory for tpu_custom_call.1']
    %17 = vsyncpa [#allocation3], 0
    // Predicated region
    $region2: #{tpu_custom_call.1} parent=1 // pred_check
      _
    $region3: #{tpu_custom_call.1} parent=1 // pred_check_branch
      %19 = sbr.rel (0) target = $region5
    $region4: #{tpu_custom_call.1} parent=1 // pred_region
      _
    $region5: #{tpu_custom_call.1} parent=1 // pred_fallthru
      _
    // Predicated region
    $region6: #{tpu_custom_call.1} parent=1 // pred_check
      _
    $region7: #{tpu_custom_call.1} parent=1 // pred_check_branch
      %21 = sbr.rel (0) target = $region9
    $region8: #{tpu_custom_call.1} parent=1 // pred_region
      _
    $region9: #{tpu_custom_call.1} parent=1 // pred_fallthru
      _
    // Predicated region
    $region10: #{tpu_custom_call.1} parent=1 // pred_check
      _
    $region11: #{tpu_custom_call.1} parent=1 // pred_check_branch
      %23 = sbr.rel (0) target = $region13
    $region12: #{tpu_custom_call.1} parent=1 // pred_region
      _
    $region13: #{tpu_custom_call.1} parent=1 // pred_fallthru
      _
    // Predicated region
    $region14: #{tpu_custom_call.1} parent=1 // pred_check
      _
    $region15: #{tpu_custom_call.1} parent=1 // pred_check_branch
      %25 = sbr.rel (0) target = $region17
    $region16: #{tpu_custom_call.1} parent=1 // pred_region
      _
    $region17: #{tpu_custom_call.1} parent=1 // pred_fallthru
      _
    // Predicated region
    $region18: #{tpu_custom_call.1} parent=1 // pred_check
      _
    $region19: #{tpu_custom_call.1} parent=1 // pred_check_branch
      %27 = sbr.rel (0) target = $region21
    $region20: #{tpu_custom_call.1} parent=1 // pred_region
      _
    $region21: #{tpu_custom_call.1} parent=1 // pred_fallthru
      _
    // Predicated region
    $region22: #{tpu_custom_call.1} parent=1 // pred_check
      _
    $region23: #{tpu_custom_call.1} parent=1 // pred_check_branch
      %29 = sbr.rel (0) target = $region25
    $region24: #{tpu_custom_call.1} parent=1 // pred_region
      _
    $region25: #{tpu_custom_call.1} parent=1 // pred_fallthru
      _
    // Predicated region
    $region26: #{tpu_custom_call.1} parent=1 // pred_check
      _
    $region27: #{tpu_custom_call.1} parent=1 // pred_check_branch
      %31 = sbr.rel (0) target = $region29
    $region28: #{tpu_custom_call.1} parent=1 // pred_region
      _
    $region29: #{tpu_custom_call.1} parent=1 // pred_fallthru
      _
    // Predicated region
    $region30: #{tpu_custom_call.1} parent=1 // pred_check
      _
    $region31: #{tpu_custom_call.1} parent=1 // pred_check_branch
      %33 = sbr.rel (0) target = $region33
    $region32: #{tpu_custom_call.1} parent=1 // pred_region
      _
    $region33: #{tpu_custom_call.1} parent=1 // pred_fallthru
      _
    // Predicated region
    $region34: #{tpu_custom_call.1} parent=1 // pred_check
      _
    $region35: #{tpu_custom_call.1} parent=1 // pred_check_branch
      %35 = sbr.rel (0) target = $region37
    $region36: #{tpu_custom_call.1} parent=1 // pred_region
      _
    $region37: #{tpu_custom_call.1} parent=1 // pred_fallthru
      _
    // Predicated region
    $region38: #{tpu_custom_call.1} parent=1 // pred_check
      _
    $region39: #{tpu_custom_call.1} parent=1 // pred_check_branch
      %37 = sbr.rel (0) target = $region41
    $region40: #{tpu_custom_call.1} parent=1 // pred_region
      _
    $region41: #{tpu_custom_call.1} parent=1 // pred_fallthru
      _
    // Predicated region
    $region42: #{tpu_custom_call.1} parent=1 // pred_check
      _
    $region43: #{tpu_custom_call.1} parent=1 // pred_check_branch
      %39 = sbr.rel (0) target = $region45
    $region44: #{tpu_custom_call.1} parent=1 // pred_region
      _
    $region45: #{tpu_custom_call.1} parent=1 // pred_fallthru
      _
    // Predicated region
    $region46: #{tpu_custom_call.1} parent=1 // pred_check
      _
    $region47: #{tpu_custom_call.1} parent=1 // pred_check_branch
      %41 = sbr.rel (0) target = $region49
    $region48: #{tpu_custom_call.1} parent=1 // pred_region
      _
    $region49: #{tpu_custom_call.1} parent=1 // pred_fallthru
      _
    %v42 = vld [vmem:[%s0] sm:$0xff]
    %v43 = vld [vmem:[%s0 + $0x8] sm:$0xff]
    %v44 = vlaneseq
    %v45 = vand.u32 %v44, 127
    %46 = vset.pattern.permute.xlu0 0
    %47 = vperm.xlu0 %46, %v42
    %v48 = vpop.permute.xlu0 %47
    %49 = vset.pattern.permute.xlu0 0
    %50 = vperm.xlu0 %49, %v43
    %v51 = vpop.permute.xlu0 %50
    %vm52 = vcmp.eq.s32.totalorder %v45, %v48
    %vm53 = vcmp.eq.s32.totalorder %v45, %v51
    %v54 = vsel %vm52, 1, 0
    %v55 = vsel %vm53, 1, 0
    %v56 = vcvt.s32.f32 %v54
    %v57 = vcvt.s32.f32 %v55
    %v58 = vld [vmem:[%s1] sm:$0xff]
    %v59 = vld [vmem:[%s1 + $0x8] sm:$0xff]
    %v60 = vld [vmem:[%s1 + $0x10] sm:$0xff]
    %v61 = vld [vmem:[%s1 + $0x18] sm:$0xff]
    %v62 = vld [vmem:[%s1 + $0x20] sm:$0xff]
    %v63 = vld [vmem:[%s1 + $0x28] sm:$0xff]
    %v64 = vld [vmem:[%s1 + $0x30] sm:$0xff]
    %v65 = vld [vmem:[%s1 + $0x38] sm:$0xff]
    %v66 = vld [vmem:[%s1 + $0x40] sm:$0xff]
    %v67 = vld [vmem:[%s1 + $0x48] sm:$0xff]
    %v68 = vld [vmem:[%s1 + $0x50] sm:$0xff]
    %v69 = vld [vmem:[%s1 + $0x58] sm:$0xff]
    %v70 = vld [vmem:[%s1 + $0x60] sm:$0xff]
    %v71 = vld [vmem:[%s1 + $0x68] sm:$0xff]
    %v72 = vld [vmem:[%s1 + $0x70] sm:$0xff]
    %v73 = vld [vmem:[%s1 + $0x78] sm:$0xff]
    %v74 = vld [vmem:[%s2] sm:$0xff]
    %vm75 = vcmp.eq.s32.totalorder %v42, 1
    %vm76 = vcmp.eq.s32.totalorder %v43, 1
    %v77 = vsel %vm75, 1, 0
    %v78 = vsel %vm76, 1, 0
    %v79 = vcvt.s32.f32 %v77
    %v80 = vcvt.s32.f32 %v78
    %v81 = vld [vmem:[%s3] sm:$0x1]
    %v82 = vsub.f32 1.0, %v79
    %v83 = vsub.f32 1.0, %v80
    %v84 = vlaneseq
    %v85 = vshrl.u32 %v84, 7
    %v86 = vsub.s32 0, %v85
    %v87 = vrot.slane %v81, %v86
    %89 = vset.pattern.permute.xlu0 1
    %90 = vperm.xlu0 %89, %v82
    %v91 = vpop.permute.xlu0 %90
    %94 = vset.pattern.permute.xlu0 1
    %95 = vperm.xlu0 %94, %v83
    %v96 = vpop.permute.xlu0 %95
    %v98 = vmul.f32 %v87, %v91
    %v99 = vmul.f32 %v87, %v96
    %v100 = vld [vmem:[%s3 + $0x1] sm:$0x1]
    %v101 = vlaneseq
    %v102 = vshrl.u32 %v101, 7
    %v103 = vsub.s32 0, %v102
    %v104 = vrot.slane %v100, %v103
    %106 = vset.pattern.permute.xlu0 1
    %107 = vperm.xlu0 %106, %v79
    %v108 = vpop.permute.xlu0 %107
    %111 = vset.pattern.permute.xlu0 1
    %112 = vperm.xlu0 %111, %v80
    %v113 = vpop.permute.xlu0 %112
    %v115 = vmul.f32 %v104, %v108
    %v116 = vmul.f32 %v104, %v113
    %v117 = vadd.f32 %v98, %v115
    %v118 = vadd.f32 %v99, %v116
    %119 = vmatprep.subr.mxu0 0.0
    %120 = vmatpush1.msra.mxu0 %v73
    %121 = vmatprep.subr.mxu0 0.0
    %122 = vmatpush1.msra.mxu0 %v72
    %123 = vmatprep.subr.mxu0 0.0
    %124 = vmatpush1.msra.mxu0 %v71
    %125 = vmatprep.subr.mxu0 0.0
    %126 = vmatpush1.msra.mxu0 %v70
    %127 = vmatprep.subr.mxu0 0.0
    %128 = vmatpush1.msra.mxu0 %v69
    %129 = vmatprep.subr.mxu0 0.0
    %130 = vmatpush1.msra.mxu0 %v68
    %131 = vmatprep.subr.mxu0 0.0
    %132 = vmatpush1.msra.mxu0 %v67
    %133 = vmatprep.subr.mxu0 0.0
    %134 = vmatpush1.msra.mxu0 %v66
    %135 = vmatprep.subr.mxu0 0.0
    %136 = vmatpush1.msra.mxu0 %v65
    %137 = vmatprep.subr.mxu0 0.0
    %138 = vmatpush1.msra.mxu0 %v64
    %139 = vmatprep.subr.mxu0 0.0
    %140 = vmatpush1.msra.mxu0 %v63
    %141 = vmatprep.subr.mxu0 0.0
    %142 = vmatpush1.msra.mxu0 %v62
    %143 = vmatprep.subr.mxu0 0.0
    %144 = vmatpush1.msra.mxu0 %v61
    %145 = vmatprep.subr.mxu0 0.0
    %146 = vmatpush1.msra.mxu0 %v60
    %147 = vmatprep.subr.mxu0 0.0
    %148 = vmatpush1.msra.mxu0 %v59
    %149 = vmatprep.subr.mxu0 0.0
    %150 = vmatpush1.msra.mxu0 %v58
    %151 = vmatprep.subr.mxu0 0.0
    %152 = vmatpush2.msra.mxu0 0.0
    %153 = vmatprep.subr.mxu0 0.0
    %154 = vmatpush2.msra.mxu0 0.0
    %155 = vmatprep.subr.mxu0 0.0
    %156 = vmatpush2.msra.mxu0 0.0
    %157 = vmatprep.subr.mxu0 0.0
    %158 = vmatpush2.msra.mxu0 0.0
    %159 = vmatprep.subr.mxu0 0.0
    %160 = vmatpush2.msra.mxu0 0.0
    %161 = vmatprep.subr.mxu0 0.0
    %162 = vmatpush2.msra.mxu0 0.0
    %163 = vmatprep.subr.mxu0 0.0
    %164 = vmatpush2.msra.mxu0 0.0
    %165 = vmatprep.subr.mxu0 0.0
    %166 = vmatpush2.msra.mxu0 0.0
    %167 = vmatprep.subr.mxu0 0.0
    %168 = vmatpush2.msra.mxu0 0.0
    %169 = vmatprep.subr.mxu0 0.0
    %170 = vmatpush2.msra.mxu0 0.0
    %171 = vmatprep.subr.mxu0 0.0
    %172 = vmatpush2.msra.mxu0 0.0
    %173 = vmatprep.subr.mxu0 0.0
    %174 = vmatpush2.msra.mxu0 0.0
    %175 = vmatprep.subr.mxu0 0.0
    %176 = vmatpush2.msra.mxu0 0.0
    %177 = vmatprep.subr.mxu0 0.0
    %178 = vmatpush2.msra.mxu0 0.0
    %179 = vmatprep.subr.mxu0 0.0
    %180 = vmatpush2.msra.mxu0 0.0
    %181 = vmatprep.subr.mxu0 0.0
    %182 = vmatpush2.msra.mxu0 0.0
    %183 = vmatprep.mubr.f32.mxu0 0.0
    %184 = vmatmul.mubr.f32.gmra.mxu0 %v56
    %v185 = vpop.f32.mrf.mxu0
    %v186 = vadd.f32 %v74, %v185
    %v187 = vpop.f32.mrf.mxu0
    %188 = vmatprep.mubr.f32.mxu0 0.0
    %189 = vmatmul.mubr.f32.gmra.mxu0 %v57
    %v190 = vpop.f32.mrf.mxu0
    %v191 = vadd.f32 %v74, %v190
    %v192 = vpop.f32.mrf.mxu0
    %193 = vdwg.mxu0
    %v194 = vadd.f32 %v186, %v117
    %v195 = vadd.f32 %v191, %v118
    %v196 = vld [vmem:[%s4] sm:$0x1]
    %v197 = vld [vmem:[%s4 + $0x1] sm:$0x1]
    %vm198 = vcmask 261120
    %v199 = vsel %vm198, %v194, 0.0
    %200 = vadd.xlane.f32.xlu0 %v199
    %v201 = vpop.xlane.xlu0 %200
    %v202 = vsel %vm198, %v195, 0.0
    %203 = vadd.xlane.f32.xlu0 %v202
    %v204 = vpop.xlane.xlu0 %203
    %v205 = vrcp.pop 32.0
    %v206 = vmul.f32 %v201, %v205
    %v207 = vmul.f32 %v204, %v205
    %v208 = vsub.f32 %v194, %v206
    %v209 = vsub.f32 %v195, %v207
    %v210 = vmul.f32 %v208, %v208
    %v211 = vmul.f32 %v209, %v209
    %v212 = vsel %vm198, %v210, 0.0
    %213 = vadd.xlane.f32.xlu0 %v212
    %v214 = vpop.xlane.xlu0 %213
    %v215 = vsel %vm198, %v211, 0.0
    %216 = vadd.xlane.f32.xlu0 %v215
    %v217 = vpop.xlane.xlu0 %216
    %v218 = vmul.f32 %v214, %v205
    %v219 = vmul.f32 %v217, %v205
    %v220 = vadd.f32 %v218, 1e-12
    %v221 = vadd.f32 %v219, 1e-12
    %v222 = vrsqrt.pop %v220
    %v223 = vrsqrt.pop %v221
    %v224 = vmul.f32 %v208, %v222
    %v225 = vmul.f32 %v209, %v223
    %v226 = vlaneseq
    %v227 = vshrl.u32 %v226, 7
    %v228 = vsub.s32 0, %v227
    %v229 = vrot.slane %v196, %v228
    %v230 = vmul.f32 %v224, %v229
    %v231 = vmul.f32 %v225, %v229
    %v232 = vlaneseq
    %v233 = vshrl.u32 %v232, 7
    %v234 = vsub.s32 0, %v233
    %v235 = vrot.slane %v197, %v234
    %v236 = vadd.f32 %v230, %v235
    %v237 = vadd.f32 %v231, %v235
    %v238 = vld [vmem:[%s11] sm:$0x3f]
    %v239 = vld [vmem:[%s5] sm:$0xff]
    %v240 = vld [vmem:[%s5 + $0x8] sm:$0xff]
    %v241 = vld [vmem:[%s5 + $0x10] sm:$0xff]
    %v242 = vld [vmem:[%s5 + $0x18] sm:$0xff]
    %v243 = vld [vmem:[%s6] sm:$0x1]
    %v245 = vlaneseq
    %v246 = vshrl.u32 %v245, 7
    %v247 = vsub.s32 0, %v246
    %v248 = vrot.slane %v243, %v247
    %v251 = vsel %vm198, %v236, 0
    %v254 = vsel %vm198, %v237, 0
    %256 = vmatprep.subr.mxu0 0.0
    %257 = vmatpush1.msra.mxu0 0.0
    %258 = vmatprep.subr.mxu0 0.0
    %259 = vmatpush1.msra.mxu0 0.0
    %260 = vmatprep.subr.mxu0 0.0
    %261 = vmatpush1.msra.mxu0 0.0
    %262 = vmatprep.subr.mxu0 0.0
    %263 = vmatpush1.msra.mxu0 0.0
    %264 = vmatprep.subr.mxu0 0.0
    %265 = vmatpush1.msra.mxu0 0.0
    %266 = vmatprep.subr.mxu0 0.0
    %267 = vmatpush1.msra.mxu0 0.0
    %268 = vmatprep.subr.mxu0 0.0
    %269 = vmatpush1.msra.mxu0 0.0
    %270 = vmatprep.subr.mxu0 0.0
    %271 = vmatpush1.msra.mxu0 0.0
    %272 = vmatprep.subr.mxu0 0.0
    %273 = vmatpush1.msra.mxu0 0.0
    %274 = vmatprep.subr.mxu0 0.0
    %275 = vmatpush1.msra.mxu0 0.0
    %276 = vmatprep.subr.mxu0 0.0
    %277 = vmatpush1.msra.mxu0 0.0
    %278 = vmatprep.subr.mxu0 0.0
    %279 = vmatpush1.msra.mxu0 0.0
    %280 = vmatprep.subr.mxu0 0.0
    %281 = vmatpush1.msra.mxu0 %v242
    %282 = vmatprep.subr.mxu0 0.0
    %283 = vmatpush1.msra.mxu0 %v241
    %284 = vmatprep.subr.mxu0 0.0
    %285 = vmatpush1.msra.mxu0 %v240
    %286 = vmatprep.subr.mxu0 0.0
    %287 = vmatpush1.msra.mxu0 %v239
    %288 = vmatprep.subr.mxu0 0.0
    %289 = vmatpush2.msra.mxu0 0.0
    %290 = vmatprep.subr.mxu0 0.0
    %291 = vmatpush2.msra.mxu0 0.0
    %292 = vmatprep.subr.mxu0 0.0
    %293 = vmatpush2.msra.mxu0 0.0
    %294 = vmatprep.subr.mxu0 0.0
    %295 = vmatpush2.msra.mxu0 0.0
    %296 = vmatprep.subr.mxu0 0.0
    %297 = vmatpush2.msra.mxu0 0.0
    %298 = vmatprep.subr.mxu0 0.0
    %299 = vmatpush2.msra.mxu0 0.0
    %300 = vmatprep.subr.mxu0 0.0
    %301 = vmatpush2.msra.mxu0 0.0
    %302 = vmatprep.subr.mxu0 0.0
    %303 = vmatpush2.msra.mxu0 0.0
    %304 = vmatprep.subr.mxu0 0.0
    %305 = vmatpush2.msra.mxu0 0.0
    %306 = vmatprep.subr.mxu0 0.0
    %307 = vmatpush2.msra.mxu0 0.0
    %308 = vmatprep.subr.mxu0 0.0
    %309 = vmatpush2.msra.mxu0 0.0
    %310 = vmatprep.subr.mxu0 0.0
    %311 = vmatpush2.msra.mxu0 0.0
    %312 = vmatprep.subr.mxu0 0.0
    %313 = vmatpush2.msra.mxu0 0.0
    %314 = vmatprep.subr.mxu0 0.0
    %315 = vmatpush2.msra.mxu0 0.0
    %316 = vmatprep.subr.mxu0 0.0
    %317 = vmatpush2.msra.mxu0 0.0
    %318 = vmatprep.subr.mxu0 0.0
    %319 = vmatpush2.msra.mxu0 0.0
    %320 = vmatprep.mubr.f32.mxu0 0.0
    %321 = vmatmul.mubr.f32.gmra.mxu0 %v251
    %v322 = vpop.f32.mrf.mxu0
    %v323 = vadd.f32 %v248, %v322
    %v324 = vpop.f32.mrf.mxu0
    %325 = vmatprep.mubr.f32.mxu0 0.0
    %326 = vmatmul.mubr.f32.gmra.mxu0 %v254
    %v327 = vpop.f32.mrf.mxu0
    %v328 = vadd.f32 %v248, %v327
    %v329 = vpop.f32.mrf.mxu0
    %330 = vdwg.mxu0
    %332 = vrot.lane.b32.xlu0 %v323, 96
    %v333 = vpop.permute.xlu0 %332
    %vm334 = vcmask 64512
    %v335 = vsel %vm334, %v323, 0
    %v337 = vsel %vm334, %v333, 0
    %339 = vmatprep.subr.mxu0 0.0
    %340 = vmatpush1.xpose.msra.mxu0 0.0
    %341 = vmatprep.subr.mxu0 0.0
    %342 = vmatpush1.xpose.msra.mxu0 0.0
    %343 = vmatprep.subr.mxu0 0.0
    %344 = vmatpush1.xpose.msra.mxu0 0.0
    %345 = vmatprep.subr.mxu0 0.0
    %346 = vmatpush1.xpose.msra.mxu0 0.0
    %347 = vmatprep.subr.mxu0 0.0
    %348 = vmatpush1.xpose.msra.mxu0 0.0
    %349 = vmatprep.subr.mxu0 0.0
    %350 = vmatpush1.xpose.msra.mxu0 0.0
    %351 = vmatprep.subr.mxu0 0.0
    %352 = vmatpush1.xpose.msra.mxu0 0.0
    %353 = vmatprep.subr.mxu0 0.0
    %354 = vmatpush1.xpose.msra.mxu0 0.0
    %355 = vmatprep.subr.mxu0 0.0
    %356 = vmatpush1.xpose.msra.mxu0 0.0
    %357 = vmatprep.subr.mxu0 0.0
    %358 = vmatpush1.xpose.msra.mxu0 0.0
    %359 = vmatprep.subr.mxu0 0.0
    %360 = vmatpush1.xpose.msra.mxu0 0.0
    %361 = vmatprep.subr.mxu0 0.0
    %362 = vmatpush1.xpose.msra.mxu0 0.0
    %363 = vmatprep.subr.mxu0 0.0
    %364 = vmatpush1.xpose.msra.mxu0 0.0
    %365 = vmatprep.subr.mxu0 0.0
    %366 = vmatpush1.xpose.msra.mxu0 0.0
    %367 = vmatprep.subr.mxu0 0.0
    %368 = vmatpush1.xpose.msra.mxu0 0.0
    %369 = vmatprep.subr.mxu0 0.0
    %370 = vmatpush1.xpose.msra.mxu0 %v337
    %371 = vmatprep.subr.mxu0 0.0
    %372 = vmatpush2.xpose.msra.mxu0 0.0
    %373 = vmatprep.subr.mxu0 0.0
    %374 = vmatpush2.xpose.msra.mxu0 0.0
    %375 = vmatprep.subr.mxu0 0.0
    %376 = vmatpush2.xpose.msra.mxu0 0.0
    %377 = vmatprep.subr.mxu0 0.0
    %378 = vmatpush2.xpose.msra.mxu0 0.0
    %379 = vmatprep.subr.mxu0 0.0
    %380 = vmatpush2.xpose.msra.mxu0 0.0
    %381 = vmatprep.subr.mxu0 0.0
    %382 = vmatpush2.xpose.msra.mxu0 0.0
    %383 = vmatprep.subr.mxu0 0.0
    %384 = vmatpush2.xpose.msra.mxu0 0.0
    %385 = vmatprep.subr.mxu0 0.0
    %386 = vmatpush2.xpose.msra.mxu0 0.0
    %387 = vmatprep.subr.mxu0 0.0
    %388 = vmatpush2.xpose.msra.mxu0 0.0
    %389 = vmatprep.subr.mxu0 0.0
    %390 = vmatpush2.xpose.msra.mxu0 0.0
    %391 = vmatprep.subr.mxu0 0.0
    %392 = vmatpush2.xpose.msra.mxu0 0.0
    %393 = vmatprep.subr.mxu0 0.0
    %394 = vmatpush2.xpose.msra.mxu0 0.0
    %395 = vmatprep.subr.mxu0 0.0
    %396 = vmatpush2.xpose.msra.mxu0 0.0
    %397 = vmatprep.subr.mxu0 0.0
    %398 = vmatpush2.xpose.msra.mxu0 0.0
    %399 = vmatprep.subr.mxu0 0.0
    %400 = vmatpush2.xpose.msra.mxu0 0.0
    %401 = vmatprep.subr.mxu0 0.0
    %402 = vmatpush2.xpose.msra.mxu0 0.0
    %403 = vmatprep.mubr.f32.mxu0 0.0
    %404 = vmatmul.mubr.f32.gmra.mxu0 %v335
    %v405 = vpop.f32.mrf.mxu0
    %v406 = vadd.f32 0.0, %v405
    %v407 = vpop.f32.mrf.mxu0
    %408 = vdwg.mxu0
    %v409 = vsel %vm334, %v406, -inf
    %410 = vmax.xlane.f32.xlu0 %v409
    %v411 = vpop.xlane.xlu0 %410
    %v412 = vsub.f32 %v406, %v411
    %v413 = vmul.f32 %v412, 1.442695
    %v414 = vpow.pop %v413
    %v415 = vsel %vm334, %v414, 0.0
    %416 = vadd.xlane.f32.xlu0 %v415
    %v417 = vpop.xlane.xlu0 %416
    %v418 = vrcp.pop %v417
    %v419 = vmul.f32 %v414, %v418
    %420 = vrot.lane.b32.xlu0 %v323, 64
    %v421 = vpop.permute.xlu0 %420
    %v424 = vsel %vm334, %v419, 0
    %426 = vmatprep.subr.mxu0 0.0
    %427 = vmatpush1.msra.mxu0 0.0
    %428 = vmatprep.subr.mxu0 0.0
    %429 = vmatpush1.msra.mxu0 0.0
    %430 = vmatprep.subr.mxu0 0.0
    %431 = vmatpush1.msra.mxu0 0.0
    %432 = vmatprep.subr.mxu0 0.0
    %433 = vmatpush1.msra.mxu0 0.0
    %434 = vmatprep.subr.mxu0 0.0
    %435 = vmatpush1.msra.mxu0 0.0
    %436 = vmatprep.subr.mxu0 0.0
    %437 = vmatpush1.msra.mxu0 0.0
    %438 = vmatprep.subr.mxu0 0.0
    %439 = vmatpush1.msra.mxu0 0.0
    %440 = vmatprep.subr.mxu0 0.0
    %441 = vmatpush1.msra.mxu0 0.0
    %442 = vmatprep.subr.mxu0 0.0
    %443 = vmatpush1.msra.mxu0 0.0
    %444 = vmatprep.subr.mxu0 0.0
    %445 = vmatpush1.msra.mxu0 0.0
    %446 = vmatprep.subr.mxu0 0.0
    %447 = vmatpush1.msra.mxu0 0.0
    %448 = vmatprep.subr.mxu0 0.0
    %449 = vmatpush1.msra.mxu0 0.0
    %450 = vmatprep.subr.mxu0 0.0
    %451 = vmatpush1.msra.mxu0 0.0
    %452 = vmatprep.subr.mxu0 0.0
    %453 = vmatpush1.msra.mxu0 0.0
    %454 = vmatprep.subr.mxu0 0.0
    %455 = vmatpush1.msra.mxu0 0.0
    %456 = vmatprep.subr.mxu0 0.0
    %457 = vmatpush1.msra.mxu0 %v421
    %458 = vmatprep.subr.mxu0 0.0
    %459 = vmatpush2.msra.mxu0 0.0
    %460 = vmatprep.subr.mxu0 0.0
    %461 = vmatpush2.msra.mxu0 0.0
    %462 = vmatprep.subr.mxu0 0.0
    %463 = vmatpush2.msra.mxu0 0.0
    %464 = vmatprep.subr.mxu0 0.0
    %465 = vmatpush2.msra.mxu0 0.0
    %466 = vmatprep.subr.mxu0 0.0
    %467 = vmatpush2.msra.mxu0 0.0
    %468 = vmatprep.subr.mxu0 0.0
    %469 = vmatpush2.msra.mxu0 0.0
    %470 = vmatprep.subr.mxu0 0.0
    %471 = vmatpush2.msra.mxu0 0.0
    %472 = vmatprep.subr.mxu0 0.0
    %473 = vmatpush2.msra.mxu0 0.0
    %474 = vmatprep.subr.mxu0 0.0
    %475 = vmatpush2.msra.mxu0 0.0
    %476 = vmatprep.subr.mxu0 0.0
    %477 = vmatpush2.msra.mxu0 0.0
    %478 = vmatprep.subr.mxu0 0.0
    %479 = vmatpush2.msra.mxu0 0.0
    %480 = vmatprep.subr.mxu0 0.0
    %481 = vmatpush2.msra.mxu0 0.0
    %482 = vmatprep.subr.mxu0 0.0
    %483 = vmatpush2.msra.mxu0 0.0
    %484 = vmatprep.subr.mxu0 0.0
    %485 = vmatpush2.msra.mxu0 0.0
    %486 = vmatprep.subr.mxu0 0.0
    %487 = vmatpush2.msra.mxu0 0.0
    %488 = vmatprep.subr.mxu0 0.0
    %489 = vmatpush2.msra.mxu0 0.0
    %490 = vmatprep.mubr.f32.mxu0 0.0
    %491 = vmatmul.mubr.f32.gmra.mxu0 %v424
    %v492 = vpop.f32.mrf.mxu0
    %v493 = vadd.f32 0.0, %v492
    %v494 = vpop.f32.mrf.mxu0
    %495 = vdwg.mxu0
    %496 = vrot.lane.b32.xlu0 %v323, 120
    %v497 = vpop.permute.xlu0 %496
    %498 = vrot.lane.b32.xlu0 %v323, 88
    %v499 = vpop.permute.xlu0 %498
    %v500 = vsel %vm334, %v497, 0
    %v502 = vsel %vm334, %v499, 0
    %504 = vmatprep.subr.mxu0 0.0
    %505 = vmatpush1.xpose.msra.mxu0 0.0
    %506 = vmatprep.subr.mxu0 0.0
    %507 = vmatpush1.xpose.msra.mxu0 0.0
    %508 = vmatprep.subr.mxu0 0.0
    %509 = vmatpush1.xpose.msra.mxu0 0.0
    %510 = vmatprep.subr.mxu0 0.0
    %511 = vmatpush1.xpose.msra.mxu0 0.0
    %512 = vmatprep.subr.mxu0 0.0
    %513 = vmatpush1.xpose.msra.mxu0 0.0
    %514 = vmatprep.subr.mxu0 0.0
    %515 = vmatpush1.xpose.msra.mxu0 0.0
    %516 = vmatprep.subr.mxu0 0.0
    %517 = vmatpush1.xpose.msra.mxu0 0.0
    %518 = vmatprep.subr.mxu0 0.0
    %519 = vmatpush1.xpose.msra.mxu0 0.0
    %520 = vmatprep.subr.mxu0 0.0
    %521 = vmatpush1.xpose.msra.mxu0 0.0
    %522 = vmatprep.subr.mxu0 0.0
    %523 = vmatpush1.xpose.msra.mxu0 0.0
    %524 = vmatprep.subr.mxu0 0.0
    %525 = vmatpush1.xpose.msra.mxu0 0.0
    %526 = vmatprep.subr.mxu0 0.0
    %527 = vmatpush1.xpose.msra.mxu0 0.0
    %528 = vmatprep.subr.mxu0 0.0
    %529 = vmatpush1.xpose.msra.mxu0 0.0
    %530 = vmatprep.subr.mxu0 0.0
    %531 = vmatpush1.xpose.msra.mxu0 0.0
    %532 = vmatprep.subr.mxu0 0.0
    %533 = vmatpush1.xpose.msra.mxu0 0.0
    %534 = vmatprep.subr.mxu0 0.0
    %535 = vmatpush1.xpose.msra.mxu0 %v502
    %536 = vmatprep.subr.mxu0 0.0
    %537 = vmatpush2.xpose.msra.mxu0 0.0
    %538 = vmatprep.subr.mxu0 0.0
    %539 = vmatpush2.xpose.msra.mxu0 0.0
    %540 = vmatprep.subr.mxu0 0.0
    %541 = vmatpush2.xpose.msra.mxu0 0.0
    %542 = vmatprep.subr.mxu0 0.0
    %543 = vmatpush2.xpose.msra.mxu0 0.0
    %544 = vmatprep.subr.mxu0 0.0
    %545 = vmatpush2.xpose.msra.mxu0 0.0
    %546 = vmatprep.subr.mxu0 0.0
    %547 = vmatpush2.xpose.msra.mxu0 0.0
    %548 = vmatprep.subr.mxu0 0.0
    %549 = vmatpush2.xpose.msra.mxu0 0.0
    %550 = vmatprep.subr.mxu0 0.0
    %551 = vmatpush2.xpose.msra.mxu0 0.0
    %552 = vmatprep.subr.mxu0 0.0
    %553 = vmatpush2.xpose.msra.mxu0 0.0
    %554 = vmatprep.subr.mxu0 0.0
    %555 = vmatpush2.xpose.msra.mxu0 0.0
    %556 = vmatprep.subr.mxu0 0.0
    %557 = vmatpush2.xpose.msra.mxu0 0.0
    %558 = vmatprep.subr.mxu0 0.0
    %559 = vmatpush2.xpose.msra.mxu0 0.0
    %560 = vmatprep.subr.mxu0 0.0
    %561 = vmatpush2.xpose.msra.mxu0 0.0
    %562 = vmatprep.subr.mxu0 0.0
    %563 = vmatpush2.xpose.msra.mxu0 0.0
    %564 = vmatprep.subr.mxu0 0.0
    %565 = vmatpush2.xpose.msra.mxu0 0.0
    %566 = vmatprep.subr.mxu0 0.0
    %567 = vmatpush2.xpose.msra.mxu0 0.0
    %568 = vmatprep.mubr.f32.mxu0 0.0
    %569 = vmatmul.mubr.f32.gmra.mxu0 %v500
    %v570 = vpop.f32.mrf.mxu0
    %v571 = vadd.f32 0.0, %v570
    %v572 = vpop.f32.mrf.mxu0
    %573 = vdwg.mxu0
    %v574 = vsel %vm334, %v571, -inf
    %575 = vmax.xlane.f32.xlu0 %v574
    %v576 = vpop.xlane.xlu0 %575
    %v577 = vsub.f32 %v571, %v576
    %v578 = vmul.f32 %v577, 1.442695
    %v579 = vpow.pop %v578
    %v580 = vsel %vm334, %v579, 0.0
    %581 = vadd.xlane.f32.xlu0 %v580
    %v582 = vpop.xlane.xlu0 %581
    %v583 = vrcp.pop %v582
    %v584 = vmul.f32 %v579, %v583
    %585 = vrot.lane.b32.xlu0 %v323, 56
    %v586 = vpop.permute.xlu0 %585
    %v589 = vsel %vm334, %v584, 0
    %591 = vmatprep.subr.mxu0 0.0
    %592 = vmatpush1.msra.mxu0 0.0
    %593 = vmatprep.subr.mxu0 0.0
    %594 = vmatpush1.msra.mxu0 0.0
    %595 = vmatprep.subr.mxu0 0.0
    %596 = vmatpush1.msra.mxu0 0.0
    %597 = vmatprep.subr.mxu0 0.0
    %598 = vmatpush1.msra.mxu0 0.0
    %599 = vmatprep.subr.mxu0 0.0
    %600 = vmatpush1.msra.mxu0 0.0
    %601 = vmatprep.subr.mxu0 0.0
    %602 = vmatpush1.msra.mxu0 0.0
    %603 = vmatprep.subr.mxu0 0.0
    %604 = vmatpush1.msra.mxu0 0.0
    %605 = vmatprep.subr.mxu0 0.0
    %606 = vmatpush1.msra.mxu0 0.0
    %607 = vmatprep.subr.mxu0 0.0
    %608 = vmatpush1.msra.mxu0 0.0
    %609 = vmatprep.subr.mxu0 0.0
    %610 = vmatpush1.msra.mxu0 0.0
    %611 = vmatprep.subr.mxu0 0.0
    %612 = vmatpush1.msra.mxu0 0.0
    %613 = vmatprep.subr.mxu0 0.0
    %614 = vmatpush1.msra.mxu0 0.0
    %615 = vmatprep.subr.mxu0 0.0
    %616 = vmatpush1.msra.mxu0 0.0
    %617 = vmatprep.subr.mxu0 0.0
    %618 = vmatpush1.msra.mxu0 0.0
    %619 = vmatprep.subr.mxu0 0.0
    %620 = vmatpush1.msra.mxu0 0.0
    %621 = vmatprep.subr.mxu0 0.0
    %622 = vmatpush1.msra.mxu0 %v586
    %623 = vmatprep.subr.mxu0 0.0
    %624 = vmatpush2.msra.mxu0 0.0
    %625 = vmatprep.subr.mxu0 0.0
    %626 = vmatpush2.msra.mxu0 0.0
    %627 = vmatprep.subr.mxu0 0.0
    %628 = vmatpush2.msra.mxu0 0.0
    %629 = vmatprep.subr.mxu0 0.0
    %630 = vmatpush2.msra.mxu0 0.0
    %631 = vmatprep.subr.mxu0 0.0
    %632 = vmatpush2.msra.mxu0 0.0
    %633 = vmatprep.subr.mxu0 0.0
    %634 = vmatpush2.msra.mxu0 0.0
    %635 = vmatprep.subr.mxu0 0.0
    %636 = vmatpush2.msra.mxu0 0.0
    %637 = vmatprep.subr.mxu0 0.0
    %638 = vmatpush2.msra.mxu0 0.0
    %639 = vmatprep.subr.mxu0 0.0
    %640 = vmatpush2.msra.mxu0 0.0
    %641 = vmatprep.subr.mxu0 0.0
    %642 = vmatpush2.msra.mxu0 0.0
    %643 = vmatprep.subr.mxu0 0.0
    %644 = vmatpush2.msra.mxu0 0.0
    %645 = vmatprep.subr.mxu0 0.0
    %646 = vmatpush2.msra.mxu0 0.0
    %647 = vmatprep.subr.mxu0 0.0
    %648 = vmatpush2.msra.mxu0 0.0
    %649 = vmatprep.subr.mxu0 0.0
    %650 = vmatpush2.msra.mxu0 0.0
    %651 = vmatprep.subr.mxu0 0.0
    %652 = vmatpush2.msra.mxu0 0.0
    %653 = vmatprep.subr.mxu0 0.0
    %654 = vmatpush2.msra.mxu0 0.0
    %655 = vmatprep.mubr.f32.mxu0 0.0
    %656 = vmatmul.mubr.f32.gmra.mxu0 %v589
    %v657 = vpop.f32.mrf.mxu0
    %v658 = vadd.f32 0.0, %v657
    %v659 = vpop.f32.mrf.mxu0
    %660 = vdwg.mxu0
    %661 = vrot.lane.b32.xlu0 %v323, 112
    %v662 = vpop.permute.xlu0 %661
    %663 = vrot.lane.b32.xlu0 %v323, 80
    %v664 = vpop.permute.xlu0 %663
    %v665 = vsel %vm334, %v662, 0
    %v667 = vsel %vm334, %v664, 0
    %669 = vmatprep.subr.mxu0 0.0
    %670 = vmatpush1.xpose.msra.mxu0 0.0
    %671 = vmatprep.subr.mxu0 0.0
    %672 = vmatpush1.xpose.msra.mxu0 0.0
    %673 = vmatprep.subr.mxu0 0.0
    %674 = vmatpush1.xpose.msra.mxu0 0.0
    %675 = vmatprep.subr.mxu0 0.0
    %676 = vmatpush1.xpose.msra.mxu0 0.0
    %677 = vmatprep.subr.mxu0 0.0
    %678 = vmatpush1.xpose.msra.mxu0 0.0
    %679 = vmatprep.subr.mxu0 0.0
    %680 = vmatpush1.xpose.msra.mxu0 0.0
    %681 = vmatprep.subr.mxu0 0.0
    %682 = vmatpush1.xpose.msra.mxu0 0.0
    %683 = vmatprep.subr.mxu0 0.0
    %684 = vmatpush1.xpose.msra.mxu0 0.0
    %685 = vmatprep.subr.mxu0 0.0
    %686 = vmatpush1.xpose.msra.mxu0 0.0
    %687 = vmatprep.subr.mxu0 0.0
    %688 = vmatpush1.xpose.msra.mxu0 0.0
    %689 = vmatprep.subr.mxu0 0.0
    %690 = vmatpush1.xpose.msra.mxu0 0.0
    %691 = vmatprep.subr.mxu0 0.0
    %692 = vmatpush1.xpose.msra.mxu0 0.0
    %693 = vmatprep.subr.mxu0 0.0
    %694 = vmatpush1.xpose.msra.mxu0 0.0
    %695 = vmatprep.subr.mxu0 0.0
    %696 = vmatpush1.xpose.msra.mxu0 0.0
    %697 = vmatprep.subr.mxu0 0.0
    %698 = vmatpush1.xpose.msra.mxu0 0.0
    %699 = vmatprep.subr.mxu0 0.0
    %700 = vmatpush1.xpose.msra.mxu0 %v667
    %701 = vmatprep.subr.mxu0 0.0
    %702 = vmatpush2.xpose.msra.mxu0 0.0
    %703 = vmatprep.subr.mxu0 0.0
    %704 = vmatpush2.xpose.msra.mxu0 0.0
    %705 = vmatprep.subr.mxu0 0.0
    %706 = vmatpush2.xpose.msra.mxu0 0.0
    %707 = vmatprep.subr.mxu0 0.0
    %708 = vmatpush2.xpose.msra.mxu0 0.0
    %709 = vmatprep.subr.mxu0 0.0
    %710 = vmatpush2.xpose.msra.mxu0 0.0
    %711 = vmatprep.subr.mxu0 0.0
    %712 = vmatpush2.xpose.msra.mxu0 0.0
    %713 = vmatprep.subr.mxu0 0.0
    %714 = vmatpush2.xpose.msra.mxu0 0.0
    %715 = vmatprep.subr.mxu0 0.0
    %716 = vmatpush2.xpose.msra.mxu0 0.0
    %717 = vmatprep.subr.mxu0 0.0
    %718 = vmatpush2.xpose.msra.mxu0 0.0
    %719 = vmatprep.subr.mxu0 0.0
    %720 = vmatpush2.xpose.msra.mxu0 0.0
    %721 = vmatprep.subr.mxu0 0.0
    %722 = vmatpush2.xpose.msra.mxu0 0.0
    %723 = vmatprep.subr.mxu0 0.0
    %724 = vmatpush2.xpose.msra.mxu0 0.0
    %725 = vmatprep.subr.mxu0 0.0
    %726 = vmatpush2.xpose.msra.mxu0 0.0
    %727 = vmatprep.subr.mxu0 0.0
    %728 = vmatpush2.xpose.msra.mxu0 0.0
    %729 = vmatprep.subr.mxu0 0.0
    %730 = vmatpush2.xpose.msra.mxu0 0.0
    %731 = vmatprep.subr.mxu0 0.0
    %732 = vmatpush2.xpose.msra.mxu0 0.0
    %733 = vmatprep.mubr.f32.mxu0 0.0
    %734 = vmatmul.mubr.f32.gmra.mxu0 %v665
    %v735 = vpop.f32.mrf.mxu0
    %v736 = vadd.f32 0.0, %v735
    %v737 = vpop.f32.mrf.mxu0
    %738 = vdwg.mxu0
    %v739 = vsel %vm334, %v736, -inf
    %740 = vmax.xlane.f32.xlu0 %v739
    %v741 = vpop.xlane.xlu0 %740
    %v742 = vsub.f32 %v736, %v741
    %v743 = vmul.f32 %v742, 1.442695
    %v744 = vpow.pop %v743
    %v745 = vsel %vm334, %v744, 0.0
    %746 = vadd.xlane.f32.xlu0 %v745
    %v747 = vpop.xlane.xlu0 %746
    %v748 = vrcp.pop %v747
    %v749 = vmul.f32 %v744, %v748
    %750 = vrot.lane.b32.xlu0 %v323, 48
    %v751 = vpop.permute.xlu0 %750
    %v754 = vsel %vm334, %v749, 0
    %756 = vmatprep.subr.mxu0 0.0
    %757 = vmatpush1.msra.mxu0 0.0
    %758 = vmatprep.subr.mxu0 0.0
    %759 = vmatpush1.msra.mxu0 0.0
    %760 = vmatprep.subr.mxu0 0.0
    %761 = vmatpush1.msra.mxu0 0.0
    %762 = vmatprep.subr.mxu0 0.0
    %763 = vmatpush1.msra.mxu0 0.0
    %764 = vmatprep.subr.mxu0 0.0
    %765 = vmatpush1.msra.mxu0 0.0
    %766 = vmatprep.subr.mxu0 0.0
    %767 = vmatpush1.msra.mxu0 0.0
    %768 = vmatprep.subr.mxu0 0.0
    %769 = vmatpush1.msra.mxu0 0.0
    %770 = vmatprep.subr.mxu0 0.0
    %771 = vmatpush1.msra.mxu0 0.0
    %772 = vmatprep.subr.mxu0 0.0
    %773 = vmatpush1.msra.mxu0 0.0
    %774 = vmatprep.subr.mxu0 0.0
    %775 = vmatpush1.msra.mxu0 0.0
    %776 = vmatprep.subr.mxu0 0.0
    %777 = vmatpush1.msra.mxu0 0.0
    %778 = vmatprep.subr.mxu0 0.0
    %779 = vmatpush1.msra.mxu0 0.0
    %780 = vmatprep.subr.mxu0 0.0
    %781 = vmatpush1.msra.mxu0 0.0
    %782 = vmatprep.subr.mxu0 0.0
    %783 = vmatpush1.msra.mxu0 0.0
    %784 = vmatprep.subr.mxu0 0.0
    %785 = vmatpush1.msra.mxu0 0.0
    %786 = vmatprep.subr.mxu0 0.0
    %787 = vmatpush1.msra.mxu0 %v751
    %788 = vmatprep.subr.mxu0 0.0
    %789 = vmatpush2.msra.mxu0 0.0
    %790 = vmatprep.subr.mxu0 0.0
    %791 = vmatpush2.msra.mxu0 0.0
    %792 = vmatprep.subr.mxu0 0.0
    %793 = vmatpush2.msra.mxu0 0.0
    %794 = vmatprep.subr.mxu0 0.0
    %795 = vmatpush2.msra.mxu0 0.0
    %796 = vmatprep.subr.mxu0 0.0
    %797 = vmatpush2.msra.mxu0 0.0
    %798 = vmatprep.subr.mxu0 0.0
    %799 = vmatpush2.msra.mxu0 0.0
    %800 = vmatprep.subr.mxu0 0.0
    %801 = vmatpush2.msra.mxu0 0.0
    %802 = vmatprep.subr.mxu0 0.0
    %803 = vmatpush2.msra.mxu0 0.0
    %804 = vmatprep.subr.mxu0 0.0
    %805 = vmatpush2.msra.mxu0 0.0
    %806 = vmatprep.subr.mxu0 0.0
    %807 = vmatpush2.msra.mxu0 0.0
    %808 = vmatprep.subr.mxu0 0.0
    %809 = vmatpush2.msra.mxu0 0.0
    %810 = vmatprep.subr.mxu0 0.0
    %811 = vmatpush2.msra.mxu0 0.0
    %812 = vmatprep.subr.mxu0 0.0
    %813 = vmatpush2.msra.mxu0 0.0
    %814 = vmatprep.subr.mxu0 0.0
    %815 = vmatpush2.msra.mxu0 0.0
    %816 = vmatprep.subr.mxu0 0.0
    %817 = vmatpush2.msra.mxu0 0.0
    %818 = vmatprep.subr.mxu0 0.0
    %819 = vmatpush2.msra.mxu0 0.0
    %820 = vmatprep.mubr.f32.mxu0 0.0
    %821 = vmatmul.mubr.f32.gmra.mxu0 %v754
    %v822 = vpop.f32.mrf.mxu0
    %v823 = vadd.f32 0.0, %v822
    %v824 = vpop.f32.mrf.mxu0
    %825 = vdwg.mxu0
    %826 = vrot.lane.b32.xlu0 %v323, 104
    %v827 = vpop.permute.xlu0 %826
    %828 = vrot.lane.b32.xlu0 %v323, 72
    %v829 = vpop.permute.xlu0 %828
    %v830 = vsel %vm334, %v827, 0
    %v832 = vsel %vm334, %v829, 0
    %834 = vmatprep.subr.mxu0 0.0
    %835 = vmatpush1.xpose.msra.mxu0 0.0
    %836 = vmatprep.subr.mxu0 0.0
    %837 = vmatpush1.xpose.msra.mxu0 0.0
    %838 = vmatprep.subr.mxu0 0.0
    %839 = vmatpush1.xpose.msra.mxu0 0.0
    %840 = vmatprep.subr.mxu0 0.0
    %841 = vmatpush1.xpose.msra.mxu0 0.0
    %842 = vmatprep.subr.mxu0 0.0
    %843 = vmatpush1.xpose.msra.mxu0 0.0
    %844 = vmatprep.subr.mxu0 0.0
    %845 = vmatpush1.xpose.msra.mxu0 0.0
    %846 = vmatprep.subr.mxu0 0.0
    %847 = vmatpush1.xpose.msra.mxu0 0.0
    %848 = vmatprep.subr.mxu0 0.0
    %849 = vmatpush1.xpose.msra.mxu0 0.0
    %850 = vmatprep.subr.mxu0 0.0
    %851 = vmatpush1.xpose.msra.mxu0 0.0
    %852 = vmatprep.subr.mxu0 0.0
    %853 = vmatpush1.xpose.msra.mxu0 0.0
    %854 = vmatprep.subr.mxu0 0.0
    %855 = vmatpush1.xpose.msra.mxu0 0.0
    %856 = vmatprep.subr.mxu0 0.0
    %857 = vmatpush1.xpose.msra.mxu0 0.0
    %858 = vmatprep.subr.mxu0 0.0
    %859 = vmatpush1.xpose.msra.mxu0 0.0
    %860 = vmatprep.subr.mxu0 0.0
    %861 = vmatpush1.xpose.msra.mxu0 0.0
    %862 = vmatprep.subr.mxu0 0.0
    %863 = vmatpush1.xpose.msra.mxu0 0.0
    %864 = vmatprep.subr.mxu0 0.0
    %865 = vmatpush1.xpose.msra.mxu0 %v832
    %866 = vmatprep.subr.mxu0 0.0
    %867 = vmatpush2.xpose.msra.mxu0 0.0
    %868 = vmatprep.subr.mxu0 0.0
    %869 = vmatpush2.xpose.msra.mxu0 0.0
    %870 = vmatprep.subr.mxu0 0.0
    %871 = vmatpush2.xpose.msra.mxu0 0.0
    %872 = vmatprep.subr.mxu0 0.0
    %873 = vmatpush2.xpose.msra.mxu0 0.0
    %874 = vmatprep.subr.mxu0 0.0
    %875 = vmatpush2.xpose.msra.mxu0 0.0
    %876 = vmatprep.subr.mxu0 0.0
    %877 = vmatpush2.xpose.msra.mxu0 0.0
    %878 = vmatprep.subr.mxu0 0.0
    %879 = vmatpush2.xpose.msra.mxu0 0.0
    %880 = vmatprep.subr.mxu0 0.0
    %881 = vmatpush2.xpose.msra.mxu0 0.0
    %882 = vmatprep.subr.mxu0 0.0
    %883 = vmatpush2.xpose.msra.mxu0 0.0
    %884 = vmatprep.subr.mxu0 0.0
    %885 = vmatpush2.xpose.msra.mxu0 0.0
    %886 = vmatprep.subr.mxu0 0.0
    %887 = vmatpush2.xpose.msra.mxu0 0.0
    %888 = vmatprep.subr.mxu0 0.0
    %889 = vmatpush2.xpose.msra.mxu0 0.0
    %890 = vmatprep.subr.mxu0 0.0
    %891 = vmatpush2.xpose.msra.mxu0 0.0
    %892 = vmatprep.subr.mxu0 0.0
    %893 = vmatpush2.xpose.msra.mxu0 0.0
    %894 = vmatprep.subr.mxu0 0.0
    %895 = vmatpush2.xpose.msra.mxu0 0.0
    %896 = vmatprep.subr.mxu0 0.0
    %897 = vmatpush2.xpose.msra.mxu0 0.0
    %898 = vmatprep.mubr.f32.mxu0 0.0
    %899 = vmatmul.mubr.f32.gmra.mxu0 %v830
    %v900 = vpop.f32.mrf.mxu0
    %v901 = vadd.f32 0.0, %v900
    %v902 = vpop.f32.mrf.mxu0
    %903 = vdwg.mxu0
    %v904 = vsel %vm334, %v901, -inf
    %905 = vmax.xlane.f32.xlu0 %v904
    %v906 = vpop.xlane.xlu0 %905
    %v907 = vsub.f32 %v901, %v906
    %v908 = vmul.f32 %v907, 1.442695
    %v909 = vpow.pop %v908
    %v910 = vsel %vm334, %v909, 0.0
    %911 = vadd.xlane.f32.xlu0 %v910
    %v912 = vpop.xlane.xlu0 %911
    %v913 = vrcp.pop %v912
    %v914 = vmul.f32 %v909, %v913
    %915 = vrot.lane.b32.xlu0 %v323, 40
    %v916 = vpop.permute.xlu0 %915
    %v919 = vsel %vm334, %v914, 0
    %921 = vmatprep.subr.mxu0 0.0
    %922 = vmatpush1.msra.mxu0 0.0
    %923 = vmatprep.subr.mxu0 0.0
    %924 = vmatpush1.msra.mxu0 0.0
    %925 = vmatprep.subr.mxu0 0.0
    %926 = vmatpush1.msra.mxu0 0.0
    %927 = vmatprep.subr.mxu0 0.0
    %928 = vmatpush1.msra.mxu0 0.0
    %929 = vmatprep.subr.mxu0 0.0
    %930 = vmatpush1.msra.mxu0 0.0
    %931 = vmatprep.subr.mxu0 0.0
    %932 = vmatpush1.msra.mxu0 0.0
    %933 = vmatprep.subr.mxu0 0.0
    %934 = vmatpush1.msra.mxu0 0.0
    %935 = vmatprep.subr.mxu0 0.0
    %936 = vmatpush1.msra.mxu0 0.0
    %937 = vmatprep.subr.mxu0 0.0
    %938 = vmatpush1.msra.mxu0 0.0
    %939 = vmatprep.subr.mxu0 0.0
    %940 = vmatpush1.msra.mxu0 0.0
    %941 = vmatprep.subr.mxu0 0.0
    %942 = vmatpush1.msra.mxu0 0.0
    %943 = vmatprep.subr.mxu0 0.0
    %944 = vmatpush1.msra.mxu0 0.0
    %945 = vmatprep.subr.mxu0 0.0
    %946 = vmatpush1.msra.mxu0 0.0
    %947 = vmatprep.subr.mxu0 0.0
    %948 = vmatpush1.msra.mxu0 0.0
    %949 = vmatprep.subr.mxu0 0.0
    %950 = vmatpush1.msra.mxu0 0.0
    %951 = vmatprep.subr.mxu0 0.0
    %952 = vmatpush1.msra.mxu0 %v916
    %953 = vmatprep.subr.mxu0 0.0
    %954 = vmatpush2.msra.mxu0 0.0
    %955 = vmatprep.subr.mxu0 0.0
    %956 = vmatpush2.msra.mxu0 0.0
    %957 = vmatprep.subr.mxu0 0.0
    %958 = vmatpush2.msra.mxu0 0.0
    %959 = vmatprep.subr.mxu0 0.0
    %960 = vmatpush2.msra.mxu0 0.0
    %961 = vmatprep.subr.mxu0 0.0
    %962 = vmatpush2.msra.mxu0 0.0
    %963 = vmatprep.subr.mxu0 0.0
    %964 = vmatpush2.msra.mxu0 0.0
    %965 = vmatprep.subr.mxu0 0.0
    %966 = vmatpush2.msra.mxu0 0.0
    %967 = vmatprep.subr.mxu0 0.0
    %968 = vmatpush2.msra.mxu0 0.0
    %969 = vmatprep.subr.mxu0 0.0
    %970 = vmatpush2.msra.mxu0 0.0
    %971 = vmatprep.subr.mxu0 0.0
    %972 = vmatpush2.msra.mxu0 0.0
    %973 = vmatprep.subr.mxu0 0.0
    %974 = vmatpush2.msra.mxu0 0.0
    %975 = vmatprep.subr.mxu0 0.0
    %976 = vmatpush2.msra.mxu0 0.0
    %977 = vmatprep.subr.mxu0 0.0
    %978 = vmatpush2.msra.mxu0 0.0
    %979 = vmatprep.subr.mxu0 0.0
    %980 = vmatpush2.msra.mxu0 0.0
    %981 = vmatprep.subr.mxu0 0.0
    %982 = vmatpush2.msra.mxu0 0.0
    %983 = vmatprep.subr.mxu0 0.0
    %984 = vmatpush2.msra.mxu0 0.0
    %985 = vmatprep.mubr.f32.mxu0 0.0
    %986 = vmatmul.mubr.f32.gmra.mxu0 %v919
    %v987 = vpop.f32.mrf.mxu0
    %v988 = vadd.f32 0.0, %v987
    %v989 = vpop.f32.mrf.mxu0
    %990 = vdwg.mxu0
    %992 = vrot.lane.b32.xlu0 %v658, 8
    %v993 = vpop.permute.xlu0 %992
    %996 = vrot.lane.b32.xlu0 %v823, 16
    %v997 = vpop.permute.xlu0 %996
    %1000 = vrot.lane.b32.xlu0 %v988, 24
    %v1001 = vpop.permute.xlu0 %1000
    %v1003 = vsel %vm334, %v493, %v993
    %vm1004 = vcmask 130048
    %v1005 = vsel %vm1004, %v1003, %v997
    %vm1006 = vcmask 195584
    %v1007 = vsel %vm1006, %v1005, %v1001
    %1009 = vrot.lane.b32.xlu0 %v328, 96
    %v1010 = vpop.permute.xlu0 %1009
    %v1011 = vsel %vm334, %v328, 0
    %v1013 = vsel %vm334, %v1010, 0
    %1015 = vmatprep.subr.mxu0 0.0
    %1016 = vmatpush1.xpose.msra.mxu0 0.0
    %1017 = vmatprep.subr.mxu0 0.0
    %1018 = vmatpush1.xpose.msra.mxu0 0.0
    %1019 = vmatprep.subr.mxu0 0.0
    %1020 = vmatpush1.xpose.msra.mxu0 0.0
    %1021 = vmatprep.subr.mxu0 0.0
    %1022 = vmatpush1.xpose.msra.mxu0 0.0
    %1023 = vmatprep.subr.mxu0 0.0
    %1024 = vmatpush1.xpose.msra.mxu0 0.0
    %1025 = vmatprep.subr.mxu0 0.0
    %1026 = vmatpush1.xpose.msra.mxu0 0.0
    %1027 = vmatprep.subr.mxu0 0.0
    %1028 = vmatpush1.xpose.msra.mxu0 0.0
    %1029 = vmatprep.subr.mxu0 0.0
    %1030 = vmatpush1.xpose.msra.mxu0 0.0
    %1031 = vmatprep.subr.mxu0 0.0
    %1032 = vmatpush1.xpose.msra.mxu0 0.0
    %1033 = vmatprep.subr.mxu0 0.0
    %1034 = vmatpush1.xpose.msra.mxu0 0.0
    %1035 = vmatprep.subr.mxu0 0.0
    %1036 = vmatpush1.xpose.msra.mxu0 0.0
    %1037 = vmatprep.subr.mxu0 0.0
    %1038 = vmatpush1.xpose.msra.mxu0 0.0
    %1039 = vmatprep.subr.mxu0 0.0
    %1040 = vmatpush1.xpose.msra.mxu0 0.0
    %1041 = vmatprep.subr.mxu0 0.0
    %1042 = vmatpush1.xpose.msra.mxu0 0.0
    %1043 = vmatprep.subr.mxu0 0.0
    %1044 = vmatpush1.xpose.msra.mxu0 0.0
    %1045 = vmatprep.subr.mxu0 0.0
    %1046 = vmatpush1.xpose.msra.mxu0 %v1013
    %1047 = vmatprep.subr.mxu0 0.0
    %1048 = vmatpush2.xpose.msra.mxu0 0.0
    %1049 = vmatprep.subr.mxu0 0.0
    %1050 = vmatpush2.xpose.msra.mxu0 0.0
    %1051 = vmatprep.subr.mxu0 0.0
    %1052 = vmatpush2.xpose.msra.mxu0 0.0
    %1053 = vmatprep.subr.mxu0 0.0
    %1054 = vmatpush2.xpose.msra.mxu0 0.0
    %1055 = vmatprep.subr.mxu0 0.0
    %1056 = vmatpush2.xpose.msra.mxu0 0.0
    %1057 = vmatprep.subr.mxu0 0.0
    %1058 = vmatpush2.xpose.msra.mxu0 0.0
    %1059 = vmatprep.subr.mxu0 0.0
    %1060 = vmatpush2.xpose.msra.mxu0 0.0
    %1061 = vmatprep.subr.mxu0 0.0
    %1062 = vmatpush2.xpose.msra.mxu0 0.0
    %1063 = vmatprep.subr.mxu0 0.0
    %1064 = vmatpush2.xpose.msra.mxu0 0.0
    %1065 = vmatprep.subr.mxu0 0.0
    %1066 = vmatpush2.xpose.msra.mxu0 0.0
    %1067 = vmatprep.subr.mxu0 0.0
    %1068 = vmatpush2.xpose.msra.mxu0 0.0
    %1069 = vmatprep.subr.mxu0 0.0
    %1070 = vmatpush2.xpose.msra.mxu0 0.0
    %1071 = vmatprep.subr.mxu0 0.0
    %1072 = vmatpush2.xpose.msra.mxu0 0.0
    %1073 = vmatprep.subr.mxu0 0.0
    %1074 = vmatpush2.xpose.msra.mxu0 0.0
    %1075 = vmatprep.subr.mxu0 0.0
    %1076 = vmatpush2.xpose.msra.mxu0 0.0
    %1077 = vmatprep.subr.mxu0 0.0
    %1078 = vmatpush2.xpose.msra.mxu0 0.0
    %1079 = vmatprep.mubr.f32.mxu0 0.0
    %1080 = vmatmul.mubr.f32.gmra.mxu0 %v1011
    %v1081 = vpop.f32.mrf.mxu0
    %v1082 = vadd.f32 0.0, %v1081
    %v1083 = vpop.f32.mrf.mxu0
    %1084 = vdwg.mxu0
    %v1085 = vsel %vm334, %v1082, -inf
    %1086 = vmax.xlane.f32.xlu0 %v1085
    %v1087 = vpop.xlane.xlu0 %1086
    %v1088 = vsub.f32 %v1082, %v1087
    %v1089 = vmul.f32 %v1088, 1.442695
    %v1090 = vpow.pop %v1089
    %v1091 = vsel %vm334, %v1090, 0.0
    %1092 = vadd.xlane.f32.xlu0 %v1091
    %v1093 = vpop.xlane.xlu0 %1092
    %v1094 = vrcp.pop %v1093
    %v1095 = vmul.f32 %v1090, %v1094
    %1096 = vrot.lane.b32.xlu0 %v328, 64
    %v1097 = vpop.permute.xlu0 %1096
    %v1100 = vsel %vm334, %v1095, 0
    %1102 = vmatprep.subr.mxu0 0.0
    %1103 = vmatpush1.msra.mxu0 0.0
    %1104 = vmatprep.subr.mxu0 0.0
    %1105 = vmatpush1.msra.mxu0 0.0
    %1106 = vmatprep.subr.mxu0 0.0
    %1107 = vmatpush1.msra.mxu0 0.0
    %1108 = vmatprep.subr.mxu0 0.0
    %1109 = vmatpush1.msra.mxu0 0.0
    %1110 = vmatprep.subr.mxu0 0.0
    %1111 = vmatpush1.msra.mxu0 0.0
    %1112 = vmatprep.subr.mxu0 0.0
    %1113 = vmatpush1.msra.mxu0 0.0
    %1114 = vmatprep.subr.mxu0 0.0
    %1115 = vmatpush1.msra.mxu0 0.0
    %1116 = vmatprep.subr.mxu0 0.0
    %1117 = vmatpush1.msra.mxu0 0.0
    %1118 = vmatprep.subr.mxu0 0.0
    %1119 = vmatpush1.msra.mxu0 0.0
    %1120 = vmatprep.subr.mxu0 0.0
    %1121 = vmatpush1.msra.mxu0 0.0
    %1122 = vmatprep.subr.mxu0 0.0
    %1123 = vmatpush1.msra.mxu0 0.0
    %1124 = vmatprep.subr.mxu0 0.0
    %1125 = vmatpush1.msra.mxu0 0.0
    %1126 = vmatprep.subr.mxu0 0.0
    %1127 = vmatpush1.msra.mxu0 0.0
    %1128 = vmatprep.subr.mxu0 0.0
    %1129 = vmatpush1.msra.mxu0 0.0
    %1130 = vmatprep.subr.mxu0 0.0
    %1131 = vmatpush1.msra.mxu0 0.0
    %1132 = vmatprep.subr.mxu0 0.0
    %1133 = vmatpush1.msra.mxu0 %v1097
    %1134 = vmatprep.subr.mxu0 0.0
    %1135 = vmatpush2.msra.mxu0 0.0
    %1136 = vmatprep.subr.mxu0 0.0
    %1137 = vmatpush2.msra.mxu0 0.0
    %1138 = vmatprep.subr.mxu0 0.0
    %1139 = vmatpush2.msra.mxu0 0.0
    %1140 = vmatprep.subr.mxu0 0.0
    %1141 = vmatpush2.msra.mxu0 0.0
    %1142 = vmatprep.subr.mxu0 0.0
    %1143 = vmatpush2.msra.mxu0 0.0
    %1144 = vmatprep.subr.mxu0 0.0
    %1145 = vmatpush2.msra.mxu0 0.0
    %1146 = vmatprep.subr.mxu0 0.0
    %1147 = vmatpush2.msra.mxu0 0.0
    %1148 = vmatprep.subr.mxu0 0.0
    %1149 = vmatpush2.msra.mxu0 0.0
    %1150 = vmatprep.subr.mxu0 0.0
    %1151 = vmatpush2.msra.mxu0 0.0
    %1152 = vmatprep.subr.mxu0 0.0
    %1153 = vmatpush2.msra.mxu0 0.0
    %1154 = vmatprep.subr.mxu0 0.0
    %1155 = vmatpush2.msra.mxu0 0.0
    %1156 = vmatprep.subr.mxu0 0.0
    %1157 = vmatpush2.msra.mxu0 0.0
    %1158 = vmatprep.subr.mxu0 0.0
    %1159 = vmatpush2.msra.mxu0 0.0
    %1160 = vmatprep.subr.mxu0 0.0
    %1161 = vmatpush2.msra.mxu0 0.0
    %1162 = vmatprep.subr.mxu0 0.0
    %1163 = vmatpush2.msra.mxu0 0.0
    %1164 = vmatprep.subr.mxu0 0.0
    %1165 = vmatpush2.msra.mxu0 0.0
    %1166 = vmatprep.mubr.f32.mxu0 0.0
    %1167 = vmatmul.mubr.f32.gmra.mxu0 %v1100
    %v1168 = vpop.f32.mrf.mxu0
    %v1169 = vadd.f32 0.0, %v1168
    %v1170 = vpop.f32.mrf.mxu0
    %1171 = vdwg.mxu0
    %1172 = vrot.lane.b32.xlu0 %v328, 120
    %v1173 = vpop.permute.xlu0 %1172
    %1174 = vrot.lane.b32.xlu0 %v328, 88
    %v1175 = vpop.permute.xlu0 %1174
    %v1176 = vsel %vm334, %v1173, 0
    %v1178 = vsel %vm334, %v1175, 0
    %1180 = vmatprep.subr.mxu0 0.0
    %1181 = vmatpush1.xpose.msra.mxu0 0.0
    %1182 = vmatprep.subr.mxu0 0.0
    %1183 = vmatpush1.xpose.msra.mxu0 0.0
    %1184 = vmatprep.subr.mxu0 0.0
    %1185 = vmatpush1.xpose.msra.mxu0 0.0
    %1186 = vmatprep.subr.mxu0 0.0
    %1187 = vmatpush1.xpose.msra.mxu0 0.0
    %1188 = vmatprep.subr.mxu0 0.0
    %1189 = vmatpush1.xpose.msra.mxu0 0.0
    %1190 = vmatprep.subr.mxu0 0.0
    %1191 = vmatpush1.xpose.msra.mxu0 0.0
    %1192 = vmatprep.subr.mxu0 0.0
    %1193 = vmatpush1.xpose.msra.mxu0 0.0
    %1194 = vmatprep.subr.mxu0 0.0
    %1195 = vmatpush1.xpose.msra.mxu0 0.0
    %1196 = vmatprep.subr.mxu0 0.0
    %1197 = vmatpush1.xpose.msra.mxu0 0.0
    %1198 = vmatprep.subr.mxu0 0.0
    %1199 = vmatpush1.xpose.msra.mxu0 0.0
    %1200 = vmatprep.subr.mxu0 0.0
    %1201 = vmatpush1.xpose.msra.mxu0 0.0
    %1202 = vmatprep.subr.mxu0 0.0
    %1203 = vmatpush1.xpose.msra.mxu0 0.0
    %1204 = vmatprep.subr.mxu0 0.0
    %1205 = vmatpush1.xpose.msra.mxu0 0.0
    %1206 = vmatprep.subr.mxu0 0.0
    %1207 = vmatpush1.xpose.msra.mxu0 0.0
    %1208 = vmatprep.subr.mxu0 0.0
    %1209 = vmatpush1.xpose.msra.mxu0 0.0
    %1210 = vmatprep.subr.mxu0 0.0
    %1211 = vmatpush1.xpose.msra.mxu0 %v1178
    %1212 = vmatprep.subr.mxu0 0.0
    %1213 = vmatpush2.xpose.msra.mxu0 0.0
    %1214 = vmatprep.subr.mxu0 0.0
    %1215 = vmatpush2.xpose.msra.mxu0 0.0
    %1216 = vmatprep.subr.mxu0 0.0
    %1217 = vmatpush2.xpose.msra.mxu0 0.0
    %1218 = vmatprep.subr.mxu0 0.0
    %1219 = vmatpush2.xpose.msra.mxu0 0.0
    %1220 = vmatprep.subr.mxu0 0.0
    %1221 = vmatpush2.xpose.msra.mxu0 0.0
    %1222 = vmatprep.subr.mxu0 0.0
    %1223 = vmatpush2.xpose.msra.mxu0 0.0
    %1224 = vmatprep.subr.mxu0 0.0
    %1225 = vmatpush2.xpose.msra.mxu0 0.0
    %1226 = vmatprep.subr.mxu0 0.0
    %1227 = vmatpush2.xpose.msra.mxu0 0.0
    %1228 = vmatprep.subr.mxu0 0.0
    %1229 = vmatpush2.xpose.msra.mxu0 0.0
    %1230 = vmatprep.subr.mxu0 0.0
    %1231 = vmatpush2.xpose.msra.mxu0 0.0
    %1232 = vmatprep.subr.mxu0 0.0
    %1233 = vmatpush2.xpose.msra.mxu0 0.0
    %1234 = vmatprep.subr.mxu0 0.0
    %1235 = vmatpush2.xpose.msra.mxu0 0.0
    %1236 = vmatprep.subr.mxu0 0.0
    %1237 = vmatpush2.xpose.msra.mxu0 0.0
    %1238 = vmatprep.subr.mxu0 0.0
    %1239 = vmatpush2.xpose.msra.mxu0 0.0
    %1240 = vmatprep.subr.mxu0 0.0
    %1241 = vmatpush2.xpose.msra.mxu0 0.0
    %1242 = vmatprep.subr.mxu0 0.0
    %1243 = vmatpush2.xpose.msra.mxu0 0.0
    %1244 = vmatprep.mubr.f32.mxu0 0.0
    %1245 = vmatmul.mubr.f32.gmra.mxu0 %v1176
    %v1246 = vpop.f32.mrf.mxu0
    %v1247 = vadd.f32 0.0, %v1246
    %v1248 = vpop.f32.mrf.mxu0
    %1249 = vdwg.mxu0
    %v1250 = vsel %vm334, %v1247, -inf
    %1251 = vmax.xlane.f32.xlu0 %v1250
    %v1252 = vpop.xlane.xlu0 %1251
    %v1253 = vsub.f32 %v1247, %v1252
    %v1254 = vmul.f32 %v1253, 1.442695
    %v1255 = vpow.pop %v1254
    %v1256 = vsel %vm334, %v1255, 0.0
    %1257 = vadd.xlane.f32.xlu0 %v1256
    %v1258 = vpop.xlane.xlu0 %1257
    %v1259 = vrcp.pop %v1258
    %v1260 = vmul.f32 %v1255, %v1259
    %1261 = vrot.lane.b32.xlu0 %v328, 56
    %v1262 = vpop.permute.xlu0 %1261
    %v1265 = vsel %vm334, %v1260, 0
    %1267 = vmatprep.subr.mxu0 0.0
    %1268 = vmatpush1.msra.mxu0 0.0
    %1269 = vmatprep.subr.mxu0 0.0
    %1270 = vmatpush1.msra.mxu0 0.0
    %1271 = vmatprep.subr.mxu0 0.0
    %1272 = vmatpush1.msra.mxu0 0.0
    %1273 = vmatprep.subr.mxu0 0.0
    %1274 = vmatpush1.msra.mxu0 0.0
    %1275 = vmatprep.subr.mxu0 0.0
    %1276 = vmatpush1.msra.mxu0 0.0
    %1277 = vmatprep.subr.mxu0 0.0
    %1278 = vmatpush1.msra.mxu0 0.0
    %1279 = vmatprep.subr.mxu0 0.0
    %1280 = vmatpush1.msra.mxu0 0.0
    %1281 = vmatprep.subr.mxu0 0.0
    %1282 = vmatpush1.msra.mxu0 0.0
    %1283 = vmatprep.subr.mxu0 0.0
    %1284 = vmatpush1.msra.mxu0 0.0
    %1285 = vmatprep.subr.mxu0 0.0
    %1286 = vmatpush1.msra.mxu0 0.0
    %1287 = vmatprep.subr.mxu0 0.0
    %1288 = vmatpush1.msra.mxu0 0.0
    %1289 = vmatprep.subr.mxu0 0.0
    %1290 = vmatpush1.msra.mxu0 0.0
    %1291 = vmatprep.subr.mxu0 0.0
    %1292 = vmatpush1.msra.mxu0 0.0
    %1293 = vmatprep.subr.mxu0 0.0
    %1294 = vmatpush1.msra.mxu0 0.0
    %1295 = vmatprep.subr.mxu0 0.0
    %1296 = vmatpush1.msra.mxu0 0.0
    %1297 = vmatprep.subr.mxu0 0.0
    %1298 = vmatpush1.msra.mxu0 %v1262
    %1299 = vmatprep.subr.mxu0 0.0
    %1300 = vmatpush2.msra.mxu0 0.0
    %1301 = vmatprep.subr.mxu0 0.0
    %1302 = vmatpush2.msra.mxu0 0.0
    %1303 = vmatprep.subr.mxu0 0.0
    %1304 = vmatpush2.msra.mxu0 0.0
    %1305 = vmatprep.subr.mxu0 0.0
    %1306 = vmatpush2.msra.mxu0 0.0
    %1307 = vmatprep.subr.mxu0 0.0
    %1308 = vmatpush2.msra.mxu0 0.0
    %1309 = vmatprep.subr.mxu0 0.0
    %1310 = vmatpush2.msra.mxu0 0.0
    %1311 = vmatprep.subr.mxu0 0.0
    %1312 = vmatpush2.msra.mxu0 0.0
    %1313 = vmatprep.subr.mxu0 0.0
    %1314 = vmatpush2.msra.mxu0 0.0
    %1315 = vmatprep.subr.mxu0 0.0
    %1316 = vmatpush2.msra.mxu0 0.0
    %1317 = vmatprep.subr.mxu0 0.0
    %1318 = vmatpush2.msra.mxu0 0.0
    %1319 = vmatprep.subr.mxu0 0.0
    %1320 = vmatpush2.msra.mxu0 0.0
    %1321 = vmatprep.subr.mxu0 0.0
    %1322 = vmatpush2.msra.mxu0 0.0
    %1323 = vmatprep.subr.mxu0 0.0
    %1324 = vmatpush2.msra.mxu0 0.0
    %1325 = vmatprep.subr.mxu0 0.0
    %1326 = vmatpush2.msra.mxu0 0.0
    %1327 = vmatprep.subr.mxu0 0.0
    %1328 = vmatpush2.msra.mxu0 0.0
    %1329 = vmatprep.subr.mxu0 0.0
    %1330 = vmatpush2.msra.mxu0 0.0
    %1331 = vmatprep.mubr.f32.mxu0 0.0
    %1332 = vmatmul.mubr.f32.gmra.mxu0 %v1265
    %v1333 = vpop.f32.mrf.mxu0
    %v1334 = vadd.f32 0.0, %v1333
    %v1335 = vpop.f32.mrf.mxu0
    %1336 = vdwg.mxu0
    %1337 = vrot.lane.b32.xlu0 %v328, 112
    %v1338 = vpop.permute.xlu0 %1337
    %1339 = vrot.lane.b32.xlu0 %v328, 80
    %v1340 = vpop.permute.xlu0 %1339
    %v1341 = vsel %vm334, %v1338, 0
    %v1343 = vsel %vm334, %v1340, 0
    %1345 = vmatprep.subr.mxu0 0.0
    %1346 = vmatpush1.xpose.msra.mxu0 0.0
    %1347 = vmatprep.subr.mxu0 0.0
    %1348 = vmatpush1.xpose.msra.mxu0 0.0
    %1349 = vmatprep.subr.mxu0 0.0
    %1350 = vmatpush1.xpose.msra.mxu0 0.0
    %1351 = vmatprep.subr.mxu0 0.0
    %1352 = vmatpush1.xpose.msra.mxu0 0.0
    %1353 = vmatprep.subr.mxu0 0.0
    %1354 = vmatpush1.xpose.msra.mxu0 0.0
    %1355 = vmatprep.subr.mxu0 0.0
    %1356 = vmatpush1.xpose.msra.mxu0 0.0
    %1357 = vmatprep.subr.mxu0 0.0
    %1358 = vmatpush1.xpose.msra.mxu0 0.0
    %1359 = vmatprep.subr.mxu0 0.0
    %1360 = vmatpush1.xpose.msra.mxu0 0.0
    %1361 = vmatprep.subr.mxu0 0.0
    %1362 = vmatpush1.xpose.msra.mxu0 0.0
    %1363 = vmatprep.subr.mxu0 0.0
    %1364 = vmatpush1.xpose.msra.mxu0 0.0
    %1365 = vmatprep.subr.mxu0 0.0
    %1366 = vmatpush1.xpose.msra.mxu0 0.0
    %1367 = vmatprep.subr.mxu0 0.0
    %1368 = vmatpush1.xpose.msra.mxu0 0.0
    %1369 = vmatprep.subr.mxu0 0.0
    %1370 = vmatpush1.xpose.msra.mxu0 0.0
    %1371 = vmatprep.subr.mxu0 0.0
    %1372 = vmatpush1.xpose.msra.mxu0 0.0
    %1373 = vmatprep.subr.mxu0 0.0
    %1374 = vmatpush1.xpose.msra.mxu0 0.0
    %1375 = vmatprep.subr.mxu0 0.0
    %1376 = vmatpush1.xpose.msra.mxu0 %v1343
    %1377 = vmatprep.subr.mxu0 0.0
    %1378 = vmatpush2.xpose.msra.mxu0 0.0
    %1379 = vmatprep.subr.mxu0 0.0
    %1380 = vmatpush2.xpose.msra.mxu0 0.0
    %1381 = vmatprep.subr.mxu0 0.0
    %1382 = vmatpush2.xpose.msra.mxu0 0.0
    %1383 = vmatprep.subr.mxu0 0.0
    %1384 = vmatpush2.xpose.msra.mxu0 0.0
    %1385 = vmatprep.subr.mxu0 0.0
    %1386 = vmatpush2.xpose.msra.mxu0 0.0
    %1387 = vmatprep.subr.mxu0 0.0
    %1388 = vmatpush2.xpose.msra.mxu0 0.0
    %1389 = vmatprep.subr.mxu0 0.0
    %1390 = vmatpush2.xpose.msra.mxu0 0.0
    %1391 = vmatprep.subr.mxu0 0.0
    %1392 = vmatpush2.xpose.msra.mxu0 0.0
    %1393 = vmatprep.subr.mxu0 0.0
    %1394 = vmatpush2.xpose.msra.mxu0 0.0
    %1395 = vmatprep.subr.mxu0 0.0
    %1396 = vmatpush2.xpose.msra.mxu0 0.0
    %1397 = vmatprep.subr.mxu0 0.0
    %1398 = vmatpush2.xpose.msra.mxu0 0.0
    %1399 = vmatprep.subr.mxu0 0.0
    %1400 = vmatpush2.xpose.msra.mxu0 0.0
    %1401 = vmatprep.subr.mxu0 0.0
    %1402 = vmatpush2.xpose.msra.mxu0 0.0
    %1403 = vmatprep.subr.mxu0 0.0
    %1404 = vmatpush2.xpose.msra.mxu0 0.0
    %1405 = vmatprep.subr.mxu0 0.0
    %1406 = vmatpush2.xpose.msra.mxu0 0.0
    %1407 = vmatprep.subr.mxu0 0.0
    %1408 = vmatpush2.xpose.msra.mxu0 0.0
    %1409 = vmatprep.mubr.f32.mxu0 0.0
    %1410 = vmatmul.mubr.f32.gmra.mxu0 %v1341
    %v1411 = vpop.f32.mrf.mxu0
    %v1412 = vadd.f32 0.0, %v1411
    %v1413 = vpop.f32.mrf.mxu0
    %1414 = vdwg.mxu0
    %v1415 = vsel %vm334, %v1412, -inf
    %1416 = vmax.xlane.f32.xlu0 %v1415
    %v1417 = vpop.xlane.xlu0 %1416
    %v1418 = vsub.f32 %v1412, %v1417
    %v1419 = vmul.f32 %v1418, 1.442695
    %v1420 = vpow.pop %v1419
    %v1421 = vsel %vm334, %v1420, 0.0
    %1422 = vadd.xlane.f32.xlu0 %v1421
    %v1423 = vpop.xlane.xlu0 %1422
    %v1424 = vrcp.pop %v1423
    %v1425 = vmul.f32 %v1420, %v1424
    %1426 = vrot.lane.b32.xlu0 %v328, 48
    %v1427 = vpop.permute.xlu0 %1426
    %v1430 = vsel %vm334, %v1425, 0
    %1432 = vmatprep.subr.mxu0 0.0
    %1433 = vmatpush1.msra.mxu0 0.0
    %1434 = vmatprep.subr.mxu0 0.0
    %1435 = vmatpush1.msra.mxu0 0.0
    %1436 = vmatprep.subr.mxu0 0.0
    %1437 = vmatpush1.msra.mxu0 0.0
    %1438 = vmatprep.subr.mxu0 0.0
    %1439 = vmatpush1.msra.mxu0 0.0
    %1440 = vmatprep.subr.mxu0 0.0
    %1441 = vmatpush1.msra.mxu0 0.0
    %1442 = vmatprep.subr.mxu0 0.0
    %1443 = vmatpush1.msra.mxu0 0.0
    %1444 = vmatprep.subr.mxu0 0.0
    %1445 = vmatpush1.msra.mxu0 0.0
    %1446 = vmatprep.subr.mxu0 0.0
    %1447 = vmatpush1.msra.mxu0 0.0
    %1448 = vmatprep.subr.mxu0 0.0
    %1449 = vmatpush1.msra.mxu0 0.0
    %1450 = vmatprep.subr.mxu0 0.0
    %1451 = vmatpush1.msra.mxu0 0.0
    %1452 = vmatprep.subr.mxu0 0.0
    %1453 = vmatpush1.msra.mxu0 0.0
    %1454 = vmatprep.subr.mxu0 0.0
    %1455 = vmatpush1.msra.mxu0 0.0
    %1456 = vmatprep.subr.mxu0 0.0
    %1457 = vmatpush1.msra.mxu0 0.0
    %1458 = vmatprep.subr.mxu0 0.0
    %1459 = vmatpush1.msra.mxu0 0.0
    %1460 = vmatprep.subr.mxu0 0.0
    %1461 = vmatpush1.msra.mxu0 0.0
    %1462 = vmatprep.subr.mxu0 0.0
    %1463 = vmatpush1.msra.mxu0 %v1427
    %1464 = vmatprep.subr.mxu0 0.0
    %1465 = vmatpush2.msra.mxu0 0.0
    %1466 = vmatprep.subr.mxu0 0.0
    %1467 = vmatpush2.msra.mxu0 0.0
    %1468 = vmatprep.subr.mxu0 0.0
    %1469 = vmatpush2.msra.mxu0 0.0
    %1470 = vmatprep.subr.mxu0 0.0
    %1471 = vmatpush2.msra.mxu0 0.0
    %1472 = vmatprep.subr.mxu0 0.0
    %1473 = vmatpush2.msra.mxu0 0.0
    %1474 = vmatprep.subr.mxu0 0.0
    %1475 = vmatpush2.msra.mxu0 0.0
    %1476 = vmatprep.subr.mxu0 0.0
    %1477 = vmatpush2.msra.mxu0 0.0
    %1478 = vmatprep.subr.mxu0 0.0
    %1479 = vmatpush2.msra.mxu0 0.0
    %1480 = vmatprep.subr.mxu0 0.0
    %1481 = vmatpush2.msra.mxu0 0.0
    %1482 = vmatprep.subr.mxu0 0.0
    %1483 = vmatpush2.msra.mxu0 0.0
    %1484 = vmatprep.subr.mxu0 0.0
    %1485 = vmatpush2.msra.mxu0 0.0
    %1486 = vmatprep.subr.mxu0 0.0
    %1487 = vmatpush2.msra.mxu0 0.0
    %1488 = vmatprep.subr.mxu0 0.0
    %1489 = vmatpush2.msra.mxu0 0.0
    %1490 = vmatprep.subr.mxu0 0.0
    %1491 = vmatpush2.msra.mxu0 0.0
    %1492 = vmatprep.subr.mxu0 0.0
    %1493 = vmatpush2.msra.mxu0 0.0
    %1494 = vmatprep.subr.mxu0 0.0
    %1495 = vmatpush2.msra.mxu0 0.0
    %1496 = vmatprep.mubr.f32.mxu0 0.0
    %1497 = vmatmul.mubr.f32.gmra.mxu0 %v1430
    %v1498 = vpop.f32.mrf.mxu0
    %v1499 = vadd.f32 0.0, %v1498
    %v1500 = vpop.f32.mrf.mxu0
    %1501 = vdwg.mxu0
    %1502 = vrot.lane.b32.xlu0 %v328, 104
    %v1503 = vpop.permute.xlu0 %1502
    %1504 = vrot.lane.b32.xlu0 %v328, 72
    %v1505 = vpop.permute.xlu0 %1504
    %v1506 = vsel %vm334, %v1503, 0
    %v1508 = vsel %vm334, %v1505, 0
    %1510 = vmatprep.subr.mxu0 0.0
    %1511 = vmatpush1.xpose.msra.mxu0 0.0
    %1512 = vmatprep.subr.mxu0 0.0
    %1513 = vmatpush1.xpose.msra.mxu0 0.0
    %1514 = vmatprep.subr.mxu0 0.0
    %1515 = vmatpush1.xpose.msra.mxu0 0.0
    %1516 = vmatprep.subr.mxu0 0.0
    %1517 = vmatpush1.xpose.msra.mxu0 0.0
    %1518 = vmatprep.subr.mxu0 0.0
    %1519 = vmatpush1.xpose.msra.mxu0 0.0
    %1520 = vmatprep.subr.mxu0 0.0
    %1521 = vmatpush1.xpose.msra.mxu0 0.0
    %1522 = vmatprep.subr.mxu0 0.0
    %1523 = vmatpush1.xpose.msra.mxu0 0.0
    %1524 = vmatprep.subr.mxu0 0.0
    %1525 = vmatpush1.xpose.msra.mxu0 0.0
    %1526 = vmatprep.subr.mxu0 0.0
    %1527 = vmatpush1.xpose.msra.mxu0 0.0
    %1528 = vmatprep.subr.mxu0 0.0
    %1529 = vmatpush1.xpose.msra.mxu0 0.0
    %1530 = vmatprep.subr.mxu0 0.0
    %1531 = vmatpush1.xpose.msra.mxu0 0.0
    %1532 = vmatprep.subr.mxu0 0.0
    %1533 = vmatpush1.xpose.msra.mxu0 0.0
    %1534 = vmatprep.subr.mxu0 0.0
    %1535 = vmatpush1.xpose.msra.mxu0 0.0
    %1536 = vmatprep.subr.mxu0 0.0
    %1537 = vmatpush1.xpose.msra.mxu0 0.0
    %1538 = vmatprep.subr.mxu0 0.0
    %1539 = vmatpush1.xpose.msra.mxu0 0.0
    %1540 = vmatprep.subr.mxu0 0.0
    %1541 = vmatpush1.xpose.msra.mxu0 %v1508
    %1542 = vmatprep.subr.mxu0 0.0
    %1543 = vmatpush2.xpose.msra.mxu0 0.0
    %1544 = vmatprep.subr.mxu0 0.0
    %1545 = vmatpush2.xpose.msra.mxu0 0.0
    %1546 = vmatprep.subr.mxu0 0.0
    %1547 = vmatpush2.xpose.msra.mxu0 0.0
    %1548 = vmatprep.subr.mxu0 0.0
    %1549 = vmatpush2.xpose.msra.mxu0 0.0
    %1550 = vmatprep.subr.mxu0 0.0
    %1551 = vmatpush2.xpose.msra.mxu0 0.0
    %1552 = vmatprep.subr.mxu0 0.0
    %1553 = vmatpush2.xpose.msra.mxu0 0.0
    %1554 = vmatprep.subr.mxu0 0.0
    %1555 = vmatpush2.xpose.msra.mxu0 0.0
    %1556 = vmatprep.subr.mxu0 0.0
    %1557 = vmatpush2.xpose.msra.mxu0 0.0
    %1558 = vmatprep.subr.mxu0 0.0
    %1559 = vmatpush2.xpose.msra.mxu0 0.0
    %1560 = vmatprep.subr.mxu0 0.0
    %1561 = vmatpush2.xpose.msra.mxu0 0.0
    %1562 = vmatprep.subr.mxu0 0.0
    %1563 = vmatpush2.xpose.msra.mxu0 0.0
    %1564 = vmatprep.subr.mxu0 0.0
    %1565 = vmatpush2.xpose.msra.mxu0 0.0
    %1566 = vmatprep.subr.mxu0 0.0
    %1567 = vmatpush2.xpose.msra.mxu0 0.0
    %1568 = vmatprep.subr.mxu0 0.0
    %1569 = vmatpush2.xpose.msra.mxu0 0.0
    %1570 = vmatprep.subr.mxu0 0.0
    %1571 = vmatpush2.xpose.msra.mxu0 0.0
    %1572 = vmatprep.subr.mxu0 0.0
    %1573 = vmatpush2.xpose.msra.mxu0 0.0
    %1574 = vmatprep.mubr.f32.mxu0 0.0
    %1575 = vmatmul.mubr.f32.gmra.mxu0 %v1506
    %v1576 = vpop.f32.mrf.mxu0
    %v1577 = vadd.f32 0.0, %v1576
    %v1578 = vpop.f32.mrf.mxu0
    %1579 = vdwg.mxu0
    %v1580 = vsel %vm334, %v1577, -inf
    %1581 = vmax.xlane.f32.xlu0 %v1580
    %v1582 = vpop.xlane.xlu0 %1581
    %v1583 = vsub.f32 %v1577, %v1582
    %v1584 = vmul.f32 %v1583, 1.442695
    %v1585 = vpow.pop %v1584
    %v1586 = vsel %vm334, %v1585, 0.0
    %1587 = vadd.xlane.f32.xlu0 %v1586
    %v1588 = vpop.xlane.xlu0 %1587
    %v1589 = vrcp.pop %v1588
    %v1590 = vmul.f32 %v1585, %v1589
    %1591 = vrot.lane.b32.xlu0 %v328, 40
    %v1592 = vpop.permute.xlu0 %1591
    %v1595 = vsel %vm334, %v1590, 0
    %1597 = vmatprep.subr.mxu0 0.0
    %1598 = vmatpush1.msra.mxu0 0.0
    %1599 = vmatprep.subr.mxu0 0.0
    %1600 = vmatpush1.msra.mxu0 0.0
    %1601 = vmatprep.subr.mxu0 0.0
    %1602 = vmatpush1.msra.mxu0 0.0
    %1603 = vmatprep.subr.mxu0 0.0
    %1604 = vmatpush1.msra.mxu0 0.0
    %1605 = vmatprep.subr.mxu0 0.0
    %1606 = vmatpush1.msra.mxu0 0.0
    %1607 = vmatprep.subr.mxu0 0.0
    %1608 = vmatpush1.msra.mxu0 0.0
    %1609 = vmatprep.subr.mxu0 0.0
    %1610 = vmatpush1.msra.mxu0 0.0
    %1611 = vmatprep.subr.mxu0 0.0
    %1612 = vmatpush1.msra.mxu0 0.0
    %1613 = vmatprep.subr.mxu0 0.0
    %1614 = vmatpush1.msra.mxu0 0.0
    %1615 = vmatprep.subr.mxu0 0.0
    %1616 = vmatpush1.msra.mxu0 0.0
    %1617 = vmatprep.subr.mxu0 0.0
    %1618 = vmatpush1.msra.mxu0 0.0
    %1619 = vmatprep.subr.mxu0 0.0
    %1620 = vmatpush1.msra.mxu0 0.0
    %1621 = vmatprep.subr.mxu0 0.0
    %1622 = vmatpush1.msra.mxu0 0.0
    %1623 = vmatprep.subr.mxu0 0.0
    %1624 = vmatpush1.msra.mxu0 0.0
    %1625 = vmatprep.subr.mxu0 0.0
    %1626 = vmatpush1.msra.mxu0 0.0
    %1627 = vmatprep.subr.mxu0 0.0
    %1628 = vmatpush1.msra.mxu0 %v1592
    %1629 = vmatprep.subr.mxu0 0.0
    %1630 = vmatpush2.msra.mxu0 0.0
    %1631 = vmatprep.subr.mxu0 0.0
    %1632 = vmatpush2.msra.mxu0 0.0
    %1633 = vmatprep.subr.mxu0 0.0
    %1634 = vmatpush2.msra.mxu0 0.0
    %1635 = vmatprep.subr.mxu0 0.0
    %1636 = vmatpush2.msra.mxu0 0.0
    %1637 = vmatprep.subr.mxu0 0.0
    %1638 = vmatpush2.msra.mxu0 0.0
    %1639 = vmatprep.subr.mxu0 0.0
    %1640 = vmatpush2.msra.mxu0 0.0
    %1641 = vmatprep.subr.mxu0 0.0
    %1642 = vmatpush2.msra.mxu0 0.0
    %1643 = vmatprep.subr.mxu0 0.0
    %1644 = vmatpush2.msra.mxu0 0.0
    %1645 = vmatprep.subr.mxu0 0.0
    %1646 = vmatpush2.msra.mxu0 0.0
    %1647 = vmatprep.subr.mxu0 0.0
    %1648 = vmatpush2.msra.mxu0 0.0
    %1649 = vmatprep.subr.mxu0 0.0
    %1650 = vmatpush2.msra.mxu0 0.0
    %1651 = vmatprep.subr.mxu0 0.0
    %1652 = vmatpush2.msra.mxu0 0.0
    %1653 = vmatprep.subr.mxu0 0.0
    %1654 = vmatpush2.msra.mxu0 0.0
    %1655 = vmatprep.subr.mxu0 0.0
    %1656 = vmatpush2.msra.mxu0 0.0
    %1657 = vmatprep.subr.mxu0 0.0
    %1658 = vmatpush2.msra.mxu0 0.0
    %1659 = vmatprep.subr.mxu0 0.0
    %1660 = vmatpush2.msra.mxu0 0.0
    %1661 = vmatprep.mubr.f32.mxu0 0.0
    %1662 = vmatmul.mubr.f32.gmra.mxu0 %v1595
    %v1663 = vpop.f32.mrf.mxu0
    %v1664 = vadd.f32 0.0, %v1663
    %v1665 = vpop.f32.mrf.mxu0
    %1666 = vdwg.mxu0
    %1668 = vrot.lane.b32.xlu0 %v1334, 8
    %v1669 = vpop.permute.xlu0 %1668
    %1672 = vrot.lane.b32.xlu0 %v1499, 16
    %v1673 = vpop.permute.xlu0 %1672
    %1676 = vrot.lane.b32.xlu0 %v1664, 24
    %v1677 = vpop.permute.xlu0 %1676
    %v1679 = vsel %vm334, %v1169, %v1669
    %v1680 = vsel %vm1004, %v1679, %v1673
    %v1681 = vsel %vm1006, %v1680, %v1677
    %v1682 = vld [vmem:[%s7] sm:$0xff]
    %v1683 = vld [vmem:[%s7 + $0x8] sm:$0xff]
    %v1684 = vld [vmem:[%s7 + $0x10] sm:$0xff]
    %v1685 = vld [vmem:[%s7 + $0x18] sm:$0xff]
    %v1686 = vlaneseq
    %v1687 = vshrl.u32 %v1686, 7
    %v1688 = vsub.s32 0, %v1687
    %v1689 = vrot.slane %v238, %v1688
    %v1691 = vsel %vm198, %v1007, 0
    %v1694 = vsel %vm198, %v1681, 0
    %1696 = vmatprep.subr.mxu0 0.0
    %1697 = vmatpush1.msra.mxu0 0.0
    %1698 = vmatprep.subr.mxu0 0.0
    %1699 = vmatpush1.msra.mxu0 0.0
    %1700 = vmatprep.subr.mxu0 0.0
    %1701 = vmatpush1.msra.mxu0 0.0
    %1702 = vmatprep.subr.mxu0 0.0
    %1703 = vmatpush1.msra.mxu0 0.0
    %1704 = vmatprep.subr.mxu0 0.0
    %1705 = vmatpush1.msra.mxu0 0.0
    %1706 = vmatprep.subr.mxu0 0.0
    %1707 = vmatpush1.msra.mxu0 0.0
    %1708 = vmatprep.subr.mxu0 0.0
    %1709 = vmatpush1.msra.mxu0 0.0
    %1710 = vmatprep.subr.mxu0 0.0
    %1711 = vmatpush1.msra.mxu0 0.0
    %1712 = vmatprep.subr.mxu0 0.0
    %1713 = vmatpush1.msra.mxu0 0.0
    %1714 = vmatprep.subr.mxu0 0.0
    %1715 = vmatpush1.msra.mxu0 0.0
    %1716 = vmatprep.subr.mxu0 0.0
    %1717 = vmatpush1.msra.mxu0 0.0
    %1718 = vmatprep.subr.mxu0 0.0
    %1719 = vmatpush1.msra.mxu0 0.0
    %1720 = vmatprep.subr.mxu0 0.0
    %1721 = vmatpush1.msra.mxu0 %v1685
    %1722 = vmatprep.subr.mxu0 0.0
    %1723 = vmatpush1.msra.mxu0 %v1684
    %1724 = vmatprep.subr.mxu0 0.0
    %1725 = vmatpush1.msra.mxu0 %v1683
    %1726 = vmatprep.subr.mxu0 0.0
    %1727 = vmatpush1.msra.mxu0 %v1682
    %1728 = vmatprep.subr.mxu0 0.0
    %1729 = vmatpush2.msra.mxu0 0.0
    %1730 = vmatprep.subr.mxu0 0.0
    %1731 = vmatpush2.msra.mxu0 0.0
    %1732 = vmatprep.subr.mxu0 0.0
    %1733 = vmatpush2.msra.mxu0 0.0
    %1734 = vmatprep.subr.mxu0 0.0
    %1735 = vmatpush2.msra.mxu0 0.0
    %1736 = vmatprep.subr.mxu0 0.0
    %1737 = vmatpush2.msra.mxu0 0.0
    %1738 = vmatprep.subr.mxu0 0.0
    %1739 = vmatpush2.msra.mxu0 0.0
    %1740 = vmatprep.subr.mxu0 0.0
    %1741 = vmatpush2.msra.mxu0 0.0
    %1742 = vmatprep.subr.mxu0 0.0
    %1743 = vmatpush2.msra.mxu0 0.0
    %1744 = vmatprep.subr.mxu0 0.0
    %1745 = vmatpush2.msra.mxu0 0.0
    %1746 = vmatprep.subr.mxu0 0.0
    %1747 = vmatpush2.msra.mxu0 0.0
    %1748 = vmatprep.subr.mxu0 0.0
    %1749 = vmatpush2.msra.mxu0 0.0
    %1750 = vmatprep.subr.mxu0 0.0
    %1751 = vmatpush2.msra.mxu0 0.0
    %1752 = vmatprep.subr.mxu0 0.0
    %1753 = vmatpush2.msra.mxu0 0.0
    %1754 = vmatprep.subr.mxu0 0.0
    %1755 = vmatpush2.msra.mxu0 0.0
    %1756 = vmatprep.subr.mxu0 0.0
    %1757 = vmatpush2.msra.mxu0 0.0
    %1758 = vmatprep.subr.mxu0 0.0
    %1759 = vmatpush2.msra.mxu0 0.0
    %1760 = vmatprep.mubr.f32.mxu0 0.0
    %1761 = vmatmul.mubr.f32.gmra.mxu0 %v1691
    %v1762 = vpop.f32.mrf.mxu0
    %v1763 = vadd.f32 %v1689, %v1762
    %v1764 = vpop.f32.mrf.mxu0
    %1765 = vmatprep.mubr.f32.mxu0 0.0
    %1766 = vmatmul.mubr.f32.gmra.mxu0 %v1694
    %v1767 = vpop.f32.mrf.mxu0
    %v1768 = vadd.f32 %v1689, %v1767
    %v1769 = vpop.f32.mrf.mxu0
    %1770 = vdwg.mxu0
    %v1771 = vadd.f32 %v236, %v1763
    %v1772 = vadd.f32 %v237, %v1768
    %v1773 = vsel %vm198, %v1771, 0.0
    %1774 = vadd.xlane.f32.xlu0 %v1773
    %v1775 = vpop.xlane.xlu0 %1774
    %v1776 = vsel %vm198, %v1772, 0.0
    %1777 = vadd.xlane.f32.xlu0 %v1776
    %v1778 = vpop.xlane.xlu0 %1777
    %v1779 = vmul.f32 %v1775, %v205
    %v1780 = vmul.f32 %v1778, %v205
    %v1781 = vsub.f32 %v1771, %v1779
    %v1782 = vsub.f32 %v1772, %v1780
    %v1783 = vmul.f32 %v1781, %v1781
    %v1784 = vmul.f32 %v1782, %v1782
    %v1785 = vsel %vm198, %v1783, 0.0
    %1786 = vadd.xlane.f32.xlu0 %v1785
    %v1787 = vpop.xlane.xlu0 %1786
    %v1788 = vsel %vm198, %v1784, 0.0
    %1789 = vadd.xlane.f32.xlu0 %v1788
    %v1790 = vpop.xlane.xlu0 %1789
    %v1791 = vmul.f32 %v1787, %v205
    %v1792 = vmul.f32 %v1790, %v205
    %v1793 = vadd.f32 %v1791, 1e-12
    %v1794 = vadd.f32 %v1792, 1e-12
    %v1795 = vrsqrt.pop %v1793
    %v1796 = vrsqrt.pop %v1794
    %v1797 = vmul.f32 %v1781, %v1795
    %v1798 = vmul.f32 %v1782, %v1796
    %v1799 = vlaneseq
    %v1800 = vshrl.u32 %v1799, 7
    %v1801 = vsub.s32 1, %v1800
    %v1802 = vrot.slane %v238, %v1801
    %v1803 = vmul.f32 %v1797, %v1802
    %v1804 = vmul.f32 %v1798, %v1802
    %v1805 = vlaneseq
    %v1806 = vshrl.u32 %v1805, 7
    %v1807 = vsub.s32 2, %v1806
    %v1808 = vrot.slane %v238, %v1807
    %v1809 = vadd.f32 %v1803, %v1808
    %v1810 = vadd.f32 %v1804, %v1808
    %v1811 = vld [vmem:[%s8] sm:$0xff]
    %v1812 = vld [vmem:[%s8 + $0x8] sm:$0xff]
    %v1813 = vld [vmem:[%s8 + $0x10] sm:$0xff]
    %v1814 = vld [vmem:[%s8 + $0x18] sm:$0xff]
    %v1815 = vld [vmem:[%s9] sm:$0x1]
    %v1817 = vlaneseq
    %v1818 = vshrl.u32 %v1817, 7
    %v1819 = vsub.s32 0, %v1818
    %v1820 = vrot.slane %v1815, %v1819
    %v1823 = vsel %vm198, %v1809, 0
    %v1826 = vsel %vm198, %v1810, 0
    %1828 = vmatprep.subr.mxu0 0.0
    %1829 = vmatpush1.msra.mxu0 0.0
    %1830 = vmatprep.subr.mxu0 0.0
    %1831 = vmatpush1.msra.mxu0 0.0
    %1832 = vmatprep.subr.mxu0 0.0
    %1833 = vmatpush1.msra.mxu0 0.0
    %1834 = vmatprep.subr.mxu0 0.0
    %1835 = vmatpush1.msra.mxu0 0.0
    %1836 = vmatprep.subr.mxu0 0.0
    %1837 = vmatpush1.msra.mxu0 0.0
    %1838 = vmatprep.subr.mxu0 0.0
    %1839 = vmatpush1.msra.mxu0 0.0
    %1840 = vmatprep.subr.mxu0 0.0
    %1841 = vmatpush1.msra.mxu0 0.0
    %1842 = vmatprep.subr.mxu0 0.0
    %1843 = vmatpush1.msra.mxu0 0.0
    %1844 = vmatprep.subr.mxu0 0.0
    %1845 = vmatpush1.msra.mxu0 0.0
    %1846 = vmatprep.subr.mxu0 0.0
    %1847 = vmatpush1.msra.mxu0 0.0
    %1848 = vmatprep.subr.mxu0 0.0
    %1849 = vmatpush1.msra.mxu0 0.0
    %1850 = vmatprep.subr.mxu0 0.0
    %1851 = vmatpush1.msra.mxu0 0.0
    %1852 = vmatprep.subr.mxu0 0.0
    %1853 = vmatpush1.msra.mxu0 %v1814
    %1854 = vmatprep.subr.mxu0 0.0
    %1855 = vmatpush1.msra.mxu0 %v1813
    %1856 = vmatprep.subr.mxu0 0.0
    %1857 = vmatpush1.msra.mxu0 %v1812
    %1858 = vmatprep.subr.mxu0 0.0
    %1859 = vmatpush1.msra.mxu0 %v1811
    %1860 = vmatprep.subr.mxu0 0.0
    %1861 = vmatpush2.msra.mxu0 0.0
    %1862 = vmatprep.subr.mxu0 0.0
    %1863 = vmatpush2.msra.mxu0 0.0
    %1864 = vmatprep.subr.mxu0 0.0
    %1865 = vmatpush2.msra.mxu0 0.0
    %1866 = vmatprep.subr.mxu0 0.0
    %1867 = vmatpush2.msra.mxu0 0.0
    %1868 = vmatprep.subr.mxu0 0.0
    %1869 = vmatpush2.msra.mxu0 0.0
    %1870 = vmatprep.subr.mxu0 0.0
    %1871 = vmatpush2.msra.mxu0 0.0
    %1872 = vmatprep.subr.mxu0 0.0
    %1873 = vmatpush2.msra.mxu0 0.0
    %1874 = vmatprep.subr.mxu0 0.0
    %1875 = vmatpush2.msra.mxu0 0.0
    %1876 = vmatprep.subr.mxu0 0.0
    %1877 = vmatpush2.msra.mxu0 0.0
    %1878 = vmatprep.subr.mxu0 0.0
    %1879 = vmatpush2.msra.mxu0 0.0
    %1880 = vmatprep.subr.mxu0 0.0
    %1881 = vmatpush2.msra.mxu0 0.0
    %1882 = vmatprep.subr.mxu0 0.0
    %1883 = vmatpush2.msra.mxu0 0.0
    %1884 = vmatprep.subr.mxu0 0.0
    %1885 = vmatpush2.msra.mxu0 0.0
    %1886 = vmatprep.subr.mxu0 0.0
    %1887 = vmatpush2.msra.mxu0 0.0
    %1888 = vmatprep.subr.mxu0 0.0
    %1889 = vmatpush2.msra.mxu0 0.0
    %1890 = vmatprep.subr.mxu0 0.0
    %1891 = vmatpush2.msra.mxu0 0.0
    %1892 = vmatprep.mubr.f32.mxu0 0.0
    %1893 = vmatmul.mubr.f32.gmra.mxu0 %v1823
    %v1894 = vpop.f32.mrf.mxu0
    %v1895 = vadd.f32 %v1820, %v1894
    %v1896 = vpop.f32.mrf.mxu0
    %1897 = vmatprep.mubr.f32.mxu0 0.0
    %1898 = vmatmul.mubr.f32.gmra.mxu0 %v1826
    %v1899 = vpop.f32.mrf.mxu0
    %v1900 = vadd.f32 %v1820, %v1899
    %v1901 = vpop.f32.mrf.mxu0
    %1902 = vdwg.mxu0
    %v1903 = vmul.f32 %v1895, 0.5
    %v1904 = vmul.f32 %v1900, 0.5
    %v1905 = vmul.f32 %v1895, 0.044715
    %v1906 = vmul.f32 %v1900, 0.044715
    %v1907 = vmul.f32 %v1905, %v1895
    %v1908 = vmul.f32 %v1906, %v1900
    %v1909 = vmul.f32 %v1907, %v1895
    %v1910 = vmul.f32 %v1908, %v1900
    %v1911 = vadd.f32 %v1895, %v1909
    %v1912 = vadd.f32 %v1900, %v1910
    %v1913 = vmul.f32 %v1911, 0.7978846
    %v1914 = vmul.f32 %v1912, 0.7978846
    %v1915 = vtanh.pop %v1913
    %v1916 = vtanh.pop %v1914
    %v1917 = vadd.f32 %v1915, 1.0
    %v1918 = vadd.f32 %v1916, 1.0
    %v1919 = vmul.f32 %v1903, %v1917
    %v1920 = vmul.f32 %v1904, %v1918
    %v1921 = vld [vmem:[%s10] sm:$0xff]
    %v1922 = vld [vmem:[%s10 + $0x8] sm:$0xff]
    %v1923 = vld [vmem:[%s10 + $0x10] sm:$0xff]
    %v1924 = vld [vmem:[%s10 + $0x18] sm:$0xff]
    %v1925 = vld [vmem:[%s10 + $0x20] sm:$0xff]
    %v1926 = vld [vmem:[%s10 + $0x28] sm:$0xff]
    %v1927 = vld [vmem:[%s10 + $0x30] sm:$0xff]
    %v1928 = vld [vmem:[%s10 + $0x38] sm:$0xff]
    %v1929 = vlaneseq
    %v1930 = vshrl.u32 %v1929, 7
    %v1931 = vsub.s32 3, %v1930
    %v1932 = vrot.slane %v238, %v1931
    %vm1933 = vcmask 523264
    %v1935 = vsel %vm1933, %v1919, 0
    %v1938 = vsel %vm1933, %v1920, 0
    %1940 = vmatprep.subr.mxu0 0.0
    %1941 = vmatpush1.msra.mxu0 0.0
    %1942 = vmatprep.subr.mxu0 0.0
    %1943 = vmatpush1.msra.mxu0 0.0
    %1944 = vmatprep.subr.mxu0 0.0
    %1945 = vmatpush1.msra.mxu0 0.0
    %1946 = vmatprep.subr.mxu0 0.0
    %1947 = vmatpush1.msra.mxu0 0.0
    %1948 = vmatprep.subr.mxu0 0.0
    %1949 = vmatpush1.msra.mxu0 0.0
    %1950 = vmatprep.subr.mxu0 0.0
    %1951 = vmatpush1.msra.mxu0 0.0
    %1952 = vmatprep.subr.mxu0 0.0
    %1953 = vmatpush1.msra.mxu0 0.0
    %1954 = vmatprep.subr.mxu0 0.0
    %1955 = vmatpush1.msra.mxu0 0.0
    %1956 = vmatprep.subr.mxu0 0.0
    %1957 = vmatpush1.msra.mxu0 %v1928
    %1958 = vmatprep.subr.mxu0 0.0
    %1959 = vmatpush1.msra.mxu0 %v1927
    %1960 = vmatprep.subr.mxu0 0.0
    %1961 = vmatpush1.msra.mxu0 %v1926
    %1962 = vmatprep.subr.mxu0 0.0
    %1963 = vmatpush1.msra.mxu0 %v1925
    %1964 = vmatprep.subr.mxu0 0.0
    %1965 = vmatpush1.msra.mxu0 %v1924
    %1966 = vmatprep.subr.mxu0 0.0
    %1967 = vmatpush1.msra.mxu0 %v1923
    %1968 = vmatprep.subr.mxu0 0.0
    %1969 = vmatpush1.msra.mxu0 %v1922
    %1970 = vmatprep.subr.mxu0 0.0
    %1971 = vmatpush1.msra.mxu0 %v1921
    %1972 = vmatprep.subr.mxu0 0.0
    %1973 = vmatpush2.msra.mxu0 0.0
    %1974 = vmatprep.subr.mxu0 0.0
    %1975 = vmatpush2.msra.mxu0 0.0
    %1976 = vmatprep.subr.mxu0 0.0
    %1977 = vmatpush2.msra.mxu0 0.0
    %1978 = vmatprep.subr.mxu0 0.0
    %1979 = vmatpush2.msra.mxu0 0.0
    %1980 = vmatprep.subr.mxu0 0.0
    %1981 = vmatpush2.msra.mxu0 0.0
    %1982 = vmatprep.subr.mxu0 0.0
    %1983 = vmatpush2.msra.mxu0 0.0
    %1984 = vmatprep.subr.mxu0 0.0
    %1985 = vmatpush2.msra.mxu0 0.0
    %1986 = vmatprep.subr.mxu0 0.0
    %1987 = vmatpush2.msra.mxu0 0.0
    %1988 = vmatprep.subr.mxu0 0.0
    %1989 = vmatpush2.msra.mxu0 0.0
    %1990 = vmatprep.subr.mxu0 0.0
    %1991 = vmatpush2.msra.mxu0 0.0
    %1992 = vmatprep.subr.mxu0 0.0
    %1993 = vmatpush2.msra.mxu0 0.0
    %1994 = vmatprep.subr.mxu0 0.0
    %1995 = vmatpush2.msra.mxu0 0.0
    %1996 = vmatprep.subr.mxu0 0.0
    %1997 = vmatpush2.msra.mxu0 0.0
    %1998 = vmatprep.subr.mxu0 0.0
    %1999 = vmatpush2.msra.mxu0 0.0
    %2000 = vmatprep.subr.mxu0 0.0
    %2001 = vmatpush2.msra.mxu0 0.0
    %2002 = vmatprep.subr.mxu0 0.0
    %2003 = vmatpush2.msra.mxu0 0.0
    %2004 = vmatprep.mubr.f32.mxu0 0.0
    %2005 = vmatmul.mubr.f32.gmra.mxu0 %v1935
    %v2006 = vpop.f32.mrf.mxu0
    %v2007 = vadd.f32 %v1932, %v2006
    %v2008 = vpop.f32.mrf.mxu0
    %2009 = vmatprep.mubr.f32.mxu0 0.0
    %2010 = vmatmul.mubr.f32.gmra.mxu0 %v1938
    %v2011 = vpop.f32.mrf.mxu0
    %v2012 = vadd.f32 %v1932, %v2011
    %v2013 = vpop.f32.mrf.mxu0
    %2014 = vdwg.mxu0
    %v2015 = vadd.f32 %v1809, %v2007
    %v2016 = vadd.f32 %v1810, %v2012
    %v2017 = vsel %vm198, %v2015, 0.0
    %2018 = vadd.xlane.f32.xlu0 %v2017
    %v2019 = vpop.xlane.xlu0 %2018
    %v2020 = vsel %vm198, %v2016, 0.0
    %2021 = vadd.xlane.f32.xlu0 %v2020
    %v2022 = vpop.xlane.xlu0 %2021
    %v2023 = vmul.f32 %v2019, %v205
    %v2024 = vmul.f32 %v2022, %v205
    %v2025 = vsub.f32 %v2015, %v2023
    %v2026 = vsub.f32 %v2016, %v2024
    %v2027 = vmul.f32 %v2025, %v2025
    %v2028 = vmul.f32 %v2026, %v2026
    %v2029 = vsel %vm198, %v2027, 0.0
    %2030 = vadd.xlane.f32.xlu0 %v2029
    %v2031 = vpop.xlane.xlu0 %2030
    %v2032 = vsel %vm198, %v2028, 0.0
    %2033 = vadd.xlane.f32.xlu0 %v2032
    %v2034 = vpop.xlane.xlu0 %2033
    %v2035 = vmul.f32 %v2031, %v205
    %v2036 = vmul.f32 %v2034, %v205
    %v2037 = vadd.f32 %v2035, 1e-12
    %v2038 = vadd.f32 %v2036, 1e-12
    %v2039 = vrsqrt.pop %v2037
    %v2040 = vrsqrt.pop %v2038
    %v2041 = vmul.f32 %v2025, %v2039
    %v2042 = vmul.f32 %v2026, %v2040
    %v2043 = vlaneseq
    %v2044 = vshrl.u32 %v2043, 7
    %v2045 = vsub.s32 4, %v2044
    %v2046 = vrot.slane %v238, %v2045
    %v2047 = vmul.f32 %v2041, %v2046
    %v2048 = vmul.f32 %v2042, %v2046
    %v2049 = vlaneseq
    %v2050 = vshrl.u32 %v2049, 7
    %v2051 = vsub.s32 5, %v2050
    %v2052 = vrot.slane %v238, %v2051
    %v2053 = vadd.f32 %v2047, %v2052
    %v2054 = vadd.f32 %v2048, %v2052
    %s2055 = scalar_lea.vmem %s11, 8
    %v2056 = vld [vmem:[%s2055] sm:$0x3f]
    %s2057 = scalar_lea.vmem %s5, 32
    %v2058 = vld [vmem:[%s2057] sm:$0xff]
    %v2059 = vld [vmem:[%s2057 + $0x8] sm:$0xff]
    %v2060 = vld [vmem:[%s2057 + $0x10] sm:$0xff]
    %v2061 = vld [vmem:[%s2057 + $0x18] sm:$0xff]
    %s2062 = scalar_lea.vmem %s6, 1
    %v2063 = vld [vmem:[%s2062] sm:$0x1]
    %v2065 = vlaneseq
    %v2066 = vshrl.u32 %v2065, 7
    %v2067 = vsub.s32 0, %v2066
    %v2068 = vrot.slane %v2063, %v2067
    %v2071 = vsel %vm198, %v2053, 0
    %v2074 = vsel %vm198, %v2054, 0
    %2076 = vmatprep.subr.mxu0 0.0
    %2077 = vmatpush1.msra.mxu0 0.0
    %2078 = vmatprep.subr.mxu0 0.0
    %2079 = vmatpush1.msra.mxu0 0.0
    %2080 = vmatprep.subr.mxu0 0.0
    %2081 = vmatpush1.msra.mxu0 0.0
    %2082 = vmatprep.subr.mxu0 0.0
    %2083 = vmatpush1.msra.mxu0 0.0
    %2084 = vmatprep.subr.mxu0 0.0
    %2085 = vmatpush1.msra.mxu0 0.0
    %2086 = vmatprep.subr.mxu0 0.0
    %2087 = vmatpush1.msra.mxu0 0.0
    %2088 = vmatprep.subr.mxu0 0.0
    %2089 = vmatpush1.msra.mxu0 0.0
    %2090 = vmatprep.subr.mxu0 0.0
    %2091 = vmatpush1.msra.mxu0 0.0
    %2092 = vmatprep.subr.mxu0 0.0
    %2093 = vmatpush1.msra.mxu0 0.0
    %2094 = vmatprep.subr.mxu0 0.0
    %2095 = vmatpush1.msra.mxu0 0.0
    %2096 = vmatprep.subr.mxu0 0.0
    %2097 = vmatpush1.msra.mxu0 0.0
    %2098 = vmatprep.subr.mxu0 0.0
    %2099 = vmatpush1.msra.mxu0 0.0
    %2100 = vmatprep.subr.mxu0 0.0
    %2101 = vmatpush1.msra.mxu0 %v2061
    %2102 = vmatprep.subr.mxu0 0.0
    %2103 = vmatpush1.msra.mxu0 %v2060
    %2104 = vmatprep.subr.mxu0 0.0
    %2105 = vmatpush1.msra.mxu0 %v2059
    %2106 = vmatprep.subr.mxu0 0.0
    %2107 = vmatpush1.msra.mxu0 %v2058
    %2108 = vmatprep.subr.mxu0 0.0
    %2109 = vmatpush2.msra.mxu0 0.0
    %2110 = vmatprep.subr.mxu0 0.0
    %2111 = vmatpush2.msra.mxu0 0.0
    %2112 = vmatprep.subr.mxu0 0.0
    %2113 = vmatpush2.msra.mxu0 0.0
    %2114 = vmatprep.subr.mxu0 0.0
    %2115 = vmatpush2.msra.mxu0 0.0
    %2116 = vmatprep.subr.mxu0 0.0
    %2117 = vmatpush2.msra.mxu0 0.0
    %2118 = vmatprep.subr.mxu0 0.0
    %2119 = vmatpush2.msra.mxu0 0.0
    %2120 = vmatprep.subr.mxu0 0.0
    %2121 = vmatpush2.msra.mxu0 0.0
    %2122 = vmatprep.subr.mxu0 0.0
    %2123 = vmatpush2.msra.mxu0 0.0
    %2124 = vmatprep.subr.mxu0 0.0
    %2125 = vmatpush2.msra.mxu0 0.0
    %2126 = vmatprep.subr.mxu0 0.0
    %2127 = vmatpush2.msra.mxu0 0.0
    %2128 = vmatprep.subr.mxu0 0.0
    %2129 = vmatpush2.msra.mxu0 0.0
    %2130 = vmatprep.subr.mxu0 0.0
    %2131 = vmatpush2.msra.mxu0 0.0
    %2132 = vmatprep.subr.mxu0 0.0
    %2133 = vmatpush2.msra.mxu0 0.0
    %2134 = vmatprep.subr.mxu0 0.0
    %2135 = vmatpush2.msra.mxu0 0.0
    %2136 = vmatprep.subr.mxu0 0.0
    %2137 = vmatpush2.msra.mxu0 0.0
    %2138 = vmatprep.subr.mxu0 0.0
    %2139 = vmatpush2.msra.mxu0 0.0
    %2140 = vmatprep.mubr.f32.mxu0 0.0
    %2141 = vmatmul.mubr.f32.gmra.mxu0 %v2071
    %v2142 = vpop.f32.mrf.mxu0
    %v2143 = vadd.f32 %v2068, %v2142
    %v2144 = vpop.f32.mrf.mxu0
    %2145 = vmatprep.mubr.f32.mxu0 0.0
    %2146 = vmatmul.mubr.f32.gmra.mxu0 %v2074
    %v2147 = vpop.f32.mrf.mxu0
    %v2148 = vadd.f32 %v2068, %v2147
    %v2149 = vpop.f32.mrf.mxu0
    %2150 = vdwg.mxu0
    %2152 = vrot.lane.b32.xlu0 %v2143, 96
    %v2153 = vpop.permute.xlu0 %2152
    %v2154 = vsel %vm334, %v2143, 0
    %v2156 = vsel %vm334, %v2153, 0
    %2158 = vmatprep.subr.mxu0 0.0
    %2159 = vmatpush1.xpose.msra.mxu0 0.0
    %2160 = vmatprep.subr.mxu0 0.0
    %2161 = vmatpush1.xpose.msra.mxu0 0.0
    %2162 = vmatprep.subr.mxu0 0.0
    %2163 = vmatpush1.xpose.msra.mxu0 0.0
    %2164 = vmatprep.subr.mxu0 0.0
    %2165 = vmatpush1.xpose.msra.mxu0 0.0
    %2166 = vmatprep.subr.mxu0 0.0
    %2167 = vmatpush1.xpose.msra.mxu0 0.0
    %2168 = vmatprep.subr.mxu0 0.0
    %2169 = vmatpush1.xpose.msra.mxu0 0.0
    %2170 = vmatprep.subr.mxu0 0.0
    %2171 = vmatpush1.xpose.msra.mxu0 0.0
    %2172 = vmatprep.subr.mxu0 0.0
    %2173 = vmatpush1.xpose.msra.mxu0 0.0
    %2174 = vmatprep.subr.mxu0 0.0
    %2175 = vmatpush1.xpose.msra.mxu0 0.0
    %2176 = vmatprep.subr.mxu0 0.0
    %2177 = vmatpush1.xpose.msra.mxu0 0.0
    %2178 = vmatprep.subr.mxu0 0.0
    %2179 = vmatpush1.xpose.msra.mxu0 0.0
    %2180 = vmatprep.subr.mxu0 0.0
    %2181 = vmatpush1.xpose.msra.mxu0 0.0
    %2182 = vmatprep.subr.mxu0 0.0
    %2183 = vmatpush1.xpose.msra.mxu0 0.0
    %2184 = vmatprep.subr.mxu0 0.0
    %2185 = vmatpush1.xpose.msra.mxu0 0.0
    %2186 = vmatprep.subr.mxu0 0.0
    %2187 = vmatpush1.xpose.msra.mxu0 0.0
    %2188 = vmatprep.subr.mxu0 0.0
    %2189 = vmatpush1.xpose.msra.mxu0 %v2156
    %2190 = vmatprep.subr.mxu0 0.0
    %2191 = vmatpush2.xpose.msra.mxu0 0.0
    %2192 = vmatprep.subr.mxu0 0.0
    %2193 = vmatpush2.xpose.msra.mxu0 0.0
    %2194 = vmatprep.subr.mxu0 0.0
    %2195 = vmatpush2.xpose.msra.mxu0 0.0
    %2196 = vmatprep.subr.mxu0 0.0
    %2197 = vmatpush2.xpose.msra.mxu0 0.0
    %2198 = vmatprep.subr.mxu0 0.0
    %2199 = vmatpush2.xpose.msra.mxu0 0.0
    %2200 = vmatprep.subr.mxu0 0.0
    %2201 = vmatpush2.xpose.msra.mxu0 0.0
    %2202 = vmatprep.subr.mxu0 0.0
    %2203 = vmatpush2.xpose.msra.mxu0 0.0
    %2204 = vmatprep.subr.mxu0 0.0
    %2205 = vmatpush2.xpose.msra.mxu0 0.0
    %2206 = vmatprep.subr.mxu0 0.0
    %2207 = vmatpush2.xpose.msra.mxu0 0.0
    %2208 = vmatprep.subr.mxu0 0.0
    %2209 = vmatpush2.xpose.msra.mxu0 0.0
    %2210 = vmatprep.subr.mxu0 0.0
    %2211 = vmatpush2.xpose.msra.mxu0 0.0
    %2212 = vmatprep.subr.mxu0 0.0
    %2213 = vmatpush2.xpose.msra.mxu0 0.0
    %2214 = vmatprep.subr.mxu0 0.0
    %2215 = vmatpush2.xpose.msra.mxu0 0.0
    %2216 = vmatprep.subr.mxu0 0.0
    %2217 = vmatpush2.xpose.msra.mxu0 0.0
    %2218 = vmatprep.subr.mxu0 0.0
    %2219 = vmatpush2.xpose.msra.mxu0 0.0
    %2220 = vmatprep.subr.mxu0 0.0
    %2221 = vmatpush2.xpose.msra.mxu0 0.0
    %2222 = vmatprep.mubr.f32.mxu0 0.0
    %2223 = vmatmul.mubr.f32.gmra.mxu0 %v2154
    %v2224 = vpop.f32.mrf.mxu0
    %v2225 = vadd.f32 0.0, %v2224
    %v2226 = vpop.f32.mrf.mxu0
    %2227 = vdwg.mxu0
    %v2228 = vsel %vm334, %v2225, -inf
    %2229 = vmax.xlane.f32.xlu0 %v2228
    %v2230 = vpop.xlane.xlu0 %2229
    %v2231 = vsub.f32 %v2225, %v2230
    %v2232 = vmul.f32 %v2231, 1.442695
    %v2233 = vpow.pop %v2232
    %v2234 = vsel %vm334, %v2233, 0.0
    %2235 = vadd.xlane.f32.xlu0 %v2234
    %v2236 = vpop.xlane.xlu0 %2235
    %v2237 = vrcp.pop %v2236
    %v2238 = vmul.f32 %v2233, %v2237
    %2239 = vrot.lane.b32.xlu0 %v2143, 64
    %v2240 = vpop.permute.xlu0 %2239
    %v2243 = vsel %vm334, %v2238, 0
    %2245 = vmatprep.subr.mxu0 0.0
    %2246 = vmatpush1.msra.mxu0 0.0
    %2247 = vmatprep.subr.mxu0 0.0
    %2248 = vmatpush1.msra.mxu0 0.0
    %2249 = vmatprep.subr.mxu0 0.0
    %2250 = vmatpush1.msra.mxu0 0.0
    %2251 = vmatprep.subr.mxu0 0.0
    %2252 = vmatpush1.msra.mxu0 0.0
    %2253 = vmatprep.subr.mxu0 0.0
    %2254 = vmatpush1.msra.mxu0 0.0
    %2255 = vmatprep.subr.mxu0 0.0
    %2256 = vmatpush1.msra.mxu0 0.0
    %2257 = vmatprep.subr.mxu0 0.0
    %2258 = vmatpush1.msra.mxu0 0.0
    %2259 = vmatprep.subr.mxu0 0.0
    %2260 = vmatpush1.msra.mxu0 0.0
    %2261 = vmatprep.subr.mxu0 0.0
    %2262 = vmatpush1.msra.mxu0 0.0
    %2263 = vmatprep.subr.mxu0 0.0
    %2264 = vmatpush1.msra.mxu0 0.0
    %2265 = vmatprep.subr.mxu0 0.0
    %2266 = vmatpush1.msra.mxu0 0.0
    %2267 = vmatprep.subr.mxu0 0.0
    %2268 = vmatpush1.msra.mxu0 0.0
    %2269 = vmatprep.subr.mxu0 0.0
    %2270 = vmatpush1.msra.mxu0 0.0
    %2271 = vmatprep.subr.mxu0 0.0
    %2272 = vmatpush1.msra.mxu0 0.0
    %2273 = vmatprep.subr.mxu0 0.0
    %2274 = vmatpush1.msra.mxu0 0.0
    %2275 = vmatprep.subr.mxu0 0.0
    %2276 = vmatpush1.msra.mxu0 %v2240
    %2277 = vmatprep.subr.mxu0 0.0
    %2278 = vmatpush2.msra.mxu0 0.0
    %2279 = vmatprep.subr.mxu0 0.0
    %2280 = vmatpush2.msra.mxu0 0.0
    %2281 = vmatprep.subr.mxu0 0.0
    %2282 = vmatpush2.msra.mxu0 0.0
    %2283 = vmatprep.subr.mxu0 0.0
    %2284 = vmatpush2.msra.mxu0 0.0
    %2285 = vmatprep.subr.mxu0 0.0
    %2286 = vmatpush2.msra.mxu0 0.0
    %2287 = vmatprep.subr.mxu0 0.0
    %2288 = vmatpush2.msra.mxu0 0.0
    %2289 = vmatprep.subr.mxu0 0.0
    %2290 = vmatpush2.msra.mxu0 0.0
    %2291 = vmatprep.subr.mxu0 0.0
    %2292 = vmatpush2.msra.mxu0 0.0
    %2293 = vmatprep.subr.mxu0 0.0
    %2294 = vmatpush2.msra.mxu0 0.0
    %2295 = vmatprep.subr.mxu0 0.0
    %2296 = vmatpush2.msra.mxu0 0.0
    %2297 = vmatprep.subr.mxu0 0.0
    %2298 = vmatpush2.msra.mxu0 0.0
    %2299 = vmatprep.subr.mxu0 0.0
    %2300 = vmatpush2.msra.mxu0 0.0
    %2301 = vmatprep.subr.mxu0 0.0
    %2302 = vmatpush2.msra.mxu0 0.0
    %2303 = vmatprep.subr.mxu0 0.0
    %2304 = vmatpush2.msra.mxu0 0.0
    %2305 = vmatprep.subr.mxu0 0.0
    %2306 = vmatpush2.msra.mxu0 0.0
    %2307 = vmatprep.subr.mxu0 0.0
    %2308 = vmatpush2.msra.mxu0 0.0
    %2309 = vmatprep.mubr.f32.mxu0 0.0
    %2310 = vmatmul.mubr.f32.gmra.mxu0 %v2243
    %v2311 = vpop.f32.mrf.mxu0
    %v2312 = vadd.f32 0.0, %v2311
    %v2313 = vpop.f32.mrf.mxu0
    %2314 = vdwg.mxu0
    %2315 = vrot.lane.b32.xlu0 %v2143, 120
    %v2316 = vpop.permute.xlu0 %2315
    %2317 = vrot.lane.b32.xlu0 %v2143, 88
    %v2318 = vpop.permute.xlu0 %2317
    %v2319 = vsel %vm334, %v2316, 0
    %v2321 = vsel %vm334, %v2318, 0
    %2323 = vmatprep.subr.mxu0 0.0
    %2324 = vmatpush1.xpose.msra.mxu0 0.0
    %2325 = vmatprep.subr.mxu0 0.0
    %2326 = vmatpush1.xpose.msra.mxu0 0.0
    %2327 = vmatprep.subr.mxu0 0.0
    %2328 = vmatpush1.xpose.msra.mxu0 0.0
    %2329 = vmatprep.subr.mxu0 0.0
    %2330 = vmatpush1.xpose.msra.mxu0 0.0
    %2331 = vmatprep.subr.mxu0 0.0
    %2332 = vmatpush1.xpose.msra.mxu0 0.0
    %2333 = vmatprep.subr.mxu0 0.0
    %2334 = vmatpush1.xpose.msra.mxu0 0.0
    %2335 = vmatprep.subr.mxu0 0.0
    %2336 = vmatpush1.xpose.msra.mxu0 0.0
    %2337 = vmatprep.subr.mxu0 0.0
    %2338 = vmatpush1.xpose.msra.mxu0 0.0
    %2339 = vmatprep.subr.mxu0 0.0
    %2340 = vmatpush1.xpose.msra.mxu0 0.0
    %2341 = vmatprep.subr.mxu0 0.0
    %2342 = vmatpush1.xpose.msra.mxu0 0.0
    %2343 = vmatprep.subr.mxu0 0.0
    %2344 = vmatpush1.xpose.msra.mxu0 0.0
    %2345 = vmatprep.subr.mxu0 0.0
    %2346 = vmatpush1.xpose.msra.mxu0 0.0
    %2347 = vmatprep.subr.mxu0 0.0
    %2348 = vmatpush1.xpose.msra.mxu0 0.0
    %2349 = vmatprep.subr.mxu0 0.0
    %2350 = vmatpush1.xpose.msra.mxu0 0.0
    %2351 = vmatprep.subr.mxu0 0.0
    %2352 = vmatpush1.xpose.msra.mxu0 0.0
    %2353 = vmatprep.subr.mxu0 0.0
    %2354 = vmatpush1.xpose.msra.mxu0 %v2321
    %2355 = vmatprep.subr.mxu0 0.0
    %2356 = vmatpush2.xpose.msra.mxu0 0.0
    %2357 = vmatprep.subr.mxu0 0.0
    %2358 = vmatpush2.xpose.msra.mxu0 0.0
    %2359 = vmatprep.subr.mxu0 0.0
    %2360 = vmatpush2.xpose.msra.mxu0 0.0
    %2361 = vmatprep.subr.mxu0 0.0
    %2362 = vmatpush2.xpose.msra.mxu0 0.0
    %2363 = vmatprep.subr.mxu0 0.0
    %2364 = vmatpush2.xpose.msra.mxu0 0.0
    %2365 = vmatprep.subr.mxu0 0.0
    %2366 = vmatpush2.xpose.msra.mxu0 0.0
    %2367 = vmatprep.subr.mxu0 0.0
    %2368 = vmatpush2.xpose.msra.mxu0 0.0
    %2369 = vmatprep.subr.mxu0 0.0
    %2370 = vmatpush2.xpose.msra.mxu0 0.0
    %2371 = vmatprep.subr.mxu0 0.0
    %2372 = vmatpush2.xpose.msra.mxu0 0.0
    %2373 = vmatprep.subr.mxu0 0.0
    %2374 = vmatpush2.xpose.msra.mxu0 0.0
    %2375 = vmatprep.subr.mxu0 0.0
    %2376 = vmatpush2.xpose.msra.mxu0 0.0
    %2377 = vmatprep.subr.mxu0 0.0
    %2378 = vmatpush2.xpose.msra.mxu0 0.0
    %2379 = vmatprep.subr.mxu0 0.0
    %2380 = vmatpush2.xpose.msra.mxu0 0.0
    %2381 = vmatprep.subr.mxu0 0.0
    %2382 = vmatpush2.xpose.msra.mxu0 0.0
    %2383 = vmatprep.subr.mxu0 0.0
    %2384 = vmatpush2.xpose.msra.mxu0 0.0
    %2385 = vmatprep.subr.mxu0 0.0
    %2386 = vmatpush2.xpose.msra.mxu0 0.0
    %2387 = vmatprep.mubr.f32.mxu0 0.0
    %2388 = vmatmul.mubr.f32.gmra.mxu0 %v2319
    %v2389 = vpop.f32.mrf.mxu0
    %v2390 = vadd.f32 0.0, %v2389
    %v2391 = vpop.f32.mrf.mxu0
    %2392 = vdwg.mxu0
    %v2393 = vsel %vm334, %v2390, -inf
    %2394 = vmax.xlane.f32.xlu0 %v2393
    %v2395 = vpop.xlane.xlu0 %2394
    %v2396 = vsub.f32 %v2390, %v2395
    %v2397 = vmul.f32 %v2396, 1.442695
    %v2398 = vpow.pop %v2397
    %v2399 = vsel %vm334, %v2398, 0.0
    %2400 = vadd.xlane.f32.xlu0 %v2399
    %v2401 = vpop.xlane.xlu0 %2400
    %v2402 = vrcp.pop %v2401
    %v2403 = vmul.f32 %v2398, %v2402
    %2404 = vrot.lane.b32.xlu0 %v2143, 56
    %v2405 = vpop.permute.xlu0 %2404
    %v2408 = vsel %vm334, %v2403, 0
    %2410 = vmatprep.subr.mxu0 0.0
    %2411 = vmatpush1.msra.mxu0 0.0
    %2412 = vmatprep.subr.mxu0 0.0
    %2413 = vmatpush1.msra.mxu0 0.0
    %2414 = vmatprep.subr.mxu0 0.0
    %2415 = vmatpush1.msra.mxu0 0.0
    %2416 = vmatprep.subr.mxu0 0.0
    %2417 = vmatpush1.msra.mxu0 0.0
    %2418 = vmatprep.subr.mxu0 0.0
    %2419 = vmatpush1.msra.mxu0 0.0
    %2420 = vmatprep.subr.mxu0 0.0
    %2421 = vmatpush1.msra.mxu0 0.0
    %2422 = vmatprep.subr.mxu0 0.0
    %2423 = vmatpush1.msra.mxu0 0.0
    %2424 = vmatprep.subr.mxu0 0.0
    %2425 = vmatpush1.msra.mxu0 0.0
    %2426 = vmatprep.subr.mxu0 0.0
    %2427 = vmatpush1.msra.mxu0 0.0
    %2428 = vmatprep.subr.mxu0 0.0
    %2429 = vmatpush1.msra.mxu0 0.0
    %2430 = vmatprep.subr.mxu0 0.0
    %2431 = vmatpush1.msra.mxu0 0.0
    %2432 = vmatprep.subr.mxu0 0.0
    %2433 = vmatpush1.msra.mxu0 0.0
    %2434 = vmatprep.subr.mxu0 0.0
    %2435 = vmatpush1.msra.mxu0 0.0
    %2436 = vmatprep.subr.mxu0 0.0
    %2437 = vmatpush1.msra.mxu0 0.0
    %2438 = vmatprep.subr.mxu0 0.0
    %2439 = vmatpush1.msra.mxu0 0.0
    %2440 = vmatprep.subr.mxu0 0.0
    %2441 = vmatpush1.msra.mxu0 %v2405
    %2442 = vmatprep.subr.mxu0 0.0
    %2443 = vmatpush2.msra.mxu0 0.0
    %2444 = vmatprep.subr.mxu0 0.0
    %2445 = vmatpush2.msra.mxu0 0.0
    %2446 = vmatprep.subr.mxu0 0.0
    %2447 = vmatpush2.msra.mxu0 0.0
    %2448 = vmatprep.subr.mxu0 0.0
    %2449 = vmatpush2.msra.mxu0 0.0
    %2450 = vmatprep.subr.mxu0 0.0
    %2451 = vmatpush2.msra.mxu0 0.0
    %2452 = vmatprep.subr.mxu0 0.0
    %2453 = vmatpush2.msra.mxu0 0.0
    %2454 = vmatprep.subr.mxu0 0.0
    %2455 = vmatpush2.msra.mxu0 0.0
    %2456 = vmatprep.subr.mxu0 0.0
    %2457 = vmatpush2.msra.mxu0 0.0
    %2458 = vmatprep.subr.mxu0 0.0
    %2459 = vmatpush2.msra.mxu0 0.0
    %2460 = vmatprep.subr.mxu0 0.0
    %2461 = vmatpush2.msra.mxu0 0.0
    %2462 = vmatprep.subr.mxu0 0.0
    %2463 = vmatpush2.msra.mxu0 0.0
    %2464 = vmatprep.subr.mxu0 0.0
    %2465 = vmatpush2.msra.mxu0 0.0
    %2466 = vmatprep.subr.mxu0 0.0
    %2467 = vmatpush2.msra.mxu0 0.0
    %2468 = vmatprep.subr.mxu0 0.0
    %2469 = vmatpush2.msra.mxu0 0.0
    %2470 = vmatprep.subr.mxu0 0.0
    %2471 = vmatpush2.msra.mxu0 0.0
    %2472 = vmatprep.subr.mxu0 0.0
    %2473 = vmatpush2.msra.mxu0 0.0
    %2474 = vmatprep.mubr.f32.mxu0 0.0
    %2475 = vmatmul.mubr.f32.gmra.mxu0 %v2408
    %v2476 = vpop.f32.mrf.mxu0
    %v2477 = vadd.f32 0.0, %v2476
    %v2478 = vpop.f32.mrf.mxu0
    %2479 = vdwg.mxu0
    %2480 = vrot.lane.b32.xlu0 %v2143, 112
    %v2481 = vpop.permute.xlu0 %2480
    %2482 = vrot.lane.b32.xlu0 %v2143, 80
    %v2483 = vpop.permute.xlu0 %2482
    %v2484 = vsel %vm334, %v2481, 0
    %v2486 = vsel %vm334, %v2483, 0
    %2488 = vmatprep.subr.mxu0 0.0
    %2489 = vmatpush1.xpose.msra.mxu0 0.0
    %2490 = vmatprep.subr.mxu0 0.0
    %2491 = vmatpush1.xpose.msra.mxu0 0.0
    %2492 = vmatprep.subr.mxu0 0.0
    %2493 = vmatpush1.xpose.msra.mxu0 0.0
    %2494 = vmatprep.subr.mxu0 0.0
    %2495 = vmatpush1.xpose.msra.mxu0 0.0
    %2496 = vmatprep.subr.mxu0 0.0
    %2497 = vmatpush1.xpose.msra.mxu0 0.0
    %2498 = vmatprep.subr.mxu0 0.0
    %2499 = vmatpush1.xpose.msra.mxu0 0.0
    %2500 = vmatprep.subr.mxu0 0.0
    %2501 = vmatpush1.xpose.msra.mxu0 0.0
    %2502 = vmatprep.subr.mxu0 0.0
    %2503 = vmatpush1.xpose.msra.mxu0 0.0
    %2504 = vmatprep.subr.mxu0 0.0
    %2505 = vmatpush1.xpose.msra.mxu0 0.0
    %2506 = vmatprep.subr.mxu0 0.0
    %2507 = vmatpush1.xpose.msra.mxu0 0.0
    %2508 = vmatprep.subr.mxu0 0.0
    %2509 = vmatpush1.xpose.msra.mxu0 0.0
    %2510 = vmatprep.subr.mxu0 0.0
    %2511 = vmatpush1.xpose.msra.mxu0 0.0
    %2512 = vmatprep.subr.mxu0 0.0
    %2513 = vmatpush1.xpose.msra.mxu0 0.0
    %2514 = vmatprep.subr.mxu0 0.0
    %2515 = vmatpush1.xpose.msra.mxu0 0.0
    %2516 = vmatprep.subr.mxu0 0.0
    %2517 = vmatpush1.xpose.msra.mxu0 0.0
    %2518 = vmatprep.subr.mxu0 0.0
    %2519 = vmatpush1.xpose.msra.mxu0 %v2486
    %2520 = vmatprep.subr.mxu0 0.0
    %2521 = vmatpush2.xpose.msra.mxu0 0.0
    %2522 = vmatprep.subr.mxu0 0.0
    %2523 = vmatpush2.xpose.msra.mxu0 0.0
    %2524 = vmatprep.subr.mxu0 0.0
    %2525 = vmatpush2.xpose.msra.mxu0 0.0
    %2526 = vmatprep.subr.mxu0 0.0
    %2527 = vmatpush2.xpose.msra.mxu0 0.0
    %2528 = vmatprep.subr.mxu0 0.0
    %2529 = vmatpush2.xpose.msra.mxu0 0.0
    %2530 = vmatprep.subr.mxu0 0.0
    %2531 = vmatpush2.xpose.msra.mxu0 0.0
    %2532 = vmatprep.subr.mxu0 0.0
    %2533 = vmatpush2.xpose.msra.mxu0 0.0
    %2534 = vmatprep.subr.mxu0 0.0
    %2535 = vmatpush2.xpose.msra.mxu0 0.0
    %2536 = vmatprep.subr.mxu0 0.0
    %2537 = vmatpush2.xpose.msra.mxu0 0.0
    %2538 = vmatprep.subr.mxu0 0.0
    %2539 = vmatpush2.xpose.msra.mxu0 0.0
    %2540 = vmatprep.subr.mxu0 0.0
    %2541 = vmatpush2.xpose.msra.mxu0 0.0
    %2542 = vmatprep.subr.mxu0 0.0
    %2543 = vmatpush2.xpose.msra.mxu0 0.0
    %2544 = vmatprep.subr.mxu0 0.0
    %2545 = vmatpush2.xpose.msra.mxu0 0.0
    %2546 = vmatprep.subr.mxu0 0.0
    %2547 = vmatpush2.xpose.msra.mxu0 0.0
    %2548 = vmatprep.subr.mxu0 0.0
    %2549 = vmatpush2.xpose.msra.mxu0 0.0
    %2550 = vmatprep.subr.mxu0 0.0
    %2551 = vmatpush2.xpose.msra.mxu0 0.0
    %2552 = vmatprep.mubr.f32.mxu0 0.0
    %2553 = vmatmul.mubr.f32.gmra.mxu0 %v2484
    %v2554 = vpop.f32.mrf.mxu0
    %v2555 = vadd.f32 0.0, %v2554
    %v2556 = vpop.f32.mrf.mxu0
    %2557 = vdwg.mxu0
    %v2558 = vsel %vm334, %v2555, -inf
    %2559 = vmax.xlane.f32.xlu0 %v2558
    %v2560 = vpop.xlane.xlu0 %2559
    %v2561 = vsub.f32 %v2555, %v2560
    %v2562 = vmul.f32 %v2561, 1.442695
    %v2563 = vpow.pop %v2562
    %v2564 = vsel %vm334, %v2563, 0.0
    %2565 = vadd.xlane.f32.xlu0 %v2564
    %v2566 = vpop.xlane.xlu0 %2565
    %v2567 = vrcp.pop %v2566
    %v2568 = vmul.f32 %v2563, %v2567
    %2569 = vrot.lane.b32.xlu0 %v2143, 48
    %v2570 = vpop.permute.xlu0 %2569
    %v2573 = vsel %vm334, %v2568, 0
    %2575 = vmatprep.subr.mxu0 0.0
    %2576 = vmatpush1.msra.mxu0 0.0
    %2577 = vmatprep.subr.mxu0 0.0
    %2578 = vmatpush1.msra.mxu0 0.0
    %2579 = vmatprep.subr.mxu0 0.0
    %2580 = vmatpush1.msra.mxu0 0.0
    %2581 = vmatprep.subr.mxu0 0.0
    %2582 = vmatpush1.msra.mxu0 0.0
    %2583 = vmatprep.subr.mxu0 0.0
    %2584 = vmatpush1.msra.mxu0 0.0
    %2585 = vmatprep.subr.mxu0 0.0
    %2586 = vmatpush1.msra.mxu0 0.0
    %2587 = vmatprep.subr.mxu0 0.0
    %2588 = vmatpush1.msra.mxu0 0.0
    %2589 = vmatprep.subr.mxu0 0.0
    %2590 = vmatpush1.msra.mxu0 0.0
    %2591 = vmatprep.subr.mxu0 0.0
    %2592 = vmatpush1.msra.mxu0 0.0
    %2593 = vmatprep.subr.mxu0 0.0
    %2594 = vmatpush1.msra.mxu0 0.0
    %2595 = vmatprep.subr.mxu0 0.0
    %2596 = vmatpush1.msra.mxu0 0.0
    %2597 = vmatprep.subr.mxu0 0.0
    %2598 = vmatpush1.msra.mxu0 0.0
    %2599 = vmatprep.subr.mxu0 0.0
    %2600 = vmatpush1.msra.mxu0 0.0
    %2601 = vmatprep.subr.mxu0 0.0
    %2602 = vmatpush1.msra.mxu0 0.0
    %2603 = vmatprep.subr.mxu0 0.0
    %2604 = vmatpush1.msra.mxu0 0.0
    %2605 = vmatprep.subr.mxu0 0.0
    %2606 = vmatpush1.msra.mxu0 %v2570
    %2607 = vmatprep.subr.mxu0 0.0
    %2608 = vmatpush2.msra.mxu0 0.0
    %2609 = vmatprep.subr.mxu0 0.0
    %2610 = vmatpush2.msra.mxu0 0.0
    %2611 = vmatprep.subr.mxu0 0.0
    %2612 = vmatpush2.msra.mxu0 0.0
    %2613 = vmatprep.subr.mxu0 0.0
    %2614 = vmatpush2.msra.mxu0 0.0
    %2615 = vmatprep.subr.mxu0 0.0
    %2616 = vmatpush2.msra.mxu0 0.0
    %2617 = vmatprep.subr.mxu0 0.0
    %2618 = vmatpush2.msra.mxu0 0.0
    %2619 = vmatprep.subr.mxu0 0.0
    %2620 = vmatpush2.msra.mxu0 0.0
    %2621 = vmatprep.subr.mxu0 0.0
    %2622 = vmatpush2.msra.mxu0 0.0
    %2623 = vmatprep.subr.mxu0 0.0
    %2624 = vmatpush2.msra.mxu0 0.0
    %2625 = vmatprep.subr.mxu0 0.0
    %2626 = vmatpush2.msra.mxu0 0.0
    %2627 = vmatprep.subr.mxu0 0.0
    %2628 = vmatpush2.msra.mxu0 0.0
    %2629 = vmatprep.subr.mxu0 0.0
    %2630 = vmatpush2.msra.mxu0 0.0
    %2631 = vmatprep.subr.mxu0 0.0
    %2632 = vmatpush2.msra.mxu0 0.0
    %2633 = vmatprep.subr.mxu0 0.0
    %2634 = vmatpush2.msra.mxu0 0.0
    %2635 = vmatprep.subr.mxu0 0.0
    %2636 = vmatpush2.msra.mxu0 0.0
    %2637 = vmatprep.subr.mxu0 0.0
    %2638 = vmatpush2.msra.mxu0 0.0
    %2639 = vmatprep.mubr.f32.mxu0 0.0
    %2640 = vmatmul.mubr.f32.gmra.mxu0 %v2573
    %v2641 = vpop.f32.mrf.mxu0
    %v2642 = vadd.f32 0.0, %v2641
    %v2643 = vpop.f32.mrf.mxu0
    %2644 = vdwg.mxu0
    %2645 = vrot.lane.b32.xlu0 %v2143, 104
    %v2646 = vpop.permute.xlu0 %2645
    %2647 = vrot.lane.b32.xlu0 %v2143, 72
    %v2648 = vpop.permute.xlu0 %2647
    %v2649 = vsel %vm334, %v2646, 0
    %v2651 = vsel %vm334, %v2648, 0
    %2653 = vmatprep.subr.mxu0 0.0
    %2654 = vmatpush1.xpose.msra.mxu0 0.0
    %2655 = vmatprep.subr.mxu0 0.0
    %2656 = vmatpush1.xpose.msra.mxu0 0.0
    %2657 = vmatprep.subr.mxu0 0.0
    %2658 = vmatpush1.xpose.msra.mxu0 0.0
    %2659 = vmatprep.subr.mxu0 0.0
    %2660 = vmatpush1.xpose.msra.mxu0 0.0
    %2661 = vmatprep.subr.mxu0 0.0
    %2662 = vmatpush1.xpose.msra.mxu0 0.0
    %2663 = vmatprep.subr.mxu0 0.0
    %2664 = vmatpush1.xpose.msra.mxu0 0.0
    %2665 = vmatprep.subr.mxu0 0.0
    %2666 = vmatpush1.xpose.msra.mxu0 0.0
    %2667 = vmatprep.subr.mxu0 0.0
    %2668 = vmatpush1.xpose.msra.mxu0 0.0
    %2669 = vmatprep.subr.mxu0 0.0
    %2670 = vmatpush1.xpose.msra.mxu0 0.0
    %2671 = vmatprep.subr.mxu0 0.0
    %2672 = vmatpush1.xpose.msra.mxu0 0.0
    %2673 = vmatprep.subr.mxu0 0.0
    %2674 = vmatpush1.xpose.msra.mxu0 0.0
    %2675 = vmatprep.subr.mxu0 0.0
    %2676 = vmatpush1.xpose.msra.mxu0 0.0
    %2677 = vmatprep.subr.mxu0 0.0
    %2678 = vmatpush1.xpose.msra.mxu0 0.0
    %2679 = vmatprep.subr.mxu0 0.0
    %2680 = vmatpush1.xpose.msra.mxu0 0.0
    %2681 = vmatprep.subr.mxu0 0.0
    %2682 = vmatpush1.xpose.msra.mxu0 0.0
    %2683 = vmatprep.subr.mxu0 0.0
    %2684 = vmatpush1.xpose.msra.mxu0 %v2651
    %2685 = vmatprep.subr.mxu0 0.0
    %2686 = vmatpush2.xpose.msra.mxu0 0.0
    %2687 = vmatprep.subr.mxu0 0.0
    %2688 = vmatpush2.xpose.msra.mxu0 0.0
    %2689 = vmatprep.subr.mxu0 0.0
    %2690 = vmatpush2.xpose.msra.mxu0 0.0
    %2691 = vmatprep.subr.mxu0 0.0
    %2692 = vmatpush2.xpose.msra.mxu0 0.0
    %2693 = vmatprep.subr.mxu0 0.0
    %2694 = vmatpush2.xpose.msra.mxu0 0.0
    %2695 = vmatprep.subr.mxu0 0.0
    %2696 = vmatpush2.xpose.msra.mxu0 0.0
    %2697 = vmatprep.subr.mxu0 0.0
    %2698 = vmatpush2.xpose.msra.mxu0 0.0
    %2699 = vmatprep.subr.mxu0 0.0
    %2700 = vmatpush2.xpose.msra.mxu0 0.0
    %2701 = vmatprep.subr.mxu0 0.0
    %2702 = vmatpush2.xpose.msra.mxu0 0.0
    %2703 = vmatprep.subr.mxu0 0.0
    %2704 = vmatpush2.xpose.msra.mxu0 0.0
    %2705 = vmatprep.subr.mxu0 0.0
    %2706 = vmatpush2.xpose.msra.mxu0 0.0
    %2707 = vmatprep.subr.mxu0 0.0
    %2708 = vmatpush2.xpose.msra.mxu0 0.0
    %2709 = vmatprep.subr.mxu0 0.0
    %2710 = vmatpush2.xpose.msra.mxu0 0.0
    %2711 = vmatprep.subr.mxu0 0.0
    %2712 = vmatpush2.xpose.msra.mxu0 0.0
    %2713 = vmatprep.subr.mxu0 0.0
    %2714 = vmatpush2.xpose.msra.mxu0 0.0
    %2715 = vmatprep.subr.mxu0 0.0
    %2716 = vmatpush2.xpose.msra.mxu0 0.0
    %2717 = vmatprep.mubr.f32.mxu0 0.0
    %2718 = vmatmul.mubr.f32.gmra.mxu0 %v2649
    %v2719 = vpop.f32.mrf.mxu0
    %v2720 = vadd.f32 0.0, %v2719
    %v2721 = vpop.f32.mrf.mxu0
    %2722 = vdwg.mxu0
    %v2723 = vsel %vm334, %v2720, -inf
    %2724 = vmax.xlane.f32.xlu0 %v2723
    %v2725 = vpop.xlane.xlu0 %2724
    %v2726 = vsub.f32 %v2720, %v2725
    %v2727 = vmul.f32 %v2726, 1.442695
    %v2728 = vpow.pop %v2727
    %v2729 = vsel %vm334, %v2728, 0.0
    %2730 = vadd.xlane.f32.xlu0 %v2729
    %v2731 = vpop.xlane.xlu0 %2730
    %v2732 = vrcp.pop %v2731
    %v2733 = vmul.f32 %v2728, %v2732
    %2734 = vrot.lane.b32.xlu0 %v2143, 40
    %v2735 = vpop.permute.xlu0 %2734
    %v2738 = vsel %vm334, %v2733, 0
    %2740 = vmatprep.subr.mxu0 0.0
    %2741 = vmatpush1.msra.mxu0 0.0
    %2742 = vmatprep.subr.mxu0 0.0
    %2743 = vmatpush1.msra.mxu0 0.0
    %2744 = vmatprep.subr.mxu0 0.0
    %2745 = vmatpush1.msra.mxu0 0.0
    %2746 = vmatprep.subr.mxu0 0.0
    %2747 = vmatpush1.msra.mxu0 0.0
    %2748 = vmatprep.subr.mxu0 0.0
    %2749 = vmatpush1.msra.mxu0 0.0
    %2750 = vmatprep.subr.mxu0 0.0
    %2751 = vmatpush1.msra.mxu0 0.0
    %2752 = vmatprep.subr.mxu0 0.0
    %2753 = vmatpush1.msra.mxu0 0.0
    %2754 = vmatprep.subr.mxu0 0.0
    %2755 = vmatpush1.msra.mxu0 0.0
    %2756 = vmatprep.subr.mxu0 0.0
    %2757 = vmatpush1.msra.mxu0 0.0
    %2758 = vmatprep.subr.mxu0 0.0
    %2759 = vmatpush1.msra.mxu0 0.0
    %2760 = vmatprep.subr.mxu0 0.0
    %2761 = vmatpush1.msra.mxu0 0.0
    %2762 = vmatprep.subr.mxu0 0.0
    %2763 = vmatpush1.msra.mxu0 0.0
    %2764 = vmatprep.subr.mxu0 0.0
    %2765 = vmatpush1.msra.mxu0 0.0
    %2766 = vmatprep.subr.mxu0 0.0
    %2767 = vmatpush1.msra.mxu0 0.0
    %2768 = vmatprep.subr.mxu0 0.0
    %2769 = vmatpush1.msra.mxu0 0.0
    %2770 = vmatprep.subr.mxu0 0.0
    %2771 = vmatpush1.msra.mxu0 %v2735
    %2772 = vmatprep.subr.mxu0 0.0
    %2773 = vmatpush2.msra.mxu0 0.0
    %2774 = vmatprep.subr.mxu0 0.0
    %2775 = vmatpush2.msra.mxu0 0.0
    %2776 = vmatprep.subr.mxu0 0.0
    %2777 = vmatpush2.msra.mxu0 0.0
    %2778 = vmatprep.subr.mxu0 0.0
    %2779 = vmatpush2.msra.mxu0 0.0
    %2780 = vmatprep.subr.mxu0 0.0
    %2781 = vmatpush2.msra.mxu0 0.0
    %2782 = vmatprep.subr.mxu0 0.0
    %2783 = vmatpush2.msra.mxu0 0.0
    %2784 = vmatprep.subr.mxu0 0.0
    %2785 = vmatpush2.msra.mxu0 0.0
    %2786 = vmatprep.subr.mxu0 0.0
    %2787 = vmatpush2.msra.mxu0 0.0
    %2788 = vmatprep.subr.mxu0 0.0
    %2789 = vmatpush2.msra.mxu0 0.0
    %2790 = vmatprep.subr.mxu0 0.0
    %2791 = vmatpush2.msra.mxu0 0.0
    %2792 = vmatprep.subr.mxu0 0.0
    %2793 = vmatpush2.msra.mxu0 0.0
    %2794 = vmatprep.subr.mxu0 0.0
    %2795 = vmatpush2.msra.mxu0 0.0
    %2796 = vmatprep.subr.mxu0 0.0
    %2797 = vmatpush2.msra.mxu0 0.0
    %2798 = vmatprep.subr.mxu0 0.0
    %2799 = vmatpush2.msra.mxu0 0.0
    %2800 = vmatprep.subr.mxu0 0.0
    %2801 = vmatpush2.msra.mxu0 0.0
    %2802 = vmatprep.subr.mxu0 0.0
    %2803 = vmatpush2.msra.mxu0 0.0
    %2804 = vmatprep.mubr.f32.mxu0 0.0
    %2805 = vmatmul.mubr.f32.gmra.mxu0 %v2738
    %v2806 = vpop.f32.mrf.mxu0
    %v2807 = vadd.f32 0.0, %v2806
    %v2808 = vpop.f32.mrf.mxu0
    %2809 = vdwg.mxu0
    %2811 = vrot.lane.b32.xlu0 %v2477, 8
    %v2812 = vpop.permute.xlu0 %2811
    %2815 = vrot.lane.b32.xlu0 %v2642, 16
    %v2816 = vpop.permute.xlu0 %2815
    %2819 = vrot.lane.b32.xlu0 %v2807, 24
    %v2820 = vpop.permute.xlu0 %2819
    %v2822 = vsel %vm334, %v2312, %v2812
    %v2823 = vsel %vm1004, %v2822, %v2816
    %v2824 = vsel %vm1006, %v2823, %v2820
    %2826 = vrot.lane.b32.xlu0 %v2148, 96
    %v2827 = vpop.permute.xlu0 %2826
    %v2828 = vsel %vm334, %v2148, 0
    %v2830 = vsel %vm334, %v2827, 0
    %2832 = vmatprep.subr.mxu0 0.0
    %2833 = vmatpush1.xpose.msra.mxu0 0.0
    %2834 = vmatprep.subr.mxu0 0.0
    %2835 = vmatpush1.xpose.msra.mxu0 0.0
    %2836 = vmatprep.subr.mxu0 0.0
    %2837 = vmatpush1.xpose.msra.mxu0 0.0
    %2838 = vmatprep.subr.mxu0 0.0
    %2839 = vmatpush1.xpose.msra.mxu0 0.0
    %2840 = vmatprep.subr.mxu0 0.0
    %2841 = vmatpush1.xpose.msra.mxu0 0.0
    %2842 = vmatprep.subr.mxu0 0.0
    %2843 = vmatpush1.xpose.msra.mxu0 0.0
    %2844 = vmatprep.subr.mxu0 0.0
    %2845 = vmatpush1.xpose.msra.mxu0 0.0
    %2846 = vmatprep.subr.mxu0 0.0
    %2847 = vmatpush1.xpose.msra.mxu0 0.0
    %2848 = vmatprep.subr.mxu0 0.0
    %2849 = vmatpush1.xpose.msra.mxu0 0.0
    %2850 = vmatprep.subr.mxu0 0.0
    %2851 = vmatpush1.xpose.msra.mxu0 0.0
    %2852 = vmatprep.subr.mxu0 0.0
    %2853 = vmatpush1.xpose.msra.mxu0 0.0
    %2854 = vmatprep.subr.mxu0 0.0
    %2855 = vmatpush1.xpose.msra.mxu0 0.0
    %2856 = vmatprep.subr.mxu0 0.0
    %2857 = vmatpush1.xpose.msra.mxu0 0.0
    %2858 = vmatprep.subr.mxu0 0.0
    %2859 = vmatpush1.xpose.msra.mxu0 0.0
    %2860 = vmatprep.subr.mxu0 0.0
    %2861 = vmatpush1.xpose.msra.mxu0 0.0
    %2862 = vmatprep.subr.mxu0 0.0
    %2863 = vmatpush1.xpose.msra.mxu0 %v2830
    %2864 = vmatprep.subr.mxu0 0.0
    %2865 = vmatpush2.xpose.msra.mxu0 0.0
    %2866 = vmatprep.subr.mxu0 0.0
    %2867 = vmatpush2.xpose.msra.mxu0 0.0
    %2868 = vmatprep.subr.mxu0 0.0
    %2869 = vmatpush2.xpose.msra.mxu0 0.0
    %2870 = vmatprep.subr.mxu0 0.0
    %2871 = vmatpush2.xpose.msra.mxu0 0.0
    %2872 = vmatprep.subr.mxu0 0.0
    %2873 = vmatpush2.xpose.msra.mxu0 0.0
    %2874 = vmatprep.subr.mxu0 0.0
    %2875 = vmatpush2.xpose.msra.mxu0 0.0
    %2876 = vmatprep.subr.mxu0 0.0
    %2877 = vmatpush2.xpose.msra.mxu0 0.0
    %2878 = vmatprep.subr.mxu0 0.0
    %2879 = vmatpush2.xpose.msra.mxu0 0.0
    %2880 = vmatprep.subr.mxu0 0.0
    %2881 = vmatpush2.xpose.msra.mxu0 0.0
    %2882 = vmatprep.subr.mxu0 0.0
    %2883 = vmatpush2.xpose.msra.mxu0 0.0
    %2884 = vmatprep.subr.mxu0 0.0
    %2885 = vmatpush2.xpose.msra.mxu0 0.0
    %2886 = vmatprep.subr.mxu0 0.0
    %2887 = vmatpush2.xpose.msra.mxu0 0.0
    %2888 = vmatprep.subr.mxu0 0.0
    %2889 = vmatpush2.xpose.msra.mxu0 0.0
    %2890 = vmatprep.subr.mxu0 0.0
    %2891 = vmatpush2.xpose.msra.mxu0 0.0
    %2892 = vmatprep.subr.mxu0 0.0
    %2893 = vmatpush2.xpose.msra.mxu0 0.0
    %2894 = vmatprep.subr.mxu0 0.0
    %2895 = vmatpush2.xpose.msra.mxu0 0.0
    %2896 = vmatprep.mubr.f32.mxu0 0.0
    %2897 = vmatmul.mubr.f32.gmra.mxu0 %v2828
    %v2898 = vpop.f32.mrf.mxu0
    %v2899 = vadd.f32 0.0, %v2898
    %v2900 = vpop.f32.mrf.mxu0
    %2901 = vdwg.mxu0
    %v2902 = vsel %vm334, %v2899, -inf
    %2903 = vmax.xlane.f32.xlu0 %v2902
    %v2904 = vpop.xlane.xlu0 %2903
    %v2905 = vsub.f32 %v2899, %v2904
    %v2906 = vmul.f32 %v2905, 1.442695
    %v2907 = vpow.pop %v2906
    %v2908 = vsel %vm334, %v2907, 0.0
    %2909 = vadd.xlane.f32.xlu0 %v2908
    %v2910 = vpop.xlane.xlu0 %2909
    %v2911 = vrcp.pop %v2910
    %v2912 = vmul.f32 %v2907, %v2911
    %2913 = vrot.lane.b32.xlu0 %v2148, 64
    %v2914 = vpop.permute.xlu0 %2913
    %v2917 = vsel %vm334, %v2912, 0
    %2919 = vmatprep.subr.mxu0 0.0
    %2920 = vmatpush1.msra.mxu0 0.0
    %2921 = vmatprep.subr.mxu0 0.0
    %2922 = vmatpush1.msra.mxu0 0.0
    %2923 = vmatprep.subr.mxu0 0.0
    %2924 = vmatpush1.msra.mxu0 0.0
    %2925 = vmatprep.subr.mxu0 0.0
    %2926 = vmatpush1.msra.mxu0 0.0
    %2927 = vmatprep.subr.mxu0 0.0
    %2928 = vmatpush1.msra.mxu0 0.0
    %2929 = vmatprep.subr.mxu0 0.0
    %2930 = vmatpush1.msra.mxu0 0.0
    %2931 = vmatprep.subr.mxu0 0.0
    %2932 = vmatpush1.msra.mxu0 0.0
    %2933 = vmatprep.subr.mxu0 0.0
    %2934 = vmatpush1.msra.mxu0 0.0
    %2935 = vmatprep.subr.mxu0 0.0
    %2936 = vmatpush1.msra.mxu0 0.0
    %2937 = vmatprep.subr.mxu0 0.0
    %2938 = vmatpush1.msra.mxu0 0.0
    %2939 = vmatprep.subr.mxu0 0.0
    %2940 = vmatpush1.msra.mxu0 0.0
    %2941 = vmatprep.subr.mxu0 0.0
    %2942 = vmatpush1.msra.mxu0 0.0
    %2943 = vmatprep.subr.mxu0 0.0
    %2944 = vmatpush1.msra.mxu0 0.0
    %2945 = vmatprep.subr.mxu0 0.0
    %2946 = vmatpush1.msra.mxu0 0.0
    %2947 = vmatprep.subr.mxu0 0.0
    %2948 = vmatpush1.msra.mxu0 0.0
    %2949 = vmatprep.subr.mxu0 0.0
    %2950 = vmatpush1.msra.mxu0 %v2914
    %2951 = vmatprep.subr.mxu0 0.0
    %2952 = vmatpush2.msra.mxu0 0.0
    %2953 = vmatprep.subr.mxu0 0.0
    %2954 = vmatpush2.msra.mxu0 0.0
    %2955 = vmatprep.subr.mxu0 0.0
    %2956 = vmatpush2.msra.mxu0 0.0
    %2957 = vmatprep.subr.mxu0 0.0
    %2958 = vmatpush2.msra.mxu0 0.0
    %2959 = vmatprep.subr.mxu0 0.0
    %2960 = vmatpush2.msra.mxu0 0.0
    %2961 = vmatprep.subr.mxu0 0.0
    %2962 = vmatpush2.msra.mxu0 0.0
    %2963 = vmatprep.subr.mxu0 0.0
    %2964 = vmatpush2.msra.mxu0 0.0
    %2965 = vmatprep.subr.mxu0 0.0
    %2966 = vmatpush2.msra.mxu0 0.0
    %2967 = vmatprep.subr.mxu0 0.0
    %2968 = vmatpush2.msra.mxu0 0.0
    %2969 = vmatprep.subr.mxu0 0.0
    %2970 = vmatpush2.msra.mxu0 0.0
    %2971 = vmatprep.subr.mxu0 0.0
    %2972 = vmatpush2.msra.mxu0 0.0
    %2973 = vmatprep.subr.mxu0 0.0
    %2974 = vmatpush2.msra.mxu0 0.0
    %2975 = vmatprep.subr.mxu0 0.0
    %2976 = vmatpush2.msra.mxu0 0.0
    %2977 = vmatprep.subr.mxu0 0.0
    %2978 = vmatpush2.msra.mxu0 0.0
    %2979 = vmatprep.subr.mxu0 0.0
    %2980 = vmatpush2.msra.mxu0 0.0
    %2981 = vmatprep.subr.mxu0 0.0
    %2982 = vmatpush2.msra.mxu0 0.0
    %2983 = vmatprep.mubr.f32.mxu0 0.0
    %2984 = vmatmul.mubr.f32.gmra.mxu0 %v2917
    %v2985 = vpop.f32.mrf.mxu0
    %v2986 = vadd.f32 0.0, %v2985
    %v2987 = vpop.f32.mrf.mxu0
    %2988 = vdwg.mxu0
    %2989 = vrot.lane.b32.xlu0 %v2148, 120
    %v2990 = vpop.permute.xlu0 %2989
    %2991 = vrot.lane.b32.xlu0 %v2148, 88
    %v2992 = vpop.permute.xlu0 %2991
    %v2993 = vsel %vm334, %v2990, 0
    %v2995 = vsel %vm334, %v2992, 0
    %2997 = vmatprep.subr.mxu0 0.0
    %2998 = vmatpush1.xpose.msra.mxu0 0.0
    %2999 = vmatprep.subr.mxu0 0.0
    %3000 = vmatpush1.xpose.msra.mxu0 0.0
    %3001 = vmatprep.subr.mxu0 0.0
    %3002 = vmatpush1.xpose.msra.mxu0 0.0
    %3003 = vmatprep.subr.mxu0 0.0
    %3004 = vmatpush1.xpose.msra.mxu0 0.0
    %3005 = vmatprep.subr.mxu0 0.0
    %3006 = vmatpush1.xpose.msra.mxu0 0.0
    %3007 = vmatprep.subr.mxu0 0.0
    %3008 = vmatpush1.xpose.msra.mxu0 0.0
    %3009 = vmatprep.subr.mxu0 0.0
    %3010 = vmatpush1.xpose.msra.mxu0 0.0
    %3011 = vmatprep.subr.mxu0 0.0
    %3012 = vmatpush1.xpose.msra.mxu0 0.0
    %3013 = vmatprep.subr.mxu0 0.0
    %3014 = vmatpush1.xpose.msra.mxu0 0.0
    %3015 = vmatprep.subr.mxu0 0.0
    %3016 = vmatpush1.xpose.msra.mxu0 0.0
    %3017 = vmatprep.subr.mxu0 0.0
    %3018 = vmatpush1.xpose.msra.mxu0 0.0
    %3019 = vmatprep.subr.mxu0 0.0
    %3020 = vmatpush1.xpose.msra.mxu0 0.0
    %3021 = vmatprep.subr.mxu0 0.0
    %3022 = vmatpush1.xpose.msra.mxu0 0.0
    %3023 = vmatprep.subr.mxu0 0.0
    %3024 = vmatpush1.xpose.msra.mxu0 0.0
    %3025 = vmatprep.subr.mxu0 0.0
    %3026 = vmatpush1.xpose.msra.mxu0 0.0
    %3027 = vmatprep.subr.mxu0 0.0
    %3028 = vmatpush1.xpose.msra.mxu0 %v2995
    %3029 = vmatprep.subr.mxu0 0.0
    %3030 = vmatpush2.xpose.msra.mxu0 0.0
    %3031 = vmatprep.subr.mxu0 0.0
    %3032 = vmatpush2.xpose.msra.mxu0 0.0
    %3033 = vmatprep.subr.mxu0 0.0
    %3034 = vmatpush2.xpose.msra.mxu0 0.0
    %3035 = vmatprep.subr.mxu0 0.0
    %3036 = vmatpush2.xpose.msra.mxu0 0.0
    %3037 = vmatprep.subr.mxu0 0.0
    %3038 = vmatpush2.xpose.msra.mxu0 0.0
    %3039 = vmatprep.subr.mxu0 0.0
    %3040 = vmatpush2.xpose.msra.mxu0 0.0
    %3041 = vmatprep.subr.mxu0 0.0
    %3042 = vmatpush2.xpose.msra.mxu0 0.0
    %3043 = vmatprep.subr.mxu0 0.0
    %3044 = vmatpush2.xpose.msra.mxu0 0.0
    %3045 = vmatprep.subr.mxu0 0.0
    %3046 = vmatpush2.xpose.msra.mxu0 0.0
    %3047 = vmatprep.subr.mxu0 0.0
    %3048 = vmatpush2.xpose.msra.mxu0 0.0
    %3049 = vmatprep.subr.mxu0 0.0
    %3050 = vmatpush2.xpose.msra.mxu0 0.0
    %3051 = vmatprep.subr.mxu0 0.0
    %3052 = vmatpush2.xpose.msra.mxu0 0.0
    %3053 = vmatprep.subr.mxu0 0.0
    %3054 = vmatpush2.xpose.msra.mxu0 0.0
    %3055 = vmatprep.subr.mxu0 0.0
    %3056 = vmatpush2.xpose.msra.mxu0 0.0
    %3057 = vmatprep.subr.mxu0 0.0
    %3058 = vmatpush2.xpose.msra.mxu0 0.0
    %3059 = vmatprep.subr.mxu0 0.0
    %3060 = vmatpush2.xpose.msra.mxu0 0.0
    %3061 = vmatprep.mubr.f32.mxu0 0.0
    %3062 = vmatmul.mubr.f32.gmra.mxu0 %v2993
    %v3063 = vpop.f32.mrf.mxu0
    %v3064 = vadd.f32 0.0, %v3063
    %v3065 = vpop.f32.mrf.mxu0
    %3066 = vdwg.mxu0
    %v3067 = vsel %vm334, %v3064, -inf
    %3068 = vmax.xlane.f32.xlu0 %v3067
    %v3069 = vpop.xlane.xlu0 %3068
    %v3070 = vsub.f32 %v3064, %v3069
    %v3071 = vmul.f32 %v3070, 1.442695
    %v3072 = vpow.pop %v3071
    %v3073 = vsel %vm334, %v3072, 0.0
    %3074 = vadd.xlane.f32.xlu0 %v3073
    %v3075 = vpop.xlane.xlu0 %3074
    %v3076 = vrcp.pop %v3075
    %v3077 = vmul.f32 %v3072, %v3076
    %3078 = vrot.lane.b32.xlu0 %v2148, 56
    %v3079 = vpop.permute.xlu0 %3078
    %v3082 = vsel %vm334, %v3077, 0
    %3084 = vmatprep.subr.mxu0 0.0
    %3085 = vmatpush1.msra.mxu0 0.0
    %3086 = vmatprep.subr.mxu0 0.0
    %3087 = vmatpush1.msra.mxu0 0.0
    %3088 = vmatprep.subr.mxu0 0.0
    %3089 = vmatpush1.msra.mxu0 0.0
    %3090 = vmatprep.subr.mxu0 0.0
    %3091 = vmatpush1.msra.mxu0 0.0
    %3092 = vmatprep.subr.mxu0 0.0
    %3093 = vmatpush1.msra.mxu0 0.0
    %3094 = vmatprep.subr.mxu0 0.0
    %3095 = vmatpush1.msra.mxu0 0.0
    %3096 = vmatprep.subr.mxu0 0.0
    %3097 = vmatpush1.msra.mxu0 0.0
    %3098 = vmatprep.subr.mxu0 0.0
    %3099 = vmatpush1.msra.mxu0 0.0
    %3100 = vmatprep.subr.mxu0 0.0
    %3101 = vmatpush1.msra.mxu0 0.0
    %3102 = vmatprep.subr.mxu0 0.0
    %3103 = vmatpush1.msra.mxu0 0.0
    %3104 = vmatprep.subr.mxu0 0.0
    %3105 = vmatpush1.msra.mxu0 0.0
    %3106 = vmatprep.subr.mxu0 0.0
    %3107 = vmatpush1.msra.mxu0 0.0
    %3108 = vmatprep.subr.mxu0 0.0
    %3109 = vmatpush1.msra.mxu0 0.0
    %3110 = vmatprep.subr.mxu0 0.0
    %3111 = vmatpush1.msra.mxu0 0.0
    %3112 = vmatprep.subr.mxu0 0.0
    %3113 = vmatpush1.msra.mxu0 0.0
    %3114 = vmatprep.subr.mxu0 0.0
    %3115 = vmatpush1.msra.mxu0 %v3079
    %3116 = vmatprep.subr.mxu0 0.0
    %3117 = vmatpush2.msra.mxu0 0.0
    %3118 = vmatprep.subr.mxu0 0.0
    %3119 = vmatpush2.msra.mxu0 0.0
    %3120 = vmatprep.subr.mxu0 0.0
    %3121 = vmatpush2.msra.mxu0 0.0
    %3122 = vmatprep.subr.mxu0 0.0
    %3123 = vmatpush2.msra.mxu0 0.0
    %3124 = vmatprep.subr.mxu0 0.0
    %3125 = vmatpush2.msra.mxu0 0.0
    %3126 = vmatprep.subr.mxu0 0.0
    %3127 = vmatpush2.msra.mxu0 0.0
    %3128 = vmatprep.subr.mxu0 0.0
    %3129 = vmatpush2.msra.mxu0 0.0
    %3130 = vmatprep.subr.mxu0 0.0
    %3131 = vmatpush2.msra.mxu0 0.0
    %3132 = vmatprep.subr.mxu0 0.0
    %3133 = vmatpush2.msra.mxu0 0.0
    %3134 = vmatprep.subr.mxu0 0.0
    %3135 = vmatpush2.msra.mxu0 0.0
    %3136 = vmatprep.subr.mxu0 0.0
    %3137 = vmatpush2.msra.mxu0 0.0
    %3138 = vmatprep.subr.mxu0 0.0
    %3139 = vmatpush2.msra.mxu0 0.0
    %3140 = vmatprep.subr.mxu0 0.0
    %3141 = vmatpush2.msra.mxu0 0.0
    %3142 = vmatprep.subr.mxu0 0.0
    %3143 = vmatpush2.msra.mxu0 0.0
    %3144 = vmatprep.subr.mxu0 0.0
    %3145 = vmatpush2.msra.mxu0 0.0
    %3146 = vmatprep.subr.mxu0 0.0
    %3147 = vmatpush2.msra.mxu0 0.0
    %3148 = vmatprep.mubr.f32.mxu0 0.0
    %3149 = vmatmul.mubr.f32.gmra.mxu0 %v3082
    %v3150 = vpop.f32.mrf.mxu0
    %v3151 = vadd.f32 0.0, %v3150
    %v3152 = vpop.f32.mrf.mxu0
    %3153 = vdwg.mxu0
    %3154 = vrot.lane.b32.xlu0 %v2148, 112
    %v3155 = vpop.permute.xlu0 %3154
    %3156 = vrot.lane.b32.xlu0 %v2148, 80
    %v3157 = vpop.permute.xlu0 %3156
    %v3158 = vsel %vm334, %v3155, 0
    %v3160 = vsel %vm334, %v3157, 0
    %3162 = vmatprep.subr.mxu0 0.0
    %3163 = vmatpush1.xpose.msra.mxu0 0.0
    %3164 = vmatprep.subr.mxu0 0.0
    %3165 = vmatpush1.xpose.msra.mxu0 0.0
    %3166 = vmatprep.subr.mxu0 0.0
    %3167 = vmatpush1.xpose.msra.mxu0 0.0
    %3168 = vmatprep.subr.mxu0 0.0
    %3169 = vmatpush1.xpose.msra.mxu0 0.0
    %3170 = vmatprep.subr.mxu0 0.0
    %3171 = vmatpush1.xpose.msra.mxu0 0.0
    %3172 = vmatprep.subr.mxu0 0.0
    %3173 = vmatpush1.xpose.msra.mxu0 0.0
    %3174 = vmatprep.subr.mxu0 0.0
    %3175 = vmatpush1.xpose.msra.mxu0 0.0
    %3176 = vmatprep.subr.mxu0 0.0
    %3177 = vmatpush1.xpose.msra.mxu0 0.0
    %3178 = vmatprep.subr.mxu0 0.0
    %3179 = vmatpush1.xpose.msra.mxu0 0.0
    %3180 = vmatprep.subr.mxu0 0.0
    %3181 = vmatpush1.xpose.msra.mxu0 0.0
    %3182 = vmatprep.subr.mxu0 0.0
    %3183 = vmatpush1.xpose.msra.mxu0 0.0
    %3184 = vmatprep.subr.mxu0 0.0
    %3185 = vmatpush1.xpose.msra.mxu0 0.0
    %3186 = vmatprep.subr.mxu0 0.0
    %3187 = vmatpush1.xpose.msra.mxu0 0.0
    %3188 = vmatprep.subr.mxu0 0.0
    %3189 = vmatpush1.xpose.msra.mxu0 0.0
    %3190 = vmatprep.subr.mxu0 0.0
    %3191 = vmatpush1.xpose.msra.mxu0 0.0
    %3192 = vmatprep.subr.mxu0 0.0
    %3193 = vmatpush1.xpose.msra.mxu0 %v3160
    %3194 = vmatprep.subr.mxu0 0.0
    %3195 = vmatpush2.xpose.msra.mxu0 0.0
    %3196 = vmatprep.subr.mxu0 0.0
    %3197 = vmatpush2.xpose.msra.mxu0 0.0
    %3198 = vmatprep.subr.mxu0 0.0
    %3199 = vmatpush2.xpose.msra.mxu0 0.0
    %3200 = vmatprep.subr.mxu0 0.0
    %3201 = vmatpush2.xpose.msra.mxu0 0.0
    %3202 = vmatprep.subr.mxu0 0.0
    %3203 = vmatpush2.xpose.msra.mxu0 0.0
    %3204 = vmatprep.subr.mxu0 0.0
    %3205 = vmatpush2.xpose.msra.mxu0 0.0
    %3206 = vmatprep.subr.mxu0 0.0
    %3207 = vmatpush2.xpose.msra.mxu0 0.0
    %3208 = vmatprep.subr.mxu0 0.0
    %3209 = vmatpush2.xpose.msra.mxu0 0.0
    %3210 = vmatprep.subr.mxu0 0.0
    %3211 = vmatpush2.xpose.msra.mxu0 0.0
    %3212 = vmatprep.subr.mxu0 0.0
    %3213 = vmatpush2.xpose.msra.mxu0 0.0
    %3214 = vmatprep.subr.mxu0 0.0
    %3215 = vmatpush2.xpose.msra.mxu0 0.0
    %3216 = vmatprep.subr.mxu0 0.0
    %3217 = vmatpush2.xpose.msra.mxu0 0.0
    %3218 = vmatprep.subr.mxu0 0.0
    %3219 = vmatpush2.xpose.msra.mxu0 0.0
    %3220 = vmatprep.subr.mxu0 0.0
    %3221 = vmatpush2.xpose.msra.mxu0 0.0
    %3222 = vmatprep.subr.mxu0 0.0
    %3223 = vmatpush2.xpose.msra.mxu0 0.0
    %3224 = vmatprep.subr.mxu0 0.0
    %3225 = vmatpush2.xpose.msra.mxu0 0.0
    %3226 = vmatprep.mubr.f32.mxu0 0.0
    %3227 = vmatmul.mubr.f32.gmra.mxu0 %v3158
    %v3228 = vpop.f32.mrf.mxu0
    %v3229 = vadd.f32 0.0, %v3228
    %v3230 = vpop.f32.mrf.mxu0
    %3231 = vdwg.mxu0
    %v3232 = vsel %vm334, %v3229, -inf
    %3233 = vmax.xlane.f32.xlu0 %v3232
    %v3234 = vpop.xlane.xlu0 %3233
    %v3235 = vsub.f32 %v3229, %v3234
    %v3236 = vmul.f32 %v3235, 1.442695
    %v3237 = vpow.pop %v3236
    %v3238 = vsel %vm334, %v3237, 0.0
    %3239 = vadd.xlane.f32.xlu0 %v3238
    %v3240 = vpop.xlane.xlu0 %3239
    %v3241 = vrcp.pop %v3240
    %v3242 = vmul.f32 %v3237, %v3241
    %3243 = vrot.lane.b32.xlu0 %v2148, 48
    %v3244 = vpop.permute.xlu0 %3243
    %v3247 = vsel %vm334, %v3242, 0
    %3249 = vmatprep.subr.mxu0 0.0
    %3250 = vmatpush1.msra.mxu0 0.0
    %3251 = vmatprep.subr.mxu0 0.0
    %3252 = vmatpush1.msra.mxu0 0.0
    %3253 = vmatprep.subr.mxu0 0.0
    %3254 = vmatpush1.msra.mxu0 0.0
    %3255 = vmatprep.subr.mxu0 0.0
    %3256 = vmatpush1.msra.mxu0 0.0
    %3257 = vmatprep.subr.mxu0 0.0
    %3258 = vmatpush1.msra.mxu0 0.0
    %3259 = vmatprep.subr.mxu0 0.0
    %3260 = vmatpush1.msra.mxu0 0.0
    %3261 = vmatprep.subr.mxu0 0.0
    %3262 = vmatpush1.msra.mxu0 0.0
    %3263 = vmatprep.subr.mxu0 0.0
    %3264 = vmatpush1.msra.mxu0 0.0
    %3265 = vmatprep.subr.mxu0 0.0
    %3266 = vmatpush1.msra.mxu0 0.0
    %3267 = vmatprep.subr.mxu0 0.0
    %3268 = vmatpush1.msra.mxu0 0.0
    %3269 = vmatprep.subr.mxu0 0.0
    %3270 = vmatpush1.msra.mxu0 0.0
    %3271 = vmatprep.subr.mxu0 0.0
    %3272 = vmatpush1.msra.mxu0 0.0
    %3273 = vmatprep.subr.mxu0 0.0
    %3274 = vmatpush1.msra.mxu0 0.0
    %3275 = vmatprep.subr.mxu0 0.0
    %3276 = vmatpush1.msra.mxu0 0.0
    %3277 = vmatprep.subr.mxu0 0.0
    %3278 = vmatpush1.msra.mxu0 0.0
    %3279 = vmatprep.subr.mxu0 0.0
    %3280 = vmatpush1.msra.mxu0 %v3244
    %3281 = vmatprep.subr.mxu0 0.0
    %3282 = vmatpush2.msra.mxu0 0.0
    %3283 = vmatprep.subr.mxu0 0.0
    %3284 = vmatpush2.msra.mxu0 0.0
    %3285 = vmatprep.subr.mxu0 0.0
    %3286 = vmatpush2.msra.mxu0 0.0
    %3287 = vmatprep.subr.mxu0 0.0
    %3288 = vmatpush2.msra.mxu0 0.0
    %3289 = vmatprep.subr.mxu0 0.0
    %3290 = vmatpush2.msra.mxu0 0.0
    %3291 = vmatprep.subr.mxu0 0.0
    %3292 = vmatpush2.msra.mxu0 0.0
    %3293 = vmatprep.subr.mxu0 0.0
    %3294 = vmatpush2.msra.mxu0 0.0
    %3295 = vmatprep.subr.mxu0 0.0
    %3296 = vmatpush2.msra.mxu0 0.0
    %3297 = vmatprep.subr.mxu0 0.0
    %3298 = vmatpush2.msra.mxu0 0.0
    %3299 = vmatprep.subr.mxu0 0.0
    %3300 = vmatpush2.msra.mxu0 0.0
    %3301 = vmatprep.subr.mxu0 0.0
    %3302 = vmatpush2.msra.mxu0 0.0
    %3303 = vmatprep.subr.mxu0 0.0
    %3304 = vmatpush2.msra.mxu0 0.0
    %3305 = vmatprep.subr.mxu0 0.0
    %3306 = vmatpush2.msra.mxu0 0.0
    %3307 = vmatprep.subr.mxu0 0.0
    %3308 = vmatpush2.msra.mxu0 0.0
    %3309 = vmatprep.subr.mxu0 0.0
    %3310 = vmatpush2.msra.mxu0 0.0
    %3311 = vmatprep.subr.mxu0 0.0
    %3312 = vmatpush2.msra.mxu0 0.0
    %3313 = vmatprep.mubr.f32.mxu0 0.0
    %3314 = vmatmul.mubr.f32.gmra.mxu0 %v3247
    %v3315 = vpop.f32.mrf.mxu0
    %v3316 = vadd.f32 0.0, %v3315
    %v3317 = vpop.f32.mrf.mxu0
    %3318 = vdwg.mxu0
    %3319 = vrot.lane.b32.xlu0 %v2148, 104
    %v3320 = vpop.permute.xlu0 %3319
    %3321 = vrot.lane.b32.xlu0 %v2148, 72
    %v3322 = vpop.permute.xlu0 %3321
    %v3323 = vsel %vm334, %v3320, 0
    %v3325 = vsel %vm334, %v3322, 0
    %3327 = vmatprep.subr.mxu0 0.0
    %3328 = vmatpush1.xpose.msra.mxu0 0.0
    %3329 = vmatprep.subr.mxu0 0.0
    %3330 = vmatpush1.xpose.msra.mxu0 0.0
    %3331 = vmatprep.subr.mxu0 0.0
    %3332 = vmatpush1.xpose.msra.mxu0 0.0
    %3333 = vmatprep.subr.mxu0 0.0
    %3334 = vmatpush1.xpose.msra.mxu0 0.0
    %3335 = vmatprep.subr.mxu0 0.0
    %3336 = vmatpush1.xpose.msra.mxu0 0.0
    %3337 = vmatprep.subr.mxu0 0.0
    %3338 = vmatpush1.xpose.msra.mxu0 0.0
    %3339 = vmatprep.subr.mxu0 0.0
    %3340 = vmatpush1.xpose.msra.mxu0 0.0
    %3341 = vmatprep.subr.mxu0 0.0
    %3342 = vmatpush1.xpose.msra.mxu0 0.0
    %3343 = vmatprep.subr.mxu0 0.0
    %3344 = vmatpush1.xpose.msra.mxu0 0.0
    %3345 = vmatprep.subr.mxu0 0.0
    %3346 = vmatpush1.xpose.msra.mxu0 0.0
    %3347 = vmatprep.subr.mxu0 0.0
    %3348 = vmatpush1.xpose.msra.mxu0 0.0
    %3349 = vmatprep.subr.mxu0 0.0
    %3350 = vmatpush1.xpose.msra.mxu0 0.0
    %3351 = vmatprep.subr.mxu0 0.0
    %3352 = vmatpush1.xpose.msra.mxu0 0.0
    %3353 = vmatprep.subr.mxu0 0.0
    %3354 = vmatpush1.xpose.msra.mxu0 0.0
    %3355 = vmatprep.subr.mxu0 0.0
    %3356 = vmatpush1.xpose.msra.mxu0 0.0
    %3357 = vmatprep.subr.mxu0 0.0
    %3358 = vmatpush1.xpose.msra.mxu0 %v3325
    %3359 = vmatprep.subr.mxu0 0.0
    %3360 = vmatpush2.xpose.msra.mxu0 0.0
    %3361 = vmatprep.subr.mxu0 0.0
    %3362 = vmatpush2.xpose.msra.mxu0 0.0
    %3363 = vmatprep.subr.mxu0 0.0
    %3364 = vmatpush2.xpose.msra.mxu0 0.0
    %3365 = vmatprep.subr.mxu0 0.0
    %3366 = vmatpush2.xpose.msra.mxu0 0.0
    %3367 = vmatprep.subr.mxu0 0.0
    %3368 = vmatpush2.xpose.msra.mxu0 0.0
    %3369 = vmatprep.subr.mxu0 0.0
    %3370 = vmatpush2.xpose.msra.mxu0 0.0
    %3371 = vmatprep.subr.mxu0 0.0
    %3372 = vmatpush2.xpose.msra.mxu0 0.0
    %3373 = vmatprep.subr.mxu0 0.0
    %3374 = vmatpush2.xpose.msra.mxu0 0.0
    %3375 = vmatprep.subr.mxu0 0.0
    %3376 = vmatpush2.xpose.msra.mxu0 0.0
    %3377 = vmatprep.subr.mxu0 0.0
    %3378 = vmatpush2.xpose.msra.mxu0 0.0
    %3379 = vmatprep.subr.mxu0 0.0
    %3380 = vmatpush2.xpose.msra.mxu0 0.0
    %3381 = vmatprep.subr.mxu0 0.0
    %3382 = vmatpush2.xpose.msra.mxu0 0.0
    %3383 = vmatprep.subr.mxu0 0.0
    %3384 = vmatpush2.xpose.msra.mxu0 0.0
    %3385 = vmatprep.subr.mxu0 0.0
    %3386 = vmatpush2.xpose.msra.mxu0 0.0
    %3387 = vmatprep.subr.mxu0 0.0
    %3388 = vmatpush2.xpose.msra.mxu0 0.0
    %3389 = vmatprep.subr.mxu0 0.0
    %3390 = vmatpush2.xpose.msra.mxu0 0.0
    %3391 = vmatprep.mubr.f32.mxu0 0.0
    %3392 = vmatmul.mubr.f32.gmra.mxu0 %v3323
    %v3393 = vpop.f32.mrf.mxu0
    %v3394 = vadd.f32 0.0, %v3393
    %v3395 = vpop.f32.mrf.mxu0
    %3396 = vdwg.mxu0
    %v3397 = vsel %vm334, %v3394, -inf
    %3398 = vmax.xlane.f32.xlu0 %v3397
    %v3399 = vpop.xlane.xlu0 %3398
    %v3400 = vsub.f32 %v3394, %v3399
    %v3401 = vmul.f32 %v3400, 1.442695
    %v3402 = vpow.pop %v3401
    %v3403 = vsel %vm334, %v3402, 0.0
    %3404 = vadd.xlane.f32.xlu0 %v3403
    %v3405 = vpop.xlane.xlu0 %3404
    %v3406 = vrcp.pop %v3405
    %v3407 = vmul.f32 %v3402, %v3406
    %3408 = vrot.lane.b32.xlu0 %v2148, 40
    %v3409 = vpop.permute.xlu0 %3408
    %v3412 = vsel %vm334, %v3407, 0
    %3414 = vmatprep.subr.mxu0 0.0
    %3415 = vmatpush1.msra.mxu0 0.0
    %3416 = vmatprep.subr.mxu0 0.0
    %3417 = vmatpush1.msra.mxu0 0.0
    %3418 = vmatprep.subr.mxu0 0.0
    %3419 = vmatpush1.msra.mxu0 0.0
    %3420 = vmatprep.subr.mxu0 0.0
    %3421 = vmatpush1.msra.mxu0 0.0
    %3422 = vmatprep.subr.mxu0 0.0
    %3423 = vmatpush1.msra.mxu0 0.0
    %3424 = vmatprep.subr.mxu0 0.0
    %3425 = vmatpush1.msra.mxu0 0.0
    %3426 = vmatprep.subr.mxu0 0.0
    %3427 = vmatpush1.msra.mxu0 0.0
    %3428 = vmatprep.subr.mxu0 0.0
    %3429 = vmatpush1.msra.mxu0 0.0
    %3430 = vmatprep.subr.mxu0 0.0
    %3431 = vmatpush1.msra.mxu0 0.0
    %3432 = vmatprep.subr.mxu0 0.0
    %3433 = vmatpush1.msra.mxu0 0.0
    %3434 = vmatprep.subr.mxu0 0.0
    %3435 = vmatpush1.msra.mxu0 0.0
    %3436 = vmatprep.subr.mxu0 0.0
    %3437 = vmatpush1.msra.mxu0 0.0
    %3438 = vmatprep.subr.mxu0 0.0
    %3439 = vmatpush1.msra.mxu0 0.0
    %3440 = vmatprep.subr.mxu0 0.0
    %3441 = vmatpush1.msra.mxu0 0.0
    %3442 = vmatprep.subr.mxu0 0.0
    %3443 = vmatpush1.msra.mxu0 0.0
    %3444 = vmatprep.subr.mxu0 0.0
    %3445 = vmatpush1.msra.mxu0 %v3409
    %3446 = vmatprep.subr.mxu0 0.0
    %3447 = vmatpush2.msra.mxu0 0.0
    %3448 = vmatprep.subr.mxu0 0.0
    %3449 = vmatpush2.msra.mxu0 0.0
    %3450 = vmatprep.subr.mxu0 0.0
    %3451 = vmatpush2.msra.mxu0 0.0
    %3452 = vmatprep.subr.mxu0 0.0
    %3453 = vmatpush2.msra.mxu0 0.0
    %3454 = vmatprep.subr.mxu0 0.0
    %3455 = vmatpush2.msra.mxu0 0.0
    %3456 = vmatprep.subr.mxu0 0.0
    %3457 = vmatpush2.msra.mxu0 0.0
    %3458 = vmatprep.subr.mxu0 0.0
    %3459 = vmatpush2.msra.mxu0 0.0
    %3460 = vmatprep.subr.mxu0 0.0
    %3461 = vmatpush2.msra.mxu0 0.0
    %3462 = vmatprep.subr.mxu0 0.0
    %3463 = vmatpush2.msra.mxu0 0.0
    %3464 = vmatprep.subr.mxu0 0.0
    %3465 = vmatpush2.msra.mxu0 0.0
    %3466 = vmatprep.subr.mxu0 0.0
    %3467 = vmatpush2.msra.mxu0 0.0
    %3468 = vmatprep.subr.mxu0 0.0
    %3469 = vmatpush2.msra.mxu0 0.0
    %3470 = vmatprep.subr.mxu0 0.0
    %3471 = vmatpush2.msra.mxu0 0.0
    %3472 = vmatprep.subr.mxu0 0.0
    %3473 = vmatpush2.msra.mxu0 0.0
    %3474 = vmatprep.subr.mxu0 0.0
    %3475 = vmatpush2.msra.mxu0 0.0
    %3476 = vmatprep.subr.mxu0 0.0
    %3477 = vmatpush2.msra.mxu0 0.0
    %3478 = vmatprep.mubr.f32.mxu0 0.0
    %3479 = vmatmul.mubr.f32.gmra.mxu0 %v3412
    %v3480 = vpop.f32.mrf.mxu0
    %v3481 = vadd.f32 0.0, %v3480
    %v3482 = vpop.f32.mrf.mxu0
    %3483 = vdwg.mxu0
    %3485 = vrot.lane.b32.xlu0 %v3151, 8
    %v3486 = vpop.permute.xlu0 %3485
    %3489 = vrot.lane.b32.xlu0 %v3316, 16
    %v3490 = vpop.permute.xlu0 %3489
    %3493 = vrot.lane.b32.xlu0 %v3481, 24
    %v3494 = vpop.permute.xlu0 %3493
    %v3496 = vsel %vm334, %v2986, %v3486
    %v3497 = vsel %vm1004, %v3496, %v3490
    %v3498 = vsel %vm1006, %v3497, %v3494
    %s3499 = scalar_lea.vmem %s7, 32
    %v3500 = vld [vmem:[%s3499] sm:$0xff]
    %v3501 = vld [vmem:[%s3499 + $0x8] sm:$0xff]
    %v3502 = vld [vmem:[%s3499 + $0x10] sm:$0xff]
    %v3503 = vld [vmem:[%s3499 + $0x18] sm:$0xff]
    %v3504 = vlaneseq
    %v3505 = vshrl.u32 %v3504, 7
    %v3506 = vsub.s32 0, %v3505
    %v3507 = vrot.slane %v2056, %v3506
    %v3509 = vsel %vm198, %v2824, 0
    %v3512 = vsel %vm198, %v3498, 0
    %3514 = vmatprep.subr.mxu0 0.0
    %3515 = vmatpush1.msra.mxu0 0.0
    %3516 = vmatprep.subr.mxu0 0.0
    %3517 = vmatpush1.msra.mxu0 0.0
    %3518 = vmatprep.subr.mxu0 0.0
    %3519 = vmatpush1.msra.mxu0 0.0
    %3520 = vmatprep.subr.mxu0 0.0
    %3521 = vmatpush1.msra.mxu0 0.0
    %3522 = vmatprep.subr.mxu0 0.0
    %3523 = vmatpush1.msra.mxu0 0.0
    %3524 = vmatprep.subr.mxu0 0.0
    %3525 = vmatpush1.msra.mxu0 0.0
    %3526 = vmatprep.subr.mxu0 0.0
    %3527 = vmatpush1.msra.mxu0 0.0
    %3528 = vmatprep.subr.mxu0 0.0
    %3529 = vmatpush1.msra.mxu0 0.0
    %3530 = vmatprep.subr.mxu0 0.0
    %3531 = vmatpush1.msra.mxu0 0.0
    %3532 = vmatprep.subr.mxu0 0.0
    %3533 = vmatpush1.msra.mxu0 0.0
    %3534 = vmatprep.subr.mxu0 0.0
    %3535 = vmatpush1.msra.mxu0 0.0
    %3536 = vmatprep.subr.mxu0 0.0
    %3537 = vmatpush1.msra.mxu0 0.0
    %3538 = vmatprep.subr.mxu0 0.0
    %3539 = vmatpush1.msra.mxu0 %v3503
    %3540 = vmatprep.subr.mxu0 0.0
    %3541 = vmatpush1.msra.mxu0 %v3502
    %3542 = vmatprep.subr.mxu0 0.0
    %3543 = vmatpush1.msra.mxu0 %v3501
    %3544 = vmatprep.subr.mxu0 0.0
    %3545 = vmatpush1.msra.mxu0 %v3500
    %3546 = vmatprep.subr.mxu0 0.0
    %3547 = vmatpush2.msra.mxu0 0.0
    %3548 = vmatprep.subr.mxu0 0.0
    %3549 = vmatpush2.msra.mxu0 0.0
    %3550 = vmatprep.subr.mxu0 0.0
    %3551 = vmatpush2.msra.mxu0 0.0
    %3552 = vmatprep.subr.mxu0 0.0
    %3553 = vmatpush2.msra.mxu0 0.0
    %3554 = vmatprep.subr.mxu0 0.0
    %3555 = vmatpush2.msra.mxu0 0.0
    %3556 = vmatprep.subr.mxu0 0.0
    %3557 = vmatpush2.msra.mxu0 0.0
    %3558 = vmatprep.subr.mxu0 0.0
    %3559 = vmatpush2.msra.mxu0 0.0
    %3560 = vmatprep.subr.mxu0 0.0
    %3561 = vmatpush2.msra.mxu0 0.0
    %3562 = vmatprep.subr.mxu0 0.0
    %3563 = vmatpush2.msra.mxu0 0.0
    %3564 = vmatprep.subr.mxu0 0.0
    %3565 = vmatpush2.msra.mxu0 0.0
    %3566 = vmatprep.subr.mxu0 0.0
    %3567 = vmatpush2.msra.mxu0 0.0
    %3568 = vmatprep.subr.mxu0 0.0
    %3569 = vmatpush2.msra.mxu0 0.0
    %3570 = vmatprep.subr.mxu0 0.0
    %3571 = vmatpush2.msra.mxu0 0.0
    %3572 = vmatprep.subr.mxu0 0.0
    %3573 = vmatpush2.msra.mxu0 0.0
    %3574 = vmatprep.subr.mxu0 0.0
    %3575 = vmatpush2.msra.mxu0 0.0
    %3576 = vmatprep.subr.mxu0 0.0
    %3577 = vmatpush2.msra.mxu0 0.0
    %3578 = vmatprep.mubr.f32.mxu0 0.0
    %3579 = vmatmul.mubr.f32.gmra.mxu0 %v3509
    %v3580 = vpop.f32.mrf.mxu0
    %v3581 = vadd.f32 %v3507, %v3580
    %v3582 = vpop.f32.mrf.mxu0
    %3583 = vmatprep.mubr.f32.mxu0 0.0
    %3584 = vmatmul.mubr.f32.gmra.mxu0 %v3512
    %v3585 = vpop.f32.mrf.mxu0
    %v3586 = vadd.f32 %v3507, %v3585
    %v3587 = vpop.f32.mrf.mxu0
    %3588 = vdwg.mxu0
    %v3589 = vadd.f32 %v2053, %v3581
    %v3590 = vadd.f32 %v2054, %v3586
    %v3591 = vsel %vm198, %v3589, 0.0
    %3592 = vadd.xlane.f32.xlu0 %v3591
    %v3593 = vpop.xlane.xlu0 %3592
    %v3594 = vsel %vm198, %v3590, 0.0
    %3595 = vadd.xlane.f32.xlu0 %v3594
    %v3596 = vpop.xlane.xlu0 %3595
    %v3597 = vmul.f32 %v3593, %v205
    %v3598 = vmul.f32 %v3596, %v205
    %v3599 = vsub.f32 %v3589, %v3597
    %v3600 = vsub.f32 %v3590, %v3598
    %v3601 = vmul.f32 %v3599, %v3599
    %v3602 = vmul.f32 %v3600, %v3600
    %v3603 = vsel %vm198, %v3601, 0.0
    %3604 = vadd.xlane.f32.xlu0 %v3603
    %v3605 = vpop.xlane.xlu0 %3604
    %v3606 = vsel %vm198, %v3602, 0.0
    %3607 = vadd.xlane.f32.xlu0 %v3606
    %v3608 = vpop.xlane.xlu0 %3607
    %v3609 = vmul.f32 %v3605, %v205
    %v3610 = vmul.f32 %v3608, %v205
    %v3611 = vadd.f32 %v3609, 1e-12
    %v3612 = vadd.f32 %v3610, 1e-12
    %v3613 = vrsqrt.pop %v3611
    %v3614 = vrsqrt.pop %v3612
    %v3615 = vmul.f32 %v3599, %v3613
    %v3616 = vmul.f32 %v3600, %v3614
    %v3617 = vlaneseq
    %v3618 = vshrl.u32 %v3617, 7
    %v3619 = vsub.s32 1, %v3618
    %v3620 = vrot.slane %v2056, %v3619
    %v3621 = vmul.f32 %v3615, %v3620
    %v3622 = vmul.f32 %v3616, %v3620
    %v3623 = vlaneseq
    %v3624 = vshrl.u32 %v3623, 7
    %v3625 = vsub.s32 2, %v3624
    %v3626 = vrot.slane %v2056, %v3625
    %v3627 = vadd.f32 %v3621, %v3626
    %v3628 = vadd.f32 %v3622, %v3626
    %s3629 = scalar_lea.vmem %s8, 32
    %v3630 = vld [vmem:[%s3629] sm:$0xff]
    %v3631 = vld [vmem:[%s3629 + $0x8] sm:$0xff]
    %v3632 = vld [vmem:[%s3629 + $0x10] sm:$0xff]
    %v3633 = vld [vmem:[%s3629 + $0x18] sm:$0xff]
    %s3634 = scalar_lea.vmem %s9, 1
    %v3635 = vld [vmem:[%s3634] sm:$0x1]
    %v3637 = vlaneseq
    %v3638 = vshrl.u32 %v3637, 7
    %v3639 = vsub.s32 0, %v3638
    %v3640 = vrot.slane %v3635, %v3639
    %v3643 = vsel %vm198, %v3627, 0
    %v3646 = vsel %vm198, %v3628, 0
    %3648 = vmatprep.subr.mxu0 0.0
    %3649 = vmatpush1.msra.mxu0 0.0
    %3650 = vmatprep.subr.mxu0 0.0
    %3651 = vmatpush1.msra.mxu0 0.0
    %3652 = vmatprep.subr.mxu0 0.0
    %3653 = vmatpush1.msra.mxu0 0.0
    %3654 = vmatprep.subr.mxu0 0.0
    %3655 = vmatpush1.msra.mxu0 0.0
    %3656 = vmatprep.subr.mxu0 0.0
    %3657 = vmatpush1.msra.mxu0 0.0
    %3658 = vmatprep.subr.mxu0 0.0
    %3659 = vmatpush1.msra.mxu0 0.0
    %3660 = vmatprep.subr.mxu0 0.0
    %3661 = vmatpush1.msra.mxu0 0.0
    %3662 = vmatprep.subr.mxu0 0.0
    %3663 = vmatpush1.msra.mxu0 0.0
    %3664 = vmatprep.subr.mxu0 0.0
    %3665 = vmatpush1.msra.mxu0 0.0
    %3666 = vmatprep.subr.mxu0 0.0
    %3667 = vmatpush1.msra.mxu0 0.0
    %3668 = vmatprep.subr.mxu0 0.0
    %3669 = vmatpush1.msra.mxu0 0.0
    %3670 = vmatprep.subr.mxu0 0.0
    %3671 = vmatpush1.msra.mxu0 0.0
    %3672 = vmatprep.subr.mxu0 0.0
    %3673 = vmatpush1.msra.mxu0 %v3633
    %3674 = vmatprep.subr.mxu0 0.0
    %3675 = vmatpush1.msra.mxu0 %v3632
    %3676 = vmatprep.subr.mxu0 0.0
    %3677 = vmatpush1.msra.mxu0 %v3631
    %3678 = vmatprep.subr.mxu0 0.0
    %3679 = vmatpush1.msra.mxu0 %v3630
    %3680 = vmatprep.subr.mxu0 0.0
    %3681 = vmatpush2.msra.mxu0 0.0
    %3682 = vmatprep.subr.mxu0 0.0
    %3683 = vmatpush2.msra.mxu0 0.0
    %3684 = vmatprep.subr.mxu0 0.0
    %3685 = vmatpush2.msra.mxu0 0.0
    %3686 = vmatprep.subr.mxu0 0.0
    %3687 = vmatpush2.msra.mxu0 0.0
    %3688 = vmatprep.subr.mxu0 0.0
    %3689 = vmatpush2.msra.mxu0 0.0
    %3690 = vmatprep.subr.mxu0 0.0
    %3691 = vmatpush2.msra.mxu0 0.0
    %3692 = vmatprep.subr.mxu0 0.0
    %3693 = vmatpush2.msra.mxu0 0.0
    %3694 = vmatprep.subr.mxu0 0.0
    %3695 = vmatpush2.msra.mxu0 0.0
    %3696 = vmatprep.subr.mxu0 0.0
    %3697 = vmatpush2.msra.mxu0 0.0
    %3698 = vmatprep.subr.mxu0 0.0
    %3699 = vmatpush2.msra.mxu0 0.0
    %3700 = vmatprep.subr.mxu0 0.0
    %3701 = vmatpush2.msra.mxu0 0.0
    %3702 = vmatprep.subr.mxu0 0.0
    %3703 = vmatpush2.msra.mxu0 0.0
    %3704 = vmatprep.subr.mxu0 0.0
    %3705 = vmatpush2.msra.mxu0 0.0
    %3706 = vmatprep.subr.mxu0 0.0
    %3707 = vmatpush2.msra.mxu0 0.0
    %3708 = vmatprep.subr.mxu0 0.0
    %3709 = vmatpush2.msra.mxu0 0.0
    %3710 = vmatprep.subr.mxu0 0.0
    %3711 = vmatpush2.msra.mxu0 0.0
    %3712 = vmatprep.mubr.f32.mxu0 0.0
    %3713 = vmatmul.mubr.f32.gmra.mxu0 %v3643
    %v3714 = vpop.f32.mrf.mxu0
    %v3715 = vadd.f32 %v3640, %v3714
    %v3716 = vpop.f32.mrf.mxu0
    %3717 = vmatprep.mubr.f32.mxu0 0.0
    %3718 = vmatmul.mubr.f32.gmra.mxu0 %v3646
    %v3719 = vpop.f32.mrf.mxu0
    %v3720 = vadd.f32 %v3640, %v3719
    %v3721 = vpop.f32.mrf.mxu0
    %3722 = vdwg.mxu0
    %v3723 = vmul.f32 %v3715, 0.5
    %v3724 = vmul.f32 %v3720, 0.5
    %v3725 = vmul.f32 %v3715, 0.044715
    %v3726 = vmul.f32 %v3720, 0.044715
    %v3727 = vmul.f32 %v3725, %v3715
    %v3728 = vmul.f32 %v3726, %v3720
    %v3729 = vmul.f32 %v3727, %v3715
    %v3730 = vmul.f32 %v3728, %v3720
    %v3731 = vadd.f32 %v3715, %v3729
    %v3732 = vadd.f32 %v3720, %v3730
    %v3733 = vmul.f32 %v3731, 0.7978846
    %v3734 = vmul.f32 %v3732, 0.7978846
    %v3735 = vtanh.pop %v3733
    %v3736 = vtanh.pop %v3734
    %v3737 = vadd.f32 %v3735, 1.0
    %v3738 = vadd.f32 %v3736, 1.0
    %v3739 = vmul.f32 %v3723, %v3737
    %v3740 = vmul.f32 %v3724, %v3738
    %s3741 = scalar_lea.vmem %s10, 64
    %v3742 = vld [vmem:[%s3741] sm:$0xff]
    %v3743 = vld [vmem:[%s3741 + $0x8] sm:$0xff]
    %v3744 = vld [vmem:[%s3741 + $0x10] sm:$0xff]
    %v3745 = vld [vmem:[%s3741 + $0x18] sm:$0xff]
    %v3746 = vld [vmem:[%s3741 + $0x20] sm:$0xff]
    %v3747 = vld [vmem:[%s3741 + $0x28] sm:$0xff]
    %v3748 = vld [vmem:[%s3741 + $0x30] sm:$0xff]
    %v3749 = vld [vmem:[%s3741 + $0x38] sm:$0xff]
    %v3750 = vlaneseq
    %v3751 = vshrl.u32 %v3750, 7
    %v3752 = vsub.s32 3, %v3751
    %v3753 = vrot.slane %v2056, %v3752
    %v3755 = vsel %vm1933, %v3739, 0
    %v3758 = vsel %vm1933, %v3740, 0
    %3760 = vmatprep.subr.mxu0 0.0
    %3761 = vmatpush1.msra.mxu0 0.0
    %3762 = vmatprep.subr.mxu0 0.0
    %3763 = vmatpush1.msra.mxu0 0.0
    %3764 = vmatprep.subr.mxu0 0.0
    %3765 = vmatpush1.msra.mxu0 0.0
    %3766 = vmatprep.subr.mxu0 0.0
    %3767 = vmatpush1.msra.mxu0 0.0
    %3768 = vmatprep.subr.mxu0 0.0
    %3769 = vmatpush1.msra.mxu0 0.0
    %3770 = vmatprep.subr.mxu0 0.0
    %3771 = vmatpush1.msra.mxu0 0.0
    %3772 = vmatprep.subr.mxu0 0.0
    %3773 = vmatpush1.msra.mxu0 0.0
    %3774 = vmatprep.subr.mxu0 0.0
    %3775 = vmatpush1.msra.mxu0 0.0
    %3776 = vmatprep.subr.mxu0 0.0
    %3777 = vmatpush1.msra.mxu0 %v3749
    %3778 = vmatprep.subr.mxu0 0.0
    %3779 = vmatpush1.msra.mxu0 %v3748
    %3780 = vmatprep.subr.mxu0 0.0
    %3781 = vmatpush1.msra.mxu0 %v3747
    %3782 = vmatprep.subr.mxu0 0.0
    %3783 = vmatpush1.msra.mxu0 %v3746
    %3784 = vmatprep.subr.mxu0 0.0
    %3785 = vmatpush1.msra.mxu0 %v3745
    %3786 = vmatprep.subr.mxu0 0.0
    %3787 = vmatpush1.msra.mxu0 %v3744
    %3788 = vmatprep.subr.mxu0 0.0
    %3789 = vmatpush1.msra.mxu0 %v3743
    %3790 = vmatprep.subr.mxu0 0.0
    %3791 = vmatpush1.msra.mxu0 %v3742
    %3792 = vmatprep.subr.mxu0 0.0
    %3793 = vmatpush2.msra.mxu0 0.0
    %3794 = vmatprep.subr.mxu0 0.0
    %3795 = vmatpush2.msra.mxu0 0.0
    %3796 = vmatprep.subr.mxu0 0.0
    %3797 = vmatpush2.msra.mxu0 0.0
    %3798 = vmatprep.subr.mxu0 0.0
    %3799 = vmatpush2.msra.mxu0 0.0
    %3800 = vmatprep.subr.mxu0 0.0
    %3801 = vmatpush2.msra.mxu0 0.0
    %3802 = vmatprep.subr.mxu0 0.0
    %3803 = vmatpush2.msra.mxu0 0.0
    %3804 = vmatprep.subr.mxu0 0.0
    %3805 = vmatpush2.msra.mxu0 0.0
    %3806 = vmatprep.subr.mxu0 0.0
    %3807 = vmatpush2.msra.mxu0 0.0
    %3808 = vmatprep.subr.mxu0 0.0
    %3809 = vmatpush2.msra.mxu0 0.0
    %3810 = vmatprep.subr.mxu0 0.0
    %3811 = vmatpush2.msra.mxu0 0.0
    %3812 = vmatprep.subr.mxu0 0.0
    %3813 = vmatpush2.msra.mxu0 0.0
    %3814 = vmatprep.subr.mxu0 0.0
    %3815 = vmatpush2.msra.mxu0 0.0
    %3816 = vmatprep.subr.mxu0 0.0
    %3817 = vmatpush2.msra.mxu0 0.0
    %3818 = vmatprep.subr.mxu0 0.0
    %3819 = vmatpush2.msra.mxu0 0.0
    %3820 = vmatprep.subr.mxu0 0.0
    %3821 = vmatpush2.msra.mxu0 0.0
    %3822 = vmatprep.subr.mxu0 0.0
    %3823 = vmatpush2.msra.mxu0 0.0
    %3824 = vmatprep.mubr.f32.mxu0 0.0
    %3825 = vmatmul.mubr.f32.gmra.mxu0 %v3755
    %v3826 = vpop.f32.mrf.mxu0
    %v3827 = vadd.f32 %v3753, %v3826
    %v3828 = vpop.f32.mrf.mxu0
    %3829 = vmatprep.mubr.f32.mxu0 0.0
    %3830 = vmatmul.mubr.f32.gmra.mxu0 %v3758
    %v3831 = vpop.f32.mrf.mxu0
    %v3832 = vadd.f32 %v3753, %v3831
    %v3833 = vpop.f32.mrf.mxu0
    %3834 = vdwg.mxu0
    %v3835 = vadd.f32 %v3627, %v3827
    %v3836 = vadd.f32 %v3628, %v3832
    %v3837 = vsel %vm198, %v3835, 0.0
    %3838 = vadd.xlane.f32.xlu0 %v3837
    %v3839 = vpop.xlane.xlu0 %3838
    %v3840 = vsel %vm198, %v3836, 0.0
    %3841 = vadd.xlane.f32.xlu0 %v3840
    %v3842 = vpop.xlane.xlu0 %3841
    %v3843 = vmul.f32 %v3839, %v205
    %v3844 = vmul.f32 %v3842, %v205
    %v3845 = vsub.f32 %v3835, %v3843
    %v3846 = vsub.f32 %v3836, %v3844
    %v3847 = vmul.f32 %v3845, %v3845
    %v3848 = vmul.f32 %v3846, %v3846
    %v3849 = vsel %vm198, %v3847, 0.0
    %3850 = vadd.xlane.f32.xlu0 %v3849
    %v3851 = vpop.xlane.xlu0 %3850
    %v3852 = vsel %vm198, %v3848, 0.0
    %3853 = vadd.xlane.f32.xlu0 %v3852
    %v3854 = vpop.xlane.xlu0 %3853
    %v3855 = vmul.f32 %v3851, %v205
    %v3856 = vmul.f32 %v3854, %v205
    %v3857 = vadd.f32 %v3855, 1e-12
    %v3858 = vadd.f32 %v3856, 1e-12
    %v3859 = vrsqrt.pop %v3857
    %v3860 = vrsqrt.pop %v3858
    %v3861 = vmul.f32 %v3845, %v3859
    %v3862 = vmul.f32 %v3846, %v3860
    %v3863 = vlaneseq
    %v3864 = vshrl.u32 %v3863, 7
    %v3865 = vsub.s32 4, %v3864
    %v3866 = vrot.slane %v2056, %v3865
    %v3867 = vmul.f32 %v3861, %v3866
    %v3868 = vmul.f32 %v3862, %v3866
    %v3869 = vlaneseq
    %v3870 = vshrl.u32 %v3869, 7
    %v3871 = vsub.s32 5, %v3870
    %v3872 = vrot.slane %v2056, %v3871
    %v3873 = vadd.f32 %v3867, %v3872
    %v3874 = vadd.f32 %v3868, %v3872
    %3875 = vst.msk [vmem:[#allocation2] sm:$0xff] %vm198, %v3873
    %3876 = vst.msk [vmem:[#allocation2 + $0x8] sm:$0xff] %vm198, %v3874
    // Predicated region
    $region50: #{tpu_custom_call.1} parent=1 // pred_check
      _
    $region51: #{tpu_custom_call.1} parent=1 // pred_check_branch
      %3878 = sbr.rel (0) target = $region53
    $region52: #{tpu_custom_call.1} parent=1 // pred_region
      %s3880 = ssub.s32 256, 256
      %3881 = vsyncadd [#allocation3], %s3880
      %s3882 = sshll.u32 [#allocation2], 4
      %s3883 = int_to_ptr.vmem [resolvable:$true] %s3882
      %3888 = dma.vmem_to_hbm [thread:$0]  %s3883, 256, %s12, [#allocation3], 128, 128, 8
    $region53: #{tpu_custom_call.1} parent=1 // pred_fallthru
      _
    // Predicated region
    $region54: #{tpu_custom_call.1} parent=1 // pred_check
      _
    $region55: #{tpu_custom_call.1} parent=1 // pred_check_branch
      %3890 = sbr.rel (0) target = $region57
    $region56: #{tpu_custom_call.1} parent=1 // pred_region
      %3891 = dma.done [#allocation3], 256
    $region57: #{tpu_custom_call.1} parent=1 // pred_fallthru
      _
    %3892 = vsyncpa [#allocation3], 1

</llo_original>
